<compile_context>
chip_gen: v7x
topology: tpu7x:2x2x1
jax: 0.10.0
libtpu: 0.0.40
codegen_flags: <defaults>
</compile_context>

<pallas_src>
import jax
import jax.numpy as jnp
from jax import lax
from jax.experimental import pallas as pl
from jax.experimental.pallas import tpu as pltpu


def _physical_vmem_bytes():
    """Per-TensorCore VMEM capacity; conservative 64 MiB fallback (v7x)."""
    try:
        info = pltpu.get_tpu_info()
        v = getattr(info, "vmem_capacity_bytes", None)
        if v:
            return int(v)
    except Exception:
        pass
    return 64 << 20


def _make_node_mixer_kernel(node_tile, edge_tile, precision):
    def kernel(ei_ref, x_ref, o_ref, acc_ref):
        # ei_ref : VMEM (TE, 2) int32   -- [src, dst] per edge of this tile
        # x_ref  : VMEM (TN, F)         -- node-feature block (node tile k)
        # o_ref  : VMEM (TE, F)         -- output edge tile
        # acc_ref: VMEM (TE, F) float32 -- accumulator across node tiles
        k = pl.program_id(1)

        @pl.when(k == 0)
        def _init():
            acc_ref[...] = jnp.zeros_like(acc_ref)

        idx = ei_ref[...]                       # (TE, 2)
        src = idx[:, 0:1]                       # (TE, 1)
        dst = idx[:, 1:2]                       # (TE, 1)

        # Global node ids covered by this node tile, broadcast over edges.
        node_ids = k * node_tile + lax.broadcasted_iota(
            jnp.int32, (edge_tile, node_tile), 1)          # (TE, TN)

        # +1 at the source row, -1 at the target row, 0 elsewhere.
        sel = ((node_ids == src).astype(x_ref.dtype)
               - (node_ids == dst).astype(x_ref.dtype))     # (TE, TN)

        acc_ref[...] += jnp.dot(
            sel, x_ref[...],
            preferred_element_type=jnp.float32,
            precision=precision)

        @pl.when(k == pl.num_programs(1) - 1)
        def _finalize():
            o_ref[...] = acc_ref[...].astype(o_ref.dtype)

    return kernel


def node_mixer(x, edge_index, *, edges_per_tile=512, max_nodes_per_tile=None):
    """x: [N, F] float, edge_index: [2, E] int -> [E, F] = x[ei[0]] - x[ei[1]]."""
    N, F = x.shape
    E = edge_index.shape[1]

    # (E, 2) so that per-tile index blocks are (TE, 2) with edges second-minor.
    ei_t = edge_index.T.astype(jnp.int32)

    TE = int(edges_per_tile)
    n_edge_tiles = pl.cdiv(E, TE)

    x_itemsize = jnp.dtype(x.dtype).itemsize
    phys_vmem = _physical_vmem_bytes()
    budget = max(phys_vmem - (16 << 20), 16 << 20)

    # Fixed per-step VMEM: double-buffered output + f32 accumulator scratch
    # + double-buffered index blocks + compiler slack.
    fixed = 2 * TE * F * x_itemsize + TE * F * 4 + 2 * TE * 2 * 4 + (2 << 20)
    avail_for_x = max(budget - fixed, 4 << 20)
    tn_max = avail_for_x // (2 * F * x_itemsize)        # x block double-buffered
    if N <= tn_max:
        TN = N
    else:
        TN = max(8, (tn_max // 8) * 8)
    if max_nodes_per_tile is not None:
        TN = min(TN, max(8, (int(max_nodes_per_tile) // 8) * 8))
    TN = min(TN, N)
    n_node_tiles = pl.cdiv(N, TN)

    vmem_needed = fixed + 2 * TN * F * x_itemsize
    vmem_limit = int(min(budget, max(32 << 20, vmem_needed)))

    # f32 MXU path in full precision so row selection is (near-)exact.
    precision = (jax.lax.Precision.HIGHEST
                 if jnp.dtype(x.dtype) == jnp.float32 else None)

    grid_spec = pltpu.PrefetchScalarGridSpec(
        num_scalar_prefetch=0,
        grid=(n_edge_tiles, n_node_tiles),          # node (reduction) axis last
        in_specs=[
            pl.BlockSpec((TE, 2), lambda t, k: (t, 0)),     # edge indices
            pl.BlockSpec((TN, F), lambda t, k: (k, 0)),     # node features
        ],
        out_specs=pl.BlockSpec((TE, F), lambda t, k: (t, 0)),
        scratch_shapes=[pltpu.VMEM((TE, F), jnp.float32)],
    )

    out = pl.pallas_call(
        _make_node_mixer_kernel(TN, TE, precision),
        out_shape=jax.ShapeDtypeStruct((E, F), x.dtype),
        grid_spec=grid_spec,
        compiler_params=pltpu.CompilerParams(
            dimension_semantics=("parallel", "arbitrary"),
            vmem_limit_bytes=vmem_limit,
        ),
        cost_estimate=pl.CostEstimate(
            flops=2 * n_edge_tiles * TE * N * F,
            transcendentals=0,
            bytes_accessed=(n_edge_tiles * N * F * x_itemsize
                            + E * F * x_itemsize
                            + E * 2 * 4),
        ),
    )(ei_t, x)

    return out


if __name__ == "__main__":
    key = jax.random.PRNGKey(0)
    k_x, k_e, k_e2 = jax.random.split(key, 3)

    # nodes, features (lane-dense), edges (deliberately not a multiple of TE)
    N, F, E = 16, 128, 300
    x = jax.random.normal(k_x, (N, F), dtype=jnp.float32)
    edge_index = jax.random.randint(k_e, (2, E), 0, N, dtype=jnp.int32)

    out = node_mixer(x, edge_index)
    out = jax.block_until_ready(out)

    # pure-JAX reference (same semantics as torch.sub(x[ei[0]], x[ei[1]]))
    ref = x[edge_index[0]] - x[edge_index[1]]
    assert out.shape == (E, F)
    assert jnp.allclose(out, ref, atol=1e-5, rtol=1e-5)

    # second config: multiple edge tiles + node-axis tiling (accumulation path)
    E2 = 700
    edge_index2 = jax.random.randint(k_e2, (2, E2), 0, N, dtype=jnp.int32)
    out2 = node_mixer(x, edge_index2, edges_per_tile=256, max_nodes_per_tile=8)
    out2 = jax.block_until_ready(out2)
    ref2 = x[edge_index2[0]] - x[edge_index2[1]]
    assert out2.shape == (E2, F)
    assert jnp.allclose(out2, ref2, atol=1e-5, rtol=1e-5)

    print("KERNEL_OK")
</pallas_src>

<mosaic_0001>
module attributes {stable_mosaic.version = 11 : i64} {
  func.func @kernel(%arg0: i32, %arg1: i32, %arg2: memref<512x2xi32, #tpu.memory_space<vmem>>, %arg3: memref<16x128xf32, #tpu.memory_space<vmem>>, %arg4: memref<512x128xf32, #tpu.memory_space<vmem>>, %arg5: memref<512x128xf32, #tpu.memory_space<vmem>>) attributes {dimension_semantics = [#tpu.dimension_semantics<parallel>, #tpu.dimension_semantics<arbitrary>], iteration_bounds = array<i64: 1, 1>, scalar_prefetch = 0 : i64, scratch_operands = 1 : i64, tpu.core_type = #tpu.core_type<tc>, window_params = [{transform_indices = @transform_0, window_bounds = array<i64: 512, 2>}, {transform_indices = @transform_1, window_bounds = array<i64: 16, 128>}, {transform_indices = @transform_2, window_bounds = array<i64: 512, 128>}]} {
    %c0_i32 = arith.constant 0 : i32
    %0 = arith.cmpi eq, %arg1, %c0_i32 : i32
    %1 = arith.extui %0 : i1 to i32
    %c0_i32_0 = arith.constant 0 : i32
    %2 = arith.cmpi ne, %1, %c0_i32_0 : i32
    scf.if %2 {
      %cst_10 = arith.constant 0.000000e+00 : f32
      %27 = vector.broadcast %cst_10 : f32 to vector<512x128xf32>
      %c0_11 = arith.constant 0 : index
      %c0_12 = arith.constant 0 : index
      %28 = vector.load %arg5[%c0_11, %c0_12] : memref<512x128xf32, #tpu.memory_space<vmem>>, vector<512x128xf32>
      tpu.vector_store %arg5[%c0_11, %c0_12], %27 {strides = array<i32>} : memref<512x128xf32, #tpu.memory_space<vmem>>, vector<512x128xf32>,
    } else {
    }
    %c0 = arith.constant 0 : index
    %c0_1 = arith.constant 0 : index
    %3 = vector.load %arg2[%c0, %c0_1] : memref<512x2xi32, #tpu.memory_space<vmem>>, vector<512x2xi32>
    %4 = vector.extract_strided_slice %3 {offsets = [0, 0], sizes = [512, 1], strides = [1, 1]} : vector<512x2xi32> to vector<512x1xi32>
    %5 = vector.extract_strided_slice %3 {offsets = [0, 1], sizes = [512, 1], strides = [1, 1]} : vector<512x2xi32> to vector<512x1xi32>
    %c16_i32 = arith.constant 16 : i32
    %6 = arith.muli %arg1, %c16_i32 : i32
    %7 = tpu.iota {dimensions = array<i32: 1>} : vector<512x16xi32>
    %8 = vector.broadcast %6 : i32 to vector<512x16xi32>
    %9 = arith.addi %8, %7 : vector<512x16xi32>
    %10 = vector.broadcast %4 : vector<512x1xi32> to vector<512x16xi32>
    %11 = arith.cmpi eq, %9, %10 : vector<512x16xi32>
    %12 = arith.extui %11 : vector<512x16xi1> to vector<512x16xi32>
    %13 = arith.sitofp %12 : vector<512x16xi32> to vector<512x16xf32>
    %14 = vector.broadcast %5 : vector<512x1xi32> to vector<512x16xi32>
    %15 = arith.cmpi eq, %9, %14 : vector<512x16xi32>
    %16 = arith.extui %15 : vector<512x16xi1> to vector<512x16xi32>
    %17 = arith.sitofp %16 : vector<512x16xi32> to vector<512x16xf32>
    %18 = arith.subf %13, %17 : vector<512x16xf32>
    %c0_2 = arith.constant 0 : index
    %c0_3 = arith.constant 0 : index
    %19 = vector.load %arg5[%c0_2, %c0_3] : memref<512x128xf32, #tpu.memory_space<vmem>>, vector<512x128xf32>
    %c0_4 = arith.constant 0 : index
    %c0_5 = arith.constant 0 : index
    %20 = vector.load %arg3[%c0_4, %c0_5] : memref<16x128xf32, #tpu.memory_space<vmem>>, vector<16x128xf32>
    %cst = arith.constant dense<0.000000e+00> : vector<512x128xf32>
    %21 = tpu.matmul %18, %20, %cst {dimension_numbers = #tpu.dot_dimension_numbers<[1], [0], [0], [1], [0, 0, 1, 1], [], []>, precision = #tpu.contract_precision<fp32>} : vector<512x16xf32>, vector<16x128xf32>, vector<512x128xf32> -> vector<512x128xf32>
    %22 = arith.addf %19, %21 : vector<512x128xf32>
    %c0_6 = arith.constant 0 : index
    %c0_7 = arith.constant 0 : index
    %23 = vector.load %arg5[%c0_6, %c0_7] : memref<512x128xf32, #tpu.memory_space<vmem>>, vector<512x128xf32>
    tpu.vector_store %arg5[%c0_6, %c0_7], %22 {strides = array<i32>} : memref<512x128xf32, #tpu.memory_space<vmem>>, vector<512x128xf32>,
    %c0_i32_8 = arith.constant 0 : i32
    %24 = arith.cmpi eq, %arg1, %c0_i32_8 : i32
    %25 = arith.extui %24 : i1 to i32
    %c0_i32_9 = arith.constant 0 : i32
    %26 = arith.cmpi ne, %25, %c0_i32_9 : i32
    scf.if %26 {
      %c0_10 = arith.constant 0 : index
      %c0_11 = arith.constant 0 : index
      %27 = vector.load %arg5[%c0_10, %c0_11] : memref<512x128xf32, #tpu.memory_space<vmem>>, vector<512x128xf32>
      %c0_12 = arith.constant 0 : index
      %c0_13 = arith.constant 0 : index
      %28 = vector.load %arg4[%c0_12, %c0_13] : memref<512x128xf32, #tpu.memory_space<vmem>>, vector<512x128xf32>
      tpu.vector_store %arg4[%c0_12, %c0_13], %27 {strides = array<i32>} : memref<512x128xf32, #tpu.memory_space<vmem>>, vector<512x128xf32>,
    } else {
    }
    return
  }
  func.func @transform_0(%arg0: i32, %arg1: i32) -> (i32, i32) {
    %c0_i32 = arith.constant 0 : i32
    %c0_i32_0 = arith.constant 0 : i32
    return %arg0, %c0_i32 : i32, i32
  }
  func.func @transform_1(%arg0: i32, %arg1: i32) -> (i32, i32) {
    %c0_i32 = arith.constant 0 : i32
    %c0_i32_0 = arith.constant 0 : i32
    return %arg1, %c0_i32 : i32, i32
  }
  func.func @transform_2(%arg0: i32, %arg1: i32) -> (i32, i32) {
    %c0_i32 = arith.constant 0 : i32
    %c0_i32_0 = arith.constant 0 : i32
    return %arg0, %c0_i32 : i32, i32
  }
}

</mosaic_0001>

<llo_original>
// kernel: tpu_custom_call.1
$region0: #{tpu_custom_call.1}
  #allocation0 [shape = 'u32[]', space=smem, size = 0x4, offset = 0x4, fixed_abs, tag = 'smem constant byte address 0x4 - core index']
  #allocation1 [shape = 'u32[144,128]{1,0:T(1,128)}', space=vmem, size = 0x12000, scoped, tag = 'internal scratch']
  #allocation2 [shape = 'f32[512,128]{1,0:T(8,128)}', space=vmem, size = 0x40000, scoped, tag = 'scratch operand']
  %s0 = inlined_call_operand.vmem [shape: s32[300,2], index: 0, kind: input, shape index: {}]
  %s1 = inlined_call_operand.vmem [shape: f32[16,128], index: 1, kind: input, shape index: {}]
  %s2 = inlined_call_operand.hbm [shape: f32[300,128], index: 2, kind: output, shape index: {}]
  %s3 = sld [smem:[#allocation0]]
  $region26: #{tpu_custom_call.1} parent=0
    _
  %s5 = ssub.s32 1, %s3
  %s6 = scalar_select 0, %s5, %s3
  $region1: #{tpu_custom_call.1} parent=0
    #allocation3 [shape = 'u8[262144]{0}', space=vmem, size = 0x40000, scoped, tag = 'output window, operand 0, single buffered']
    #allocation4 [shape = 's32[1]{0}', space=sflag, size = 0x4, scoped, tag = 'scoped memory for tpu_custom_call.1']
    %7 = vsyncpa [#allocation4], 0
    // Predicated region
    $region2: #{tpu_custom_call.1} parent=1 // pred_check
      _
    $region3: #{tpu_custom_call.1} parent=1 // pred_check_branch
      %9 = sbr.rel (0) target = $region5
    $region4: #{tpu_custom_call.1} parent=1 // pred_region
      _
    $region5: #{tpu_custom_call.1} parent=1 // pred_fallthru
      _
    // Predicated region
    $region6: #{tpu_custom_call.1} parent=1 // pred_check
      _
    $region7: #{tpu_custom_call.1} parent=1 // pred_check_branch
      %11 = sbr.rel (0) target = $region9
    $region8: #{tpu_custom_call.1} parent=1 // pred_region
      _
    $region9: #{tpu_custom_call.1} parent=1 // pred_fallthru
      _
    %p12 = scmp.eq.s32.totalorder 0, 0
    // Predicated region
    $region10: #{tpu_custom_call.1} parent=1 // pred_check
      %p13 = pneg %p12
    $region11: #{tpu_custom_call.1} parent=1 // pred_check_branch
      %15 = sbr.rel (%p13) target = $region13
    $region12: #{tpu_custom_call.1} parent=1 // pred_region
      %16 = vst [vmem:[#allocation2] sm:$0xff] 0.0
      %17 = vst [vmem:[#allocation2 + $0x8] sm:$0xff] 0.0
      %18 = vst [vmem:[#allocation2 + $0x10] sm:$0xff] 0.0
      %19 = vst [vmem:[#allocation2 + $0x18] sm:$0xff] 0.0
      %20 = vst [vmem:[#allocation2 + $0x20] sm:$0xff] 0.0
      %21 = vst [vmem:[#allocation2 + $0x28] sm:$0xff] 0.0
      %22 = vst [vmem:[#allocation2 + $0x30] sm:$0xff] 0.0
      %23 = vst [vmem:[#allocation2 + $0x38] sm:$0xff] 0.0
      %24 = vst [vmem:[#allocation2 + $0x40] sm:$0xff] 0.0
      %25 = vst [vmem:[#allocation2 + $0x48] sm:$0xff] 0.0
      %26 = vst [vmem:[#allocation2 + $0x50] sm:$0xff] 0.0
      %27 = vst [vmem:[#allocation2 + $0x58] sm:$0xff] 0.0
      %28 = vst [vmem:[#allocation2 + $0x60] sm:$0xff] 0.0
      %29 = vst [vmem:[#allocation2 + $0x68] sm:$0xff] 0.0
      %30 = vst [vmem:[#allocation2 + $0x70] sm:$0xff] 0.0
      %31 = vst [vmem:[#allocation2 + $0x78] sm:$0xff] 0.0
      %32 = vst [vmem:[#allocation2 + $0x80] sm:$0xff] 0.0
      %33 = vst [vmem:[#allocation2 + $0x88] sm:$0xff] 0.0
      %34 = vst [vmem:[#allocation2 + $0x90] sm:$0xff] 0.0
      %35 = vst [vmem:[#allocation2 + $0x98] sm:$0xff] 0.0
      %36 = vst [vmem:[#allocation2 + $0xa0] sm:$0xff] 0.0
      %37 = vst [vmem:[#allocation2 + $0xa8] sm:$0xff] 0.0
      %38 = vst [vmem:[#allocation2 + $0xb0] sm:$0xff] 0.0
      %39 = vst [vmem:[#allocation2 + $0xb8] sm:$0xff] 0.0
      %40 = vst [vmem:[#allocation2 + $0xc0] sm:$0xff] 0.0
      %41 = vst [vmem:[#allocation2 + $0xc8] sm:$0xff] 0.0
      %42 = vst [vmem:[#allocation2 + $0xd0] sm:$0xff] 0.0
      %43 = vst [vmem:[#allocation2 + $0xd8] sm:$0xff] 0.0
      %44 = vst [vmem:[#allocation2 + $0xe0] sm:$0xff] 0.0
      %45 = vst [vmem:[#allocation2 + $0xe8] sm:$0xff] 0.0
      %46 = vst [vmem:[#allocation2 + $0xf0] sm:$0xff] 0.0
      %47 = vst [vmem:[#allocation2 + $0xf8] sm:$0xff] 0.0
      %48 = vst [vmem:[#allocation2 + $0x100] sm:$0xff] 0.0
      %49 = vst [vmem:[#allocation2 + $0x108] sm:$0xff] 0.0
      %50 = vst [vmem:[#allocation2 + $0x110] sm:$0xff] 0.0
      %51 = vst [vmem:[#allocation2 + $0x118] sm:$0xff] 0.0
      %52 = vst [vmem:[#allocation2 + $0x120] sm:$0xff] 0.0
      %53 = vst [vmem:[#allocation2 + $0x128] sm:$0xff] 0.0
      %54 = vst [vmem:[#allocation2 + $0x130] sm:$0xff] 0.0
      %55 = vst [vmem:[#allocation2 + $0x138] sm:$0xff] 0.0
      %56 = vst [vmem:[#allocation2 + $0x140] sm:$0xff] 0.0
      %57 = vst [vmem:[#allocation2 + $0x148] sm:$0xff] 0.0
      %58 = vst [vmem:[#allocation2 + $0x150] sm:$0xff] 0.0
      %59 = vst [vmem:[#allocation2 + $0x158] sm:$0xff] 0.0
      %60 = vst [vmem:[#allocation2 + $0x160] sm:$0xff] 0.0
      %61 = vst [vmem:[#allocation2 + $0x168] sm:$0xff] 0.0
      %62 = vst [vmem:[#allocation2 + $0x170] sm:$0xff] 0.0
      %63 = vst [vmem:[#allocation2 + $0x178] sm:$0xff] 0.0
      %64 = vst [vmem:[#allocation2 + $0x180] sm:$0xff] 0.0
      %65 = vst [vmem:[#allocation2 + $0x188] sm:$0xff] 0.0
      %66 = vst [vmem:[#allocation2 + $0x190] sm:$0xff] 0.0
      %67 = vst [vmem:[#allocation2 + $0x198] sm:$0xff] 0.0
      %68 = vst [vmem:[#allocation2 + $0x1a0] sm:$0xff] 0.0
      %69 = vst [vmem:[#allocation2 + $0x1a8] sm:$0xff] 0.0
      %70 = vst [vmem:[#allocation2 + $0x1b0] sm:$0xff] 0.0
      %71 = vst [vmem:[#allocation2 + $0x1b8] sm:$0xff] 0.0
      %72 = vst [vmem:[#allocation2 + $0x1c0] sm:$0xff] 0.0
      %73 = vst [vmem:[#allocation2 + $0x1c8] sm:$0xff] 0.0
      %74 = vst [vmem:[#allocation2 + $0x1d0] sm:$0xff] 0.0
      %75 = vst [vmem:[#allocation2 + $0x1d8] sm:$0xff] 0.0
      %76 = vst [vmem:[#allocation2 + $0x1e0] sm:$0xff] 0.0
      %77 = vst [vmem:[#allocation2 + $0x1e8] sm:$0xff] 0.0
      %78 = vst [vmem:[#allocation2 + $0x1f0] sm:$0xff] 0.0
      %79 = vst [vmem:[#allocation2 + $0x1f8] sm:$0xff] 0.0
    $region13: #{tpu_custom_call.1} parent=1 // pred_fallthru
      _
    %v80 = vld [vmem:[%s0] sm:$0xff]
    %v81 = vld [vmem:[%s0 + $0x8] sm:$0xff]
    %v82 = vld [vmem:[%s0 + $0x10] sm:$0xff]
    %v83 = vld [vmem:[%s0 + $0x18] sm:$0xff]
    %v84 = vld [vmem:[%s0 + $0x20] sm:$0xff]
    %v85 = vld [vmem:[%s0 + $0x28] sm:$0xff]
    %v86 = vld [vmem:[%s0 + $0x30] sm:$0xff]
    %v87 = vld [vmem:[%s0 + $0x38] sm:$0xff]
    %v88 = vld [vmem:[%s0 + $0x40] sm:$0xff]
    %v89 = vld [vmem:[%s0 + $0x48] sm:$0xff]
    %v90 = vld [vmem:[%s0 + $0x50] sm:$0xff]
    %v91 = vld [vmem:[%s0 + $0x58] sm:$0xff]
    %v92 = vld [vmem:[%s0 + $0x60] sm:$0xff]
    %v93 = vld [vmem:[%s0 + $0x68] sm:$0xff]
    %v94 = vld [vmem:[%s0 + $0x70] sm:$0xff]
    %v95 = vld [vmem:[%s0 + $0x78] sm:$0xff]
    %v96 = vld [vmem:[%s0 + $0x80] sm:$0xff]
    %v97 = vld [vmem:[%s0 + $0x88] sm:$0xff]
    %v98 = vld [vmem:[%s0 + $0x90] sm:$0xff]
    %v99 = vld [vmem:[%s0 + $0x98] sm:$0xff]
    %v100 = vld [vmem:[%s0 + $0xa0] sm:$0xff]
    %v101 = vld [vmem:[%s0 + $0xa8] sm:$0xff]
    %v102 = vld [vmem:[%s0 + $0xb0] sm:$0xff]
    %v103 = vld [vmem:[%s0 + $0xb8] sm:$0xff]
    %v104 = vld [vmem:[%s0 + $0xc0] sm:$0xff]
    %v105 = vld [vmem:[%s0 + $0xc8] sm:$0xff]
    %v106 = vld [vmem:[%s0 + $0xd0] sm:$0xff]
    %v107 = vld [vmem:[%s0 + $0xd8] sm:$0xff]
    %v108 = vld [vmem:[%s0 + $0xe0] sm:$0xff]
    %v109 = vld [vmem:[%s0 + $0xe8] sm:$0xff]
    %v110 = vld [vmem:[%s0 + $0xf0] sm:$0xff]
    %v111 = vld [vmem:[%s0 + $0xf8] sm:$0xff]
    %v112 = vld [vmem:[%s0 + $0x100] sm:$0xff]
    %v113 = vld [vmem:[%s0 + $0x108] sm:$0xff]
    %v114 = vld [vmem:[%s0 + $0x110] sm:$0xff]
    %v115 = vld [vmem:[%s0 + $0x118] sm:$0xff]
    %v116 = vld [vmem:[%s0 + $0x120] sm:$0xff]
    %v117 = vld [vmem:[%s0 + $0x128] sm:$0xff]
    %v118 = vld [vmem:[%s0 + $0x130] sm:$0xff]
    %v119 = vld [vmem:[%s0 + $0x138] sm:$0xff]
    %v120 = vld [vmem:[%s0 + $0x140] sm:$0xff]
    %v121 = vld [vmem:[%s0 + $0x148] sm:$0xff]
    %v122 = vld [vmem:[%s0 + $0x150] sm:$0xff]
    %v123 = vld [vmem:[%s0 + $0x158] sm:$0xff]
    %v124 = vld [vmem:[%s0 + $0x160] sm:$0xff]
    %v125 = vld [vmem:[%s0 + $0x168] sm:$0xff]
    %v126 = vld [vmem:[%s0 + $0x170] sm:$0xff]
    %v127 = vld [vmem:[%s0 + $0x178] sm:$0xff]
    %v128 = vld [vmem:[%s0 + $0x180] sm:$0xff]
    %v129 = vld [vmem:[%s0 + $0x188] sm:$0xff]
    %v130 = vld [vmem:[%s0 + $0x190] sm:$0xff]
    %v131 = vld [vmem:[%s0 + $0x198] sm:$0xff]
    %v132 = vld [vmem:[%s0 + $0x1a0] sm:$0xff]
    %v133 = vld [vmem:[%s0 + $0x1a8] sm:$0xff]
    %v134 = vld [vmem:[%s0 + $0x1b0] sm:$0xff]
    %v135 = vld [vmem:[%s0 + $0x1b8] sm:$0xff]
    %v136 = vld [vmem:[%s0 + $0x1c0] sm:$0xff]
    %v137 = vld [vmem:[%s0 + $0x1c8] sm:$0xff]
    %v138 = vld [vmem:[%s0 + $0x1d0] sm:$0xff]
    %v139 = vld [vmem:[%s0 + $0x1d8] sm:$0xff]
    %v140 = vld [vmem:[%s0 + $0x1e0] sm:$0xff]
    %v141 = vld [vmem:[%s0 + $0x1e8] sm:$0xff]
    %v142 = vld [vmem:[%s0 + $0x1f0] sm:$0xff]
    %v143 = vld [vmem:[%s0 + $0x1f8] sm:$0xff]
    %s144 = smul.u32 0, 16
    %v145 = vlaneseq
    %v146 = vand.u32 %v145, 127
    %v147 = vstv %s144
    %v148 = vadd.s32 %v147, %v146
    %149 = vset.pattern.permute.xlu0 0
    %150 = vperm.xlu0 %149, %v80
    %v151 = vpop.permute.xlu0 %150
    %152 = vset.pattern.permute.xlu0 0
    %153 = vperm.xlu0 %152, %v81
    %v154 = vpop.permute.xlu0 %153
    %155 = vset.pattern.permute.xlu0 0
    %156 = vperm.xlu0 %155, %v82
    %v157 = vpop.permute.xlu0 %156
    %158 = vset.pattern.permute.xlu0 0
    %159 = vperm.xlu0 %158, %v83
    %v160 = vpop.permute.xlu0 %159
    %161 = vset.pattern.permute.xlu0 0
    %162 = vperm.xlu0 %161, %v84
    %v163 = vpop.permute.xlu0 %162
    %164 = vset.pattern.permute.xlu0 0
    %165 = vperm.xlu0 %164, %v85
    %v166 = vpop.permute.xlu0 %165
    %167 = vset.pattern.permute.xlu0 0
    %168 = vperm.xlu0 %167, %v86
    %v169 = vpop.permute.xlu0 %168
    %170 = vset.pattern.permute.xlu0 0
    %171 = vperm.xlu0 %170, %v87
    %v172 = vpop.permute.xlu0 %171
    %173 = vset.pattern.permute.xlu0 0
    %174 = vperm.xlu0 %173, %v88
    %v175 = vpop.permute.xlu0 %174
    %176 = vset.pattern.permute.xlu0 0
    %177 = vperm.xlu0 %176, %v89
    %v178 = vpop.permute.xlu0 %177
    %179 = vset.pattern.permute.xlu0 0
    %180 = vperm.xlu0 %179, %v90
    %v181 = vpop.permute.xlu0 %180
    %182 = vset.pattern.permute.xlu0 0
    %183 = vperm.xlu0 %182, %v91
    %v184 = vpop.permute.xlu0 %183
    %185 = vset.pattern.permute.xlu0 0
    %186 = vperm.xlu0 %185, %v92
    %v187 = vpop.permute.xlu0 %186
    %188 = vset.pattern.permute.xlu0 0
    %189 = vperm.xlu0 %188, %v93
    %v190 = vpop.permute.xlu0 %189
    %191 = vset.pattern.permute.xlu0 0
    %192 = vperm.xlu0 %191, %v94
    %v193 = vpop.permute.xlu0 %192
    %194 = vset.pattern.permute.xlu0 0
    %195 = vperm.xlu0 %194, %v95
    %v196 = vpop.permute.xlu0 %195
    %197 = vset.pattern.permute.xlu0 0
    %198 = vperm.xlu0 %197, %v96
    %v199 = vpop.permute.xlu0 %198
    %200 = vset.pattern.permute.xlu0 0
    %201 = vperm.xlu0 %200, %v97
    %v202 = vpop.permute.xlu0 %201
    %203 = vset.pattern.permute.xlu0 0
    %204 = vperm.xlu0 %203, %v98
    %v205 = vpop.permute.xlu0 %204
    %206 = vset.pattern.permute.xlu0 0
    %207 = vperm.xlu0 %206, %v99
    %v208 = vpop.permute.xlu0 %207
    %209 = vset.pattern.permute.xlu0 0
    %210 = vperm.xlu0 %209, %v100
    %v211 = vpop.permute.xlu0 %210
    %212 = vset.pattern.permute.xlu0 0
    %213 = vperm.xlu0 %212, %v101
    %v214 = vpop.permute.xlu0 %213
    %215 = vset.pattern.permute.xlu0 0
    %216 = vperm.xlu0 %215, %v102
    %v217 = vpop.permute.xlu0 %216
    %218 = vset.pattern.permute.xlu0 0
    %219 = vperm.xlu0 %218, %v103
    %v220 = vpop.permute.xlu0 %219
    %221 = vset.pattern.permute.xlu0 0
    %222 = vperm.xlu0 %221, %v104
    %v223 = vpop.permute.xlu0 %222
    %224 = vset.pattern.permute.xlu0 0
    %225 = vperm.xlu0 %224, %v105
    %v226 = vpop.permute.xlu0 %225
    %227 = vset.pattern.permute.xlu0 0
    %228 = vperm.xlu0 %227, %v106
    %v229 = vpop.permute.xlu0 %228
    %230 = vset.pattern.permute.xlu0 0
    %231 = vperm.xlu0 %230, %v107
    %v232 = vpop.permute.xlu0 %231
    %233 = vset.pattern.permute.xlu0 0
    %234 = vperm.xlu0 %233, %v108
    %v235 = vpop.permute.xlu0 %234
    %236 = vset.pattern.permute.xlu0 0
    %237 = vperm.xlu0 %236, %v109
    %v238 = vpop.permute.xlu0 %237
    %239 = vset.pattern.permute.xlu0 0
    %240 = vperm.xlu0 %239, %v110
    %v241 = vpop.permute.xlu0 %240
    %242 = vset.pattern.permute.xlu0 0
    %243 = vperm.xlu0 %242, %v111
    %v244 = vpop.permute.xlu0 %243
    %245 = vset.pattern.permute.xlu0 0
    %246 = vperm.xlu0 %245, %v112
    %v247 = vpop.permute.xlu0 %246
    %248 = vset.pattern.permute.xlu0 0
    %249 = vperm.xlu0 %248, %v113
    %v250 = vpop.permute.xlu0 %249
    %251 = vset.pattern.permute.xlu0 0
    %252 = vperm.xlu0 %251, %v114
    %v253 = vpop.permute.xlu0 %252
    %254 = vset.pattern.permute.xlu0 0
    %255 = vperm.xlu0 %254, %v115
    %v256 = vpop.permute.xlu0 %255
    %257 = vset.pattern.permute.xlu0 0
    %258 = vperm.xlu0 %257, %v116
    %v259 = vpop.permute.xlu0 %258
    %260 = vset.pattern.permute.xlu0 0
    %261 = vperm.xlu0 %260, %v117
    %v262 = vpop.permute.xlu0 %261
    %263 = vset.pattern.permute.xlu0 0
    %264 = vperm.xlu0 %263, %v118
    %v265 = vpop.permute.xlu0 %264
    %266 = vset.pattern.permute.xlu0 0
    %267 = vperm.xlu0 %266, %v119
    %v268 = vpop.permute.xlu0 %267
    %269 = vset.pattern.permute.xlu0 0
    %270 = vperm.xlu0 %269, %v120
    %v271 = vpop.permute.xlu0 %270
    %272 = vset.pattern.permute.xlu0 0
    %273 = vperm.xlu0 %272, %v121
    %v274 = vpop.permute.xlu0 %273
    %275 = vset.pattern.permute.xlu0 0
    %276 = vperm.xlu0 %275, %v122
    %v277 = vpop.permute.xlu0 %276
    %278 = vset.pattern.permute.xlu0 0
    %279 = vperm.xlu0 %278, %v123
    %v280 = vpop.permute.xlu0 %279
    %281 = vset.pattern.permute.xlu0 0
    %282 = vperm.xlu0 %281, %v124
    %v283 = vpop.permute.xlu0 %282
    %284 = vset.pattern.permute.xlu0 0
    %285 = vperm.xlu0 %284, %v125
    %v286 = vpop.permute.xlu0 %285
    %287 = vset.pattern.permute.xlu0 0
    %288 = vperm.xlu0 %287, %v126
    %v289 = vpop.permute.xlu0 %288
    %290 = vset.pattern.permute.xlu0 0
    %291 = vperm.xlu0 %290, %v127
    %v292 = vpop.permute.xlu0 %291
    %293 = vset.pattern.permute.xlu0 0
    %294 = vperm.xlu0 %293, %v128
    %v295 = vpop.permute.xlu0 %294
    %296 = vset.pattern.permute.xlu0 0
    %297 = vperm.xlu0 %296, %v129
    %v298 = vpop.permute.xlu0 %297
    %299 = vset.pattern.permute.xlu0 0
    %300 = vperm.xlu0 %299, %v130
    %v301 = vpop.permute.xlu0 %300
    %302 = vset.pattern.permute.xlu0 0
    %303 = vperm.xlu0 %302, %v131
    %v304 = vpop.permute.xlu0 %303
    %305 = vset.pattern.permute.xlu0 0
    %306 = vperm.xlu0 %305, %v132
    %v307 = vpop.permute.xlu0 %306
    %308 = vset.pattern.permute.xlu0 0
    %309 = vperm.xlu0 %308, %v133
    %v310 = vpop.permute.xlu0 %309
    %311 = vset.pattern.permute.xlu0 0
    %312 = vperm.xlu0 %311, %v134
    %v313 = vpop.permute.xlu0 %312
    %314 = vset.pattern.permute.xlu0 0
    %315 = vperm.xlu0 %314, %v135
    %v316 = vpop.permute.xlu0 %315
    %317 = vset.pattern.permute.xlu0 0
    %318 = vperm.xlu0 %317, %v136
    %v319 = vpop.permute.xlu0 %318
    %320 = vset.pattern.permute.xlu0 0
    %321 = vperm.xlu0 %320, %v137
    %v322 = vpop.permute.xlu0 %321
    %323 = vset.pattern.permute.xlu0 0
    %324 = vperm.xlu0 %323, %v138
    %v325 = vpop.permute.xlu0 %324
    %326 = vset.pattern.permute.xlu0 0
    %327 = vperm.xlu0 %326, %v139
    %v328 = vpop.permute.xlu0 %327
    %329 = vset.pattern.permute.xlu0 0
    %330 = vperm.xlu0 %329, %v140
    %v331 = vpop.permute.xlu0 %330
    %332 = vset.pattern.permute.xlu0 0
    %333 = vperm.xlu0 %332, %v141
    %v334 = vpop.permute.xlu0 %333
    %335 = vset.pattern.permute.xlu0 0
    %336 = vperm.xlu0 %335, %v142
    %v337 = vpop.permute.xlu0 %336
    %338 = vset.pattern.permute.xlu0 0
    %339 = vperm.xlu0 %338, %v143
    %v340 = vpop.permute.xlu0 %339
    %vm341 = vcmp.eq.s32.totalorder %v148, %v151
    %vm342 = vcmp.eq.s32.totalorder %v148, %v154
    %vm343 = vcmp.eq.s32.totalorder %v148, %v157
    %vm344 = vcmp.eq.s32.totalorder %v148, %v160
    %vm345 = vcmp.eq.s32.totalorder %v148, %v163
    %vm346 = vcmp.eq.s32.totalorder %v148, %v166
    %vm347 = vcmp.eq.s32.totalorder %v148, %v169
    %vm348 = vcmp.eq.s32.totalorder %v148, %v172
    %vm349 = vcmp.eq.s32.totalorder %v148, %v175
    %vm350 = vcmp.eq.s32.totalorder %v148, %v178
    %vm351 = vcmp.eq.s32.totalorder %v148, %v181
    %vm352 = vcmp.eq.s32.totalorder %v148, %v184
    %vm353 = vcmp.eq.s32.totalorder %v148, %v187
    %vm354 = vcmp.eq.s32.totalorder %v148, %v190
    %vm355 = vcmp.eq.s32.totalorder %v148, %v193
    %vm356 = vcmp.eq.s32.totalorder %v148, %v196
    %vm357 = vcmp.eq.s32.totalorder %v148, %v199
    %vm358 = vcmp.eq.s32.totalorder %v148, %v202
    %vm359 = vcmp.eq.s32.totalorder %v148, %v205
    %vm360 = vcmp.eq.s32.totalorder %v148, %v208
    %vm361 = vcmp.eq.s32.totalorder %v148, %v211
    %vm362 = vcmp.eq.s32.totalorder %v148, %v214
    %vm363 = vcmp.eq.s32.totalorder %v148, %v217
    %vm364 = vcmp.eq.s32.totalorder %v148, %v220
    %vm365 = vcmp.eq.s32.totalorder %v148, %v223
    %vm366 = vcmp.eq.s32.totalorder %v148, %v226
    %vm367 = vcmp.eq.s32.totalorder %v148, %v229
    %vm368 = vcmp.eq.s32.totalorder %v148, %v232
    %vm369 = vcmp.eq.s32.totalorder %v148, %v235
    %vm370 = vcmp.eq.s32.totalorder %v148, %v238
    %vm371 = vcmp.eq.s32.totalorder %v148, %v241
    %vm372 = vcmp.eq.s32.totalorder %v148, %v244
    %vm373 = vcmp.eq.s32.totalorder %v148, %v247
    %vm374 = vcmp.eq.s32.totalorder %v148, %v250
    %vm375 = vcmp.eq.s32.totalorder %v148, %v253
    %vm376 = vcmp.eq.s32.totalorder %v148, %v256
    %vm377 = vcmp.eq.s32.totalorder %v148, %v259
    %vm378 = vcmp.eq.s32.totalorder %v148, %v262
    %vm379 = vcmp.eq.s32.totalorder %v148, %v265
    %vm380 = vcmp.eq.s32.totalorder %v148, %v268
    %vm381 = vcmp.eq.s32.totalorder %v148, %v271
    %vm382 = vcmp.eq.s32.totalorder %v148, %v274
    %vm383 = vcmp.eq.s32.totalorder %v148, %v277
    %vm384 = vcmp.eq.s32.totalorder %v148, %v280
    %vm385 = vcmp.eq.s32.totalorder %v148, %v283
    %vm386 = vcmp.eq.s32.totalorder %v148, %v286
    %vm387 = vcmp.eq.s32.totalorder %v148, %v289
    %vm388 = vcmp.eq.s32.totalorder %v148, %v292
    %vm389 = vcmp.eq.s32.totalorder %v148, %v295
    %vm390 = vcmp.eq.s32.totalorder %v148, %v298
    %vm391 = vcmp.eq.s32.totalorder %v148, %v301
    %vm392 = vcmp.eq.s32.totalorder %v148, %v304
    %vm393 = vcmp.eq.s32.totalorder %v148, %v307
    %vm394 = vcmp.eq.s32.totalorder %v148, %v310
    %vm395 = vcmp.eq.s32.totalorder %v148, %v313
    %vm396 = vcmp.eq.s32.totalorder %v148, %v316
    %vm397 = vcmp.eq.s32.totalorder %v148, %v319
    %vm398 = vcmp.eq.s32.totalorder %v148, %v322
    %vm399 = vcmp.eq.s32.totalorder %v148, %v325
    %vm400 = vcmp.eq.s32.totalorder %v148, %v328
    %vm401 = vcmp.eq.s32.totalorder %v148, %v331
    %vm402 = vcmp.eq.s32.totalorder %v148, %v334
    %vm403 = vcmp.eq.s32.totalorder %v148, %v337
    %vm404 = vcmp.eq.s32.totalorder %v148, %v340
    %v405 = vsel %vm341, 1, 0
    %v406 = vsel %vm342, 1, 0
    %v407 = vsel %vm343, 1, 0
    %v408 = vsel %vm344, 1, 0
    %v409 = vsel %vm345, 1, 0
    %v410 = vsel %vm346, 1, 0
    %v411 = vsel %vm347, 1, 0
    %v412 = vsel %vm348, 1, 0
    %v413 = vsel %vm349, 1, 0
    %v414 = vsel %vm350, 1, 0
    %v415 = vsel %vm351, 1, 0
    %v416 = vsel %vm352, 1, 0
    %v417 = vsel %vm353, 1, 0
    %v418 = vsel %vm354, 1, 0
    %v419 = vsel %vm355, 1, 0
    %v420 = vsel %vm356, 1, 0
    %v421 = vsel %vm357, 1, 0
    %v422 = vsel %vm358, 1, 0
    %v423 = vsel %vm359, 1, 0
    %v424 = vsel %vm360, 1, 0
    %v425 = vsel %vm361, 1, 0
    %v426 = vsel %vm362, 1, 0
    %v427 = vsel %vm363, 1, 0
    %v428 = vsel %vm364, 1, 0
    %v429 = vsel %vm365, 1, 0
    %v430 = vsel %vm366, 1, 0
    %v431 = vsel %vm367, 1, 0
    %v432 = vsel %vm368, 1, 0
    %v433 = vsel %vm369, 1, 0
    %v434 = vsel %vm370, 1, 0
    %v435 = vsel %vm371, 1, 0
    %v436 = vsel %vm372, 1, 0
    %v437 = vsel %vm373, 1, 0
    %v438 = vsel %vm374, 1, 0
    %v439 = vsel %vm375, 1, 0
    %v440 = vsel %vm376, 1, 0
    %v441 = vsel %vm377, 1, 0
    %v442 = vsel %vm378, 1, 0
    %v443 = vsel %vm379, 1, 0
    %v444 = vsel %vm380, 1, 0
    %v445 = vsel %vm381, 1, 0
    %v446 = vsel %vm382, 1, 0
    %v447 = vsel %vm383, 1, 0
    %v448 = vsel %vm384, 1, 0
    %v449 = vsel %vm385, 1, 0
    %v450 = vsel %vm386, 1, 0
    %v451 = vsel %vm387, 1, 0
    %v452 = vsel %vm388, 1, 0
    %v453 = vsel %vm389, 1, 0
    %v454 = vsel %vm390, 1, 0
    %v455 = vsel %vm391, 1, 0
    %v456 = vsel %vm392, 1, 0
    %v457 = vsel %vm393, 1, 0
    %v458 = vsel %vm394, 1, 0
    %v459 = vsel %vm395, 1, 0
    %v460 = vsel %vm396, 1, 0
    %v461 = vsel %vm397, 1, 0
    %v462 = vsel %vm398, 1, 0
    %v463 = vsel %vm399, 1, 0
    %v464 = vsel %vm400, 1, 0
    %v465 = vsel %vm401, 1, 0
    %v466 = vsel %vm402, 1, 0
    %v467 = vsel %vm403, 1, 0
    %v468 = vsel %vm404, 1, 0
    %v469 = vcvt.s32.f32 %v405
    %v470 = vcvt.s32.f32 %v406
    %v471 = vcvt.s32.f32 %v407
    %v472 = vcvt.s32.f32 %v408
    %v473 = vcvt.s32.f32 %v409
    %v474 = vcvt.s32.f32 %v410
    %v475 = vcvt.s32.f32 %v411
    %v476 = vcvt.s32.f32 %v412
    %v477 = vcvt.s32.f32 %v413
    %v478 = vcvt.s32.f32 %v414
    %v479 = vcvt.s32.f32 %v415
    %v480 = vcvt.s32.f32 %v416
    %v481 = vcvt.s32.f32 %v417
    %v482 = vcvt.s32.f32 %v418
    %v483 = vcvt.s32.f32 %v419
    %v484 = vcvt.s32.f32 %v420
    %v485 = vcvt.s32.f32 %v421
    %v486 = vcvt.s32.f32 %v422
    %v487 = vcvt.s32.f32 %v423
    %v488 = vcvt.s32.f32 %v424
    %v489 = vcvt.s32.f32 %v425
    %v490 = vcvt.s32.f32 %v426
    %v491 = vcvt.s32.f32 %v427
    %v492 = vcvt.s32.f32 %v428
    %v493 = vcvt.s32.f32 %v429
    %v494 = vcvt.s32.f32 %v430
    %v495 = vcvt.s32.f32 %v431
    %v496 = vcvt.s32.f32 %v432
    %v497 = vcvt.s32.f32 %v433
    %v498 = vcvt.s32.f32 %v434
    %v499 = vcvt.s32.f32 %v435
    %v500 = vcvt.s32.f32 %v436
    %v501 = vcvt.s32.f32 %v437
    %v502 = vcvt.s32.f32 %v438
    %v503 = vcvt.s32.f32 %v439
    %v504 = vcvt.s32.f32 %v440
    %v505 = vcvt.s32.f32 %v441
    %v506 = vcvt.s32.f32 %v442
    %v507 = vcvt.s32.f32 %v443
    %v508 = vcvt.s32.f32 %v444
    %v509 = vcvt.s32.f32 %v445
    %v510 = vcvt.s32.f32 %v446
    %v511 = vcvt.s32.f32 %v447
    %v512 = vcvt.s32.f32 %v448
    %v513 = vcvt.s32.f32 %v449
    %v514 = vcvt.s32.f32 %v450
    %v515 = vcvt.s32.f32 %v451
    %v516 = vcvt.s32.f32 %v452
    %v517 = vcvt.s32.f32 %v453
    %v518 = vcvt.s32.f32 %v454
    %v519 = vcvt.s32.f32 %v455
    %v520 = vcvt.s32.f32 %v456
    %v521 = vcvt.s32.f32 %v457
    %v522 = vcvt.s32.f32 %v458
    %v523 = vcvt.s32.f32 %v459
    %v524 = vcvt.s32.f32 %v460
    %v525 = vcvt.s32.f32 %v461
    %v526 = vcvt.s32.f32 %v462
    %v527 = vcvt.s32.f32 %v463
    %v528 = vcvt.s32.f32 %v464
    %v529 = vcvt.s32.f32 %v465
    %v530 = vcvt.s32.f32 %v466
    %v531 = vcvt.s32.f32 %v467
    %v532 = vcvt.s32.f32 %v468
    %533 = vset.pattern.permute.xlu0 1
    %534 = vperm.xlu0 %533, %v80
    %v535 = vpop.permute.xlu0 %534
    %536 = vset.pattern.permute.xlu0 1
    %537 = vperm.xlu0 %536, %v81
    %v538 = vpop.permute.xlu0 %537
    %539 = vset.pattern.permute.xlu0 1
    %540 = vperm.xlu0 %539, %v82
    %v541 = vpop.permute.xlu0 %540
    %542 = vset.pattern.permute.xlu0 1
    %543 = vperm.xlu0 %542, %v83
    %v544 = vpop.permute.xlu0 %543
    %545 = vset.pattern.permute.xlu0 1
    %546 = vperm.xlu0 %545, %v84
    %v547 = vpop.permute.xlu0 %546
    %548 = vset.pattern.permute.xlu0 1
    %549 = vperm.xlu0 %548, %v85
    %v550 = vpop.permute.xlu0 %549
    %551 = vset.pattern.permute.xlu0 1
    %552 = vperm.xlu0 %551, %v86
    %v553 = vpop.permute.xlu0 %552
    %554 = vset.pattern.permute.xlu0 1
    %555 = vperm.xlu0 %554, %v87
    %v556 = vpop.permute.xlu0 %555
    %557 = vset.pattern.permute.xlu0 1
    %558 = vperm.xlu0 %557, %v88
    %v559 = vpop.permute.xlu0 %558
    %560 = vset.pattern.permute.xlu0 1
    %561 = vperm.xlu0 %560, %v89
    %v562 = vpop.permute.xlu0 %561
    %563 = vset.pattern.permute.xlu0 1
    %564 = vperm.xlu0 %563, %v90
    %v565 = vpop.permute.xlu0 %564
    %566 = vset.pattern.permute.xlu0 1
    %567 = vperm.xlu0 %566, %v91
    %v568 = vpop.permute.xlu0 %567
    %569 = vset.pattern.permute.xlu0 1
    %570 = vperm.xlu0 %569, %v92
    %v571 = vpop.permute.xlu0 %570
    %572 = vset.pattern.permute.xlu0 1
    %573 = vperm.xlu0 %572, %v93
    %v574 = vpop.permute.xlu0 %573
    %575 = vset.pattern.permute.xlu0 1
    %576 = vperm.xlu0 %575, %v94
    %v577 = vpop.permute.xlu0 %576
    %578 = vset.pattern.permute.xlu0 1
    %579 = vperm.xlu0 %578, %v95
    %v580 = vpop.permute.xlu0 %579
    %581 = vset.pattern.permute.xlu0 1
    %582 = vperm.xlu0 %581, %v96
    %v583 = vpop.permute.xlu0 %582
    %584 = vset.pattern.permute.xlu0 1
    %585 = vperm.xlu0 %584, %v97
    %v586 = vpop.permute.xlu0 %585
    %587 = vset.pattern.permute.xlu0 1
    %588 = vperm.xlu0 %587, %v98
    %v589 = vpop.permute.xlu0 %588
    %590 = vset.pattern.permute.xlu0 1
    %591 = vperm.xlu0 %590, %v99
    %v592 = vpop.permute.xlu0 %591
    %593 = vset.pattern.permute.xlu0 1
    %594 = vperm.xlu0 %593, %v100
    %v595 = vpop.permute.xlu0 %594
    %596 = vset.pattern.permute.xlu0 1
    %597 = vperm.xlu0 %596, %v101
    %v598 = vpop.permute.xlu0 %597
    %599 = vset.pattern.permute.xlu0 1
    %600 = vperm.xlu0 %599, %v102
    %v601 = vpop.permute.xlu0 %600
    %602 = vset.pattern.permute.xlu0 1
    %603 = vperm.xlu0 %602, %v103
    %v604 = vpop.permute.xlu0 %603
    %605 = vset.pattern.permute.xlu0 1
    %606 = vperm.xlu0 %605, %v104
    %v607 = vpop.permute.xlu0 %606
    %608 = vset.pattern.permute.xlu0 1
    %609 = vperm.xlu0 %608, %v105
    %v610 = vpop.permute.xlu0 %609
    %611 = vset.pattern.permute.xlu0 1
    %612 = vperm.xlu0 %611, %v106
    %v613 = vpop.permute.xlu0 %612
    %614 = vset.pattern.permute.xlu0 1
    %615 = vperm.xlu0 %614, %v107
    %v616 = vpop.permute.xlu0 %615
    %617 = vset.pattern.permute.xlu0 1
    %618 = vperm.xlu0 %617, %v108
    %v619 = vpop.permute.xlu0 %618
    %620 = vset.pattern.permute.xlu0 1
    %621 = vperm.xlu0 %620, %v109
    %v622 = vpop.permute.xlu0 %621
    %623 = vset.pattern.permute.xlu0 1
    %624 = vperm.xlu0 %623, %v110
    %v625 = vpop.permute.xlu0 %624
    %626 = vset.pattern.permute.xlu0 1
    %627 = vperm.xlu0 %626, %v111
    %v628 = vpop.permute.xlu0 %627
    %629 = vset.pattern.permute.xlu0 1
    %630 = vperm.xlu0 %629, %v112
    %v631 = vpop.permute.xlu0 %630
    %632 = vset.pattern.permute.xlu0 1
    %633 = vperm.xlu0 %632, %v113
    %v634 = vpop.permute.xlu0 %633
    %635 = vset.pattern.permute.xlu0 1
    %636 = vperm.xlu0 %635, %v114
    %v637 = vpop.permute.xlu0 %636
    %638 = vset.pattern.permute.xlu0 1
    %639 = vperm.xlu0 %638, %v115
    %v640 = vpop.permute.xlu0 %639
    %641 = vset.pattern.permute.xlu0 1
    %642 = vperm.xlu0 %641, %v116
    %v643 = vpop.permute.xlu0 %642
    %644 = vset.pattern.permute.xlu0 1
    %645 = vperm.xlu0 %644, %v117
    %v646 = vpop.permute.xlu0 %645
    %647 = vset.pattern.permute.xlu0 1
    %648 = vperm.xlu0 %647, %v118
    %v649 = vpop.permute.xlu0 %648
    %650 = vset.pattern.permute.xlu0 1
    %651 = vperm.xlu0 %650, %v119
    %v652 = vpop.permute.xlu0 %651
    %653 = vset.pattern.permute.xlu0 1
    %654 = vperm.xlu0 %653, %v120
    %v655 = vpop.permute.xlu0 %654
    %656 = vset.pattern.permute.xlu0 1
    %657 = vperm.xlu0 %656, %v121
    %v658 = vpop.permute.xlu0 %657
    %659 = vset.pattern.permute.xlu0 1
    %660 = vperm.xlu0 %659, %v122
    %v661 = vpop.permute.xlu0 %660
    %662 = vset.pattern.permute.xlu0 1
    %663 = vperm.xlu0 %662, %v123
    %v664 = vpop.permute.xlu0 %663
    %665 = vset.pattern.permute.xlu0 1
    %666 = vperm.xlu0 %665, %v124
    %v667 = vpop.permute.xlu0 %666
    %668 = vset.pattern.permute.xlu0 1
    %669 = vperm.xlu0 %668, %v125
    %v670 = vpop.permute.xlu0 %669
    %671 = vset.pattern.permute.xlu0 1
    %672 = vperm.xlu0 %671, %v126
    %v673 = vpop.permute.xlu0 %672
    %674 = vset.pattern.permute.xlu0 1
    %675 = vperm.xlu0 %674, %v127
    %v676 = vpop.permute.xlu0 %675
    %677 = vset.pattern.permute.xlu0 1
    %678 = vperm.xlu0 %677, %v128
    %v679 = vpop.permute.xlu0 %678
    %680 = vset.pattern.permute.xlu0 1
    %681 = vperm.xlu0 %680, %v129
    %v682 = vpop.permute.xlu0 %681
    %683 = vset.pattern.permute.xlu0 1
    %684 = vperm.xlu0 %683, %v130
    %v685 = vpop.permute.xlu0 %684
    %686 = vset.pattern.permute.xlu0 1
    %687 = vperm.xlu0 %686, %v131
    %v688 = vpop.permute.xlu0 %687
    %689 = vset.pattern.permute.xlu0 1
    %690 = vperm.xlu0 %689, %v132
    %v691 = vpop.permute.xlu0 %690
    %692 = vset.pattern.permute.xlu0 1
    %693 = vperm.xlu0 %692, %v133
    %v694 = vpop.permute.xlu0 %693
    %695 = vset.pattern.permute.xlu0 1
    %696 = vperm.xlu0 %695, %v134
    %v697 = vpop.permute.xlu0 %696
    %698 = vset.pattern.permute.xlu0 1
    %699 = vperm.xlu0 %698, %v135
    %v700 = vpop.permute.xlu0 %699
    %701 = vset.pattern.permute.xlu0 1
    %702 = vperm.xlu0 %701, %v136
    %v703 = vpop.permute.xlu0 %702
    %704 = vset.pattern.permute.xlu0 1
    %705 = vperm.xlu0 %704, %v137
    %v706 = vpop.permute.xlu0 %705
    %707 = vset.pattern.permute.xlu0 1
    %708 = vperm.xlu0 %707, %v138
    %v709 = vpop.permute.xlu0 %708
    %710 = vset.pattern.permute.xlu0 1
    %711 = vperm.xlu0 %710, %v139
    %v712 = vpop.permute.xlu0 %711
    %713 = vset.pattern.permute.xlu0 1
    %714 = vperm.xlu0 %713, %v140
    %v715 = vpop.permute.xlu0 %714
    %716 = vset.pattern.permute.xlu0 1
    %717 = vperm.xlu0 %716, %v141
    %v718 = vpop.permute.xlu0 %717
    %719 = vset.pattern.permute.xlu0 1
    %720 = vperm.xlu0 %719, %v142
    %v721 = vpop.permute.xlu0 %720
    %722 = vset.pattern.permute.xlu0 1
    %723 = vperm.xlu0 %722, %v143
    %v724 = vpop.permute.xlu0 %723
    %vm725 = vcmp.eq.s32.totalorder %v148, %v535
    %vm726 = vcmp.eq.s32.totalorder %v148, %v538
    %vm727 = vcmp.eq.s32.totalorder %v148, %v541
    %vm728 = vcmp.eq.s32.totalorder %v148, %v544
    %vm729 = vcmp.eq.s32.totalorder %v148, %v547
    %vm730 = vcmp.eq.s32.totalorder %v148, %v550
    %vm731 = vcmp.eq.s32.totalorder %v148, %v553
    %vm732 = vcmp.eq.s32.totalorder %v148, %v556
    %vm733 = vcmp.eq.s32.totalorder %v148, %v559
    %vm734 = vcmp.eq.s32.totalorder %v148, %v562
    %vm735 = vcmp.eq.s32.totalorder %v148, %v565
    %vm736 = vcmp.eq.s32.totalorder %v148, %v568
    %vm737 = vcmp.eq.s32.totalorder %v148, %v571
    %vm738 = vcmp.eq.s32.totalorder %v148, %v574
    %vm739 = vcmp.eq.s32.totalorder %v148, %v577
    %vm740 = vcmp.eq.s32.totalorder %v148, %v580
    %vm741 = vcmp.eq.s32.totalorder %v148, %v583
    %vm742 = vcmp.eq.s32.totalorder %v148, %v586
    %vm743 = vcmp.eq.s32.totalorder %v148, %v589
    %vm744 = vcmp.eq.s32.totalorder %v148, %v592
    %vm745 = vcmp.eq.s32.totalorder %v148, %v595
    %vm746 = vcmp.eq.s32.totalorder %v148, %v598
    %vm747 = vcmp.eq.s32.totalorder %v148, %v601
    %vm748 = vcmp.eq.s32.totalorder %v148, %v604
    %vm749 = vcmp.eq.s32.totalorder %v148, %v607
    %vm750 = vcmp.eq.s32.totalorder %v148, %v610
    %vm751 = vcmp.eq.s32.totalorder %v148, %v613
    %vm752 = vcmp.eq.s32.totalorder %v148, %v616
    %vm753 = vcmp.eq.s32.totalorder %v148, %v619
    %vm754 = vcmp.eq.s32.totalorder %v148, %v622
    %vm755 = vcmp.eq.s32.totalorder %v148, %v625
    %vm756 = vcmp.eq.s32.totalorder %v148, %v628
    %vm757 = vcmp.eq.s32.totalorder %v148, %v631
    %vm758 = vcmp.eq.s32.totalorder %v148, %v634
    %vm759 = vcmp.eq.s32.totalorder %v148, %v637
    %vm760 = vcmp.eq.s32.totalorder %v148, %v640
    %vm761 = vcmp.eq.s32.totalorder %v148, %v643
    %vm762 = vcmp.eq.s32.totalorder %v148, %v646
    %vm763 = vcmp.eq.s32.totalorder %v148, %v649
    %vm764 = vcmp.eq.s32.totalorder %v148, %v652
    %vm765 = vcmp.eq.s32.totalorder %v148, %v655
    %vm766 = vcmp.eq.s32.totalorder %v148, %v658
    %vm767 = vcmp.eq.s32.totalorder %v148, %v661
    %vm768 = vcmp.eq.s32.totalorder %v148, %v664
    %vm769 = vcmp.eq.s32.totalorder %v148, %v667
    %vm770 = vcmp.eq.s32.totalorder %v148, %v670
    %vm771 = vcmp.eq.s32.totalorder %v148, %v673
    %vm772 = vcmp.eq.s32.totalorder %v148, %v676
    %vm773 = vcmp.eq.s32.totalorder %v148, %v679
    %vm774 = vcmp.eq.s32.totalorder %v148, %v682
    %vm775 = vcmp.eq.s32.totalorder %v148, %v685
    %vm776 = vcmp.eq.s32.totalorder %v148, %v688
    %vm777 = vcmp.eq.s32.totalorder %v148, %v691
    %vm778 = vcmp.eq.s32.totalorder %v148, %v694
    %vm779 = vcmp.eq.s32.totalorder %v148, %v697
    %vm780 = vcmp.eq.s32.totalorder %v148, %v700
    %vm781 = vcmp.eq.s32.totalorder %v148, %v703
    %vm782 = vcmp.eq.s32.totalorder %v148, %v706
    %vm783 = vcmp.eq.s32.totalorder %v148, %v709
    %vm784 = vcmp.eq.s32.totalorder %v148, %v712
    %vm785 = vcmp.eq.s32.totalorder %v148, %v715
    %vm786 = vcmp.eq.s32.totalorder %v148, %v718
    %vm787 = vcmp.eq.s32.totalorder %v148, %v721
    %vm788 = vcmp.eq.s32.totalorder %v148, %v724
    %v789 = vsel %vm725, 1, 0
    %v790 = vsel %vm726, 1, 0
    %v791 = vsel %vm727, 1, 0
    %v792 = vsel %vm728, 1, 0
    %v793 = vsel %vm729, 1, 0
    %v794 = vsel %vm730, 1, 0
    %v795 = vsel %vm731, 1, 0
    %v796 = vsel %vm732, 1, 0
    %v797 = vsel %vm733, 1, 0
    %v798 = vsel %vm734, 1, 0
    %v799 = vsel %vm735, 1, 0
    %v800 = vsel %vm736, 1, 0
    %v801 = vsel %vm737, 1, 0
    %v802 = vsel %vm738, 1, 0
    %v803 = vsel %vm739, 1, 0
    %v804 = vsel %vm740, 1, 0
    %v805 = vsel %vm741, 1, 0
    %v806 = vsel %vm742, 1, 0
    %v807 = vsel %vm743, 1, 0
    %v808 = vsel %vm744, 1, 0
    %v809 = vsel %vm745, 1, 0
    %v810 = vsel %vm746, 1, 0
    %v811 = vsel %vm747, 1, 0
    %v812 = vsel %vm748, 1, 0
    %v813 = vsel %vm749, 1, 0
    %v814 = vsel %vm750, 1, 0
    %v815 = vsel %vm751, 1, 0
    %v816 = vsel %vm752, 1, 0
    %v817 = vsel %vm753, 1, 0
    %v818 = vsel %vm754, 1, 0
    %v819 = vsel %vm755, 1, 0
    %v820 = vsel %vm756, 1, 0
    %v821 = vsel %vm757, 1, 0
    %v822 = vsel %vm758, 1, 0
    %v823 = vsel %vm759, 1, 0
    %v824 = vsel %vm760, 1, 0
    %v825 = vsel %vm761, 1, 0
    %v826 = vsel %vm762, 1, 0
    %v827 = vsel %vm763, 1, 0
    %v828 = vsel %vm764, 1, 0
    %v829 = vsel %vm765, 1, 0
    %v830 = vsel %vm766, 1, 0
    %v831 = vsel %vm767, 1, 0
    %v832 = vsel %vm768, 1, 0
    %v833 = vsel %vm769, 1, 0
    %v834 = vsel %vm770, 1, 0
    %v835 = vsel %vm771, 1, 0
    %v836 = vsel %vm772, 1, 0
    %v837 = vsel %vm773, 1, 0
    %v838 = vsel %vm774, 1, 0
    %v839 = vsel %vm775, 1, 0
    %v840 = vsel %vm776, 1, 0
    %v841 = vsel %vm777, 1, 0
    %v842 = vsel %vm778, 1, 0
    %v843 = vsel %vm779, 1, 0
    %v844 = vsel %vm780, 1, 0
    %v845 = vsel %vm781, 1, 0
    %v846 = vsel %vm782, 1, 0
    %v847 = vsel %vm783, 1, 0
    %v848 = vsel %vm784, 1, 0
    %v849 = vsel %vm785, 1, 0
    %v850 = vsel %vm786, 1, 0
    %v851 = vsel %vm787, 1, 0
    %v852 = vsel %vm788, 1, 0
    %v853 = vcvt.s32.f32 %v789
    %v854 = vcvt.s32.f32 %v790
    %v855 = vcvt.s32.f32 %v791
    %v856 = vcvt.s32.f32 %v792
    %v857 = vcvt.s32.f32 %v793
    %v858 = vcvt.s32.f32 %v794
    %v859 = vcvt.s32.f32 %v795
    %v860 = vcvt.s32.f32 %v796
    %v861 = vcvt.s32.f32 %v797
    %v862 = vcvt.s32.f32 %v798
    %v863 = vcvt.s32.f32 %v799
    %v864 = vcvt.s32.f32 %v800
    %v865 = vcvt.s32.f32 %v801
    %v866 = vcvt.s32.f32 %v802
    %v867 = vcvt.s32.f32 %v803
    %v868 = vcvt.s32.f32 %v804
    %v869 = vcvt.s32.f32 %v805
    %v870 = vcvt.s32.f32 %v806
    %v871 = vcvt.s32.f32 %v807
    %v872 = vcvt.s32.f32 %v808
    %v873 = vcvt.s32.f32 %v809
    %v874 = vcvt.s32.f32 %v810
    %v875 = vcvt.s32.f32 %v811
    %v876 = vcvt.s32.f32 %v812
    %v877 = vcvt.s32.f32 %v813
    %v878 = vcvt.s32.f32 %v814
    %v879 = vcvt.s32.f32 %v815
    %v880 = vcvt.s32.f32 %v816
    %v881 = vcvt.s32.f32 %v817
    %v882 = vcvt.s32.f32 %v818
    %v883 = vcvt.s32.f32 %v819
    %v884 = vcvt.s32.f32 %v820
    %v885 = vcvt.s32.f32 %v821
    %v886 = vcvt.s32.f32 %v822
    %v887 = vcvt.s32.f32 %v823
    %v888 = vcvt.s32.f32 %v824
    %v889 = vcvt.s32.f32 %v825
    %v890 = vcvt.s32.f32 %v826
    %v891 = vcvt.s32.f32 %v827
    %v892 = vcvt.s32.f32 %v828
    %v893 = vcvt.s32.f32 %v829
    %v894 = vcvt.s32.f32 %v830
    %v895 = vcvt.s32.f32 %v831
    %v896 = vcvt.s32.f32 %v832
    %v897 = vcvt.s32.f32 %v833
    %v898 = vcvt.s32.f32 %v834
    %v899 = vcvt.s32.f32 %v835
    %v900 = vcvt.s32.f32 %v836
    %v901 = vcvt.s32.f32 %v837
    %v902 = vcvt.s32.f32 %v838
    %v903 = vcvt.s32.f32 %v839
    %v904 = vcvt.s32.f32 %v840
    %v905 = vcvt.s32.f32 %v841
    %v906 = vcvt.s32.f32 %v842
    %v907 = vcvt.s32.f32 %v843
    %v908 = vcvt.s32.f32 %v844
    %v909 = vcvt.s32.f32 %v845
    %v910 = vcvt.s32.f32 %v846
    %v911 = vcvt.s32.f32 %v847
    %v912 = vcvt.s32.f32 %v848
    %v913 = vcvt.s32.f32 %v849
    %v914 = vcvt.s32.f32 %v850
    %v915 = vcvt.s32.f32 %v851
    %v916 = vcvt.s32.f32 %v852
    %v917 = vsub.f32 %v469, %v853
    %v918 = vsub.f32 %v470, %v854
    %v919 = vsub.f32 %v471, %v855
    %v920 = vsub.f32 %v472, %v856
    %v921 = vsub.f32 %v473, %v857
    %v922 = vsub.f32 %v474, %v858
    %v923 = vsub.f32 %v475, %v859
    %v924 = vsub.f32 %v476, %v860
    %v925 = vsub.f32 %v477, %v861
    %v926 = vsub.f32 %v478, %v862
    %v927 = vsub.f32 %v479, %v863
    %v928 = vsub.f32 %v480, %v864
    %v929 = vsub.f32 %v481, %v865
    %v930 = vsub.f32 %v482, %v866
    %v931 = vsub.f32 %v483, %v867
    %v932 = vsub.f32 %v484, %v868
    %v933 = vsub.f32 %v485, %v869
    %v934 = vsub.f32 %v486, %v870
    %v935 = vsub.f32 %v487, %v871
    %v936 = vsub.f32 %v488, %v872
    %v937 = vsub.f32 %v489, %v873
    %v938 = vsub.f32 %v490, %v874
    %v939 = vsub.f32 %v491, %v875
    %v940 = vsub.f32 %v492, %v876
    %v941 = vsub.f32 %v493, %v877
    %v942 = vsub.f32 %v494, %v878
    %v943 = vsub.f32 %v495, %v879
    %v944 = vsub.f32 %v496, %v880
    %v945 = vsub.f32 %v497, %v881
    %v946 = vsub.f32 %v498, %v882
    %v947 = vsub.f32 %v499, %v883
    %v948 = vsub.f32 %v500, %v884
    %v949 = vsub.f32 %v501, %v885
    %v950 = vsub.f32 %v502, %v886
    %v951 = vsub.f32 %v503, %v887
    %v952 = vsub.f32 %v504, %v888
    %v953 = vsub.f32 %v505, %v889
    %v954 = vsub.f32 %v506, %v890
    %v955 = vsub.f32 %v507, %v891
    %v956 = vsub.f32 %v508, %v892
    %v957 = vsub.f32 %v509, %v893
    %v958 = vsub.f32 %v510, %v894
    %v959 = vsub.f32 %v511, %v895
    %v960 = vsub.f32 %v512, %v896
    %v961 = vsub.f32 %v513, %v897
    %v962 = vsub.f32 %v514, %v898
    %v963 = vsub.f32 %v515, %v899
    %v964 = vsub.f32 %v516, %v900
    %v965 = vsub.f32 %v517, %v901
    %v966 = vsub.f32 %v518, %v902
    %v967 = vsub.f32 %v519, %v903
    %v968 = vsub.f32 %v520, %v904
    %v969 = vsub.f32 %v521, %v905
    %v970 = vsub.f32 %v522, %v906
    %v971 = vsub.f32 %v523, %v907
    %v972 = vsub.f32 %v524, %v908
    %v973 = vsub.f32 %v525, %v909
    %v974 = vsub.f32 %v526, %v910
    %v975 = vsub.f32 %v527, %v911
    %v976 = vsub.f32 %v528, %v912
    %v977 = vsub.f32 %v529, %v913
    %v978 = vsub.f32 %v530, %v914
    %v979 = vsub.f32 %v531, %v915
    %v980 = vsub.f32 %v532, %v916
    %v981 = vld [vmem:[#allocation2] sm:$0xff]
    %v982 = vld [vmem:[#allocation2 + $0x8] sm:$0xff]
    %v983 = vld [vmem:[#allocation2 + $0x10] sm:$0xff]
    %v984 = vld [vmem:[#allocation2 + $0x18] sm:$0xff]
    %v985 = vld [vmem:[#allocation2 + $0x20] sm:$0xff]
    %v986 = vld [vmem:[#allocation2 + $0x28] sm:$0xff]
    %v987 = vld [vmem:[#allocation2 + $0x30] sm:$0xff]
    %v988 = vld [vmem:[#allocation2 + $0x38] sm:$0xff]
    %v989 = vld [vmem:[#allocation2 + $0x40] sm:$0xff]
    %v990 = vld [vmem:[#allocation2 + $0x48] sm:$0xff]
    %v991 = vld [vmem:[#allocation2 + $0x50] sm:$0xff]
    %v992 = vld [vmem:[#allocation2 + $0x58] sm:$0xff]
    %v993 = vld [vmem:[#allocation2 + $0x60] sm:$0xff]
    %v994 = vld [vmem:[#allocation2 + $0x68] sm:$0xff]
    %v995 = vld [vmem:[#allocation2 + $0x70] sm:$0xff]
    %v996 = vld [vmem:[#allocation2 + $0x78] sm:$0xff]
    %v997 = vld [vmem:[#allocation2 + $0x80] sm:$0xff]
    %v998 = vld [vmem:[#allocation2 + $0x88] sm:$0xff]
    %v999 = vld [vmem:[#allocation2 + $0x90] sm:$0xff]
    %v1000 = vld [vmem:[#allocation2 + $0x98] sm:$0xff]
    %v1001 = vld [vmem:[#allocation2 + $0xa0] sm:$0xff]
    %v1002 = vld [vmem:[#allocation2 + $0xa8] sm:$0xff]
    %v1003 = vld [vmem:[#allocation2 + $0xb0] sm:$0xff]
    %v1004 = vld [vmem:[#allocation2 + $0xb8] sm:$0xff]
    %v1005 = vld [vmem:[#allocation2 + $0xc0] sm:$0xff]
    %v1006 = vld [vmem:[#allocation2 + $0xc8] sm:$0xff]
    %v1007 = vld [vmem:[#allocation2 + $0xd0] sm:$0xff]
    %v1008 = vld [vmem:[#allocation2 + $0xd8] sm:$0xff]
    %v1009 = vld [vmem:[#allocation2 + $0xe0] sm:$0xff]
    %v1010 = vld [vmem:[#allocation2 + $0xe8] sm:$0xff]
    %v1011 = vld [vmem:[#allocation2 + $0xf0] sm:$0xff]
    %v1012 = vld [vmem:[#allocation2 + $0xf8] sm:$0xff]
    %v1013 = vld [vmem:[#allocation2 + $0x100] sm:$0xff]
    %v1014 = vld [vmem:[#allocation2 + $0x108] sm:$0xff]
    %v1015 = vld [vmem:[#allocation2 + $0x110] sm:$0xff]
    %v1016 = vld [vmem:[#allocation2 + $0x118] sm:$0xff]
    %v1017 = vld [vmem:[#allocation2 + $0x120] sm:$0xff]
    %v1018 = vld [vmem:[#allocation2 + $0x128] sm:$0xff]
    %v1019 = vld [vmem:[#allocation2 + $0x130] sm:$0xff]
    %v1020 = vld [vmem:[#allocation2 + $0x138] sm:$0xff]
    %v1021 = vld [vmem:[#allocation2 + $0x140] sm:$0xff]
    %v1022 = vld [vmem:[#allocation2 + $0x148] sm:$0xff]
    %v1023 = vld [vmem:[#allocation2 + $0x150] sm:$0xff]
    %v1024 = vld [vmem:[#allocation2 + $0x158] sm:$0xff]
    %v1025 = vld [vmem:[#allocation2 + $0x160] sm:$0xff]
    %v1026 = vld [vmem:[#allocation2 + $0x168] sm:$0xff]
    %v1027 = vld [vmem:[#allocation2 + $0x170] sm:$0xff]
    %v1028 = vld [vmem:[#allocation2 + $0x178] sm:$0xff]
    %v1029 = vld [vmem:[#allocation2 + $0x180] sm:$0xff]
    %v1030 = vld [vmem:[#allocation2 + $0x188] sm:$0xff]
    %v1031 = vld [vmem:[#allocation2 + $0x190] sm:$0xff]
    %v1032 = vld [vmem:[#allocation2 + $0x198] sm:$0xff]
    %v1033 = vld [vmem:[#allocation2 + $0x1a0] sm:$0xff]
    %v1034 = vld [vmem:[#allocation2 + $0x1a8] sm:$0xff]
    %v1035 = vld [vmem:[#allocation2 + $0x1b0] sm:$0xff]
    %v1036 = vld [vmem:[#allocation2 + $0x1b8] sm:$0xff]
    %v1037 = vld [vmem:[#allocation2 + $0x1c0] sm:$0xff]
    %v1038 = vld [vmem:[#allocation2 + $0x1c8] sm:$0xff]
    %v1039 = vld [vmem:[#allocation2 + $0x1d0] sm:$0xff]
    %v1040 = vld [vmem:[#allocation2 + $0x1d8] sm:$0xff]
    %v1041 = vld [vmem:[#allocation2 + $0x1e0] sm:$0xff]
    %v1042 = vld [vmem:[#allocation2 + $0x1e8] sm:$0xff]
    %v1043 = vld [vmem:[#allocation2 + $0x1f0] sm:$0xff]
    %v1044 = vld [vmem:[#allocation2 + $0x1f8] sm:$0xff]
    %v1045 = vld [vmem:[%s1] sm:$0xff]
    %v1046 = vld [vmem:[%s1 + $0x8] sm:$0xff]
    %vm1047 = vcmask 130048
    %v1049 = vsel %vm1047, %v917, 0
    %v1052 = vsel %vm1047, %v918, 0
    %v1055 = vsel %vm1047, %v919, 0
    %v1058 = vsel %vm1047, %v920, 0
    %v1061 = vsel %vm1047, %v921, 0
    %v1064 = vsel %vm1047, %v922, 0
    %v1067 = vsel %vm1047, %v923, 0
    %v1070 = vsel %vm1047, %v924, 0
    %v1073 = vsel %vm1047, %v925, 0
    %v1076 = vsel %vm1047, %v926, 0
    %v1079 = vsel %vm1047, %v927, 0
    %v1082 = vsel %vm1047, %v928, 0
    %v1085 = vsel %vm1047, %v929, 0
    %v1088 = vsel %vm1047, %v930, 0
    %v1091 = vsel %vm1047, %v931, 0
    %v1094 = vsel %vm1047, %v932, 0
    %v1097 = vsel %vm1047, %v933, 0
    %v1100 = vsel %vm1047, %v934, 0
    %v1103 = vsel %vm1047, %v935, 0
    %v1106 = vsel %vm1047, %v936, 0
    %v1109 = vsel %vm1047, %v937, 0
    %v1112 = vsel %vm1047, %v938, 0
    %v1115 = vsel %vm1047, %v939, 0
    %v1118 = vsel %vm1047, %v940, 0
    %v1121 = vsel %vm1047, %v941, 0
    %v1124 = vsel %vm1047, %v942, 0
    %v1127 = vsel %vm1047, %v943, 0
    %v1130 = vsel %vm1047, %v944, 0
    %v1133 = vsel %vm1047, %v945, 0
    %v1136 = vsel %vm1047, %v946, 0
    %v1139 = vsel %vm1047, %v947, 0
    %v1142 = vsel %vm1047, %v948, 0
    %v1145 = vsel %vm1047, %v949, 0
    %v1148 = vsel %vm1047, %v950, 0
    %v1151 = vsel %vm1047, %v951, 0
    %v1154 = vsel %vm1047, %v952, 0
    %v1157 = vsel %vm1047, %v953, 0
    %v1160 = vsel %vm1047, %v954, 0
    %v1163 = vsel %vm1047, %v955, 0
    %v1166 = vsel %vm1047, %v956, 0
    %v1169 = vsel %vm1047, %v957, 0
    %v1172 = vsel %vm1047, %v958, 0
    %v1175 = vsel %vm1047, %v959, 0
    %v1178 = vsel %vm1047, %v960, 0
    %v1181 = vsel %vm1047, %v961, 0
    %v1184 = vsel %vm1047, %v962, 0
    %v1187 = vsel %vm1047, %v963, 0
    %v1190 = vsel %vm1047, %v964, 0
    %v1193 = vsel %vm1047, %v965, 0
    %v1196 = vsel %vm1047, %v966, 0
    %v1199 = vsel %vm1047, %v967, 0
    %v1202 = vsel %vm1047, %v968, 0
    %v1205 = vsel %vm1047, %v969, 0
    %v1208 = vsel %vm1047, %v970, 0
    %v1211 = vsel %vm1047, %v971, 0
    %v1214 = vsel %vm1047, %v972, 0
    %v1217 = vsel %vm1047, %v973, 0
    %v1220 = vsel %vm1047, %v974, 0
    %v1223 = vsel %vm1047, %v975, 0
    %v1226 = vsel %vm1047, %v976, 0
    %v1229 = vsel %vm1047, %v977, 0
    %v1232 = vsel %vm1047, %v978, 0
    %v1235 = vsel %vm1047, %v979, 0
    %v1238 = vsel %vm1047, %v980, 0
    %1240 = vmatprep.subr.mxu0 0.0
    %v1241 = vand.u32 %v1045, 4294901760
    %1242 = vmatpush1.msra.mxu0 %v1241
    %1243 = vmatprep.subr.mxu0 0.0
    %v1244 = vand.u32 %v1046, 4294901760
    %1245 = vmatpush1.msra.mxu0 %v1244
    %1246 = vmatprep.subr.mxu0 0.0
    %1247 = vmatpush1.msra.mxu0 0.0
    %1248 = vmatprep.subr.mxu0 0.0
    %1249 = vmatpush1.msra.mxu0 0.0
    %1250 = vmatprep.subr.mxu0 0.0
    %1251 = vmatpush1.msra.mxu0 0.0
    %1252 = vmatprep.subr.mxu0 0.0
    %1253 = vmatpush1.msra.mxu0 0.0
    %1254 = vmatprep.subr.mxu0 0.0
    %1255 = vmatpush1.msra.mxu0 0.0
    %1256 = vmatprep.subr.mxu0 0.0
    %1257 = vmatpush1.msra.mxu0 0.0
    %1258 = vmatprep.subr.mxu0 0.0
    %1259 = vmatpush1.msra.mxu0 0.0
    %1260 = vmatprep.subr.mxu0 0.0
    %1261 = vmatpush1.msra.mxu0 0.0
    %1262 = vmatprep.subr.mxu0 0.0
    %1263 = vmatpush1.msra.mxu0 0.0
    %1264 = vmatprep.subr.mxu0 0.0
    %1265 = vmatpush1.msra.mxu0 0.0
    %1266 = vmatprep.subr.mxu0 0.0
    %1267 = vmatpush1.msra.mxu0 0.0
    %1268 = vmatprep.subr.mxu0 0.0
    %1269 = vmatpush1.msra.mxu0 0.0
    %1270 = vmatprep.subr.mxu0 0.0
    %1271 = vmatpush1.msra.mxu0 0.0
    %1272 = vmatprep.subr.mxu0 0.0
    %1273 = vmatpush1.msra.mxu0 0.0
    %1274 = vmatprep.subr.mxu0 0.0
    %1275 = vmatpush1.msra.mxu0 0.0
    %1276 = vmatprep.subr.mxu0 0.0
    %1277 = vmatpush1.msra.mxu0 0.0
    %1278 = vmatprep.subr.mxu0 0.0
    %1279 = vmatpush1.msra.mxu0 0.0
    %1280 = vmatprep.subr.mxu0 0.0
    %1281 = vmatpush1.msra.mxu0 0.0
    %1282 = vmatprep.subr.mxu0 0.0
    %1283 = vmatpush1.msra.mxu0 0.0
    %1284 = vmatprep.subr.mxu0 0.0
    %1285 = vmatpush1.msra.mxu0 0.0
    %1286 = vmatprep.subr.mxu0 0.0
    %1287 = vmatpush1.msra.mxu0 0.0
    %1288 = vmatprep.subr.mxu0 0.0
    %1289 = vmatpush1.msra.mxu0 0.0
    %1290 = vmatprep.subr.mxu0 0.0
    %1291 = vmatpush1.msra.mxu0 0.0
    %1292 = vmatprep.subr.mxu0 0.0
    %1293 = vmatpush1.msra.mxu0 0.0
    %1294 = vmatprep.subr.mxu0 0.0
    %1295 = vmatpush1.msra.mxu0 0.0
    %1296 = vmatprep.subr.mxu0 0.0
    %1297 = vmatpush1.msra.mxu0 0.0
    %1298 = vmatprep.subr.mxu0 0.0
    %1299 = vmatpush1.msra.mxu0 0.0
    %1300 = vmatprep.subr.mxu0 0.0
    %1301 = vmatpush1.msra.mxu0 0.0
    %1302 = vmatprep.subr.mxu0 0.0
    %1303 = vmatpush1.msra.mxu0 0.0
    %1304 = vmatprep.subr.mxu0 0.0
    %1305 = vmatpush1.msra.mxu0 0.0
    %1306 = vmatprep.mubr.f32.mxu0 0.0
    %v1307 = vand.u32 %v1049, 4294901760
    %v1308 = vsub.f32 %v1049, %v1307
    %v1309 = vand.u32 %v1308, 4294901760
    %v1310 = vsub.f32 %v1308, %v1309
    %v1311 = vand.u32 %v1310, 4294901760
    %1312 = vmatmul.mubr.f32.gmra.mrb[0].mxu0 %v1311
    %v1313 = vpop.f32.mrb[0].mxu0
    %v1314 = vadd.f32 0.0, %v1313
    %v1315 = vpop.f32.mrb[0].mxu0
    %1316 = vmatprep.mubr.f32.mxu0 0.0
    %v1317 = vand.u32 %v1052, 4294901760
    %v1318 = vsub.f32 %v1052, %v1317
    %v1319 = vand.u32 %v1318, 4294901760
    %v1320 = vsub.f32 %v1318, %v1319
    %v1321 = vand.u32 %v1320, 4294901760
    %1322 = vmatmul.mubr.f32.gmra.mrb[0].mxu0 %v1321
    %v1323 = vpop.f32.mrb[0].mxu0
    %v1324 = vadd.f32 0.0, %v1323
    %v1325 = vpop.f32.mrb[0].mxu0
    %1326 = vmatprep.mubr.f32.mxu0 0.0
    %v1327 = vand.u32 %v1055, 4294901760
    %v1328 = vsub.f32 %v1055, %v1327
    %v1329 = vand.u32 %v1328, 4294901760
    %v1330 = vsub.f32 %v1328, %v1329
    %v1331 = vand.u32 %v1330, 4294901760
    %1332 = vmatmul.mubr.f32.gmra.mrb[0].mxu0 %v1331
    %v1333 = vpop.f32.mrb[0].mxu0
    %v1334 = vadd.f32 0.0, %v1333
    %v1335 = vpop.f32.mrb[0].mxu0
    %1336 = vmatprep.mubr.f32.mxu0 0.0
    %v1337 = vand.u32 %v1058, 4294901760
    %v1338 = vsub.f32 %v1058, %v1337
    %v1339 = vand.u32 %v1338, 4294901760
    %v1340 = vsub.f32 %v1338, %v1339
    %v1341 = vand.u32 %v1340, 4294901760
    %1342 = vmatmul.mubr.f32.gmra.mrb[0].mxu0 %v1341
    %v1343 = vpop.f32.mrb[0].mxu0
    %v1344 = vadd.f32 0.0, %v1343
    %v1345 = vpop.f32.mrb[0].mxu0
    %1346 = vmatprep.mubr.f32.mxu0 0.0
    %v1347 = vand.u32 %v1061, 4294901760
    %v1348 = vsub.f32 %v1061, %v1347
    %v1349 = vand.u32 %v1348, 4294901760
    %v1350 = vsub.f32 %v1348, %v1349
    %v1351 = vand.u32 %v1350, 4294901760
    %1352 = vmatmul.mubr.f32.gmra.mrb[0].mxu0 %v1351
    %v1353 = vpop.f32.mrb[0].mxu0
    %v1354 = vadd.f32 0.0, %v1353
    %v1355 = vpop.f32.mrb[0].mxu0
    %1356 = vmatprep.mubr.f32.mxu0 0.0
    %v1357 = vand.u32 %v1064, 4294901760
    %v1358 = vsub.f32 %v1064, %v1357
    %v1359 = vand.u32 %v1358, 4294901760
    %v1360 = vsub.f32 %v1358, %v1359
    %v1361 = vand.u32 %v1360, 4294901760
    %1362 = vmatmul.mubr.f32.gmra.mrb[0].mxu0 %v1361
    %v1363 = vpop.f32.mrb[0].mxu0
    %v1364 = vadd.f32 0.0, %v1363
    %v1365 = vpop.f32.mrb[0].mxu0
    %1366 = vmatprep.mubr.f32.mxu0 0.0
    %v1367 = vand.u32 %v1067, 4294901760
    %v1368 = vsub.f32 %v1067, %v1367
    %v1369 = vand.u32 %v1368, 4294901760
    %v1370 = vsub.f32 %v1368, %v1369
    %v1371 = vand.u32 %v1370, 4294901760
    %1372 = vmatmul.mubr.f32.gmra.mrb[0].mxu0 %v1371
    %v1373 = vpop.f32.mrb[0].mxu0
    %v1374 = vadd.f32 0.0, %v1373
    %v1375 = vpop.f32.mrb[0].mxu0
    %1376 = vmatprep.mubr.f32.mxu0 0.0
    %v1377 = vand.u32 %v1070, 4294901760
    %v1378 = vsub.f32 %v1070, %v1377
    %v1379 = vand.u32 %v1378, 4294901760
    %v1380 = vsub.f32 %v1378, %v1379
    %v1381 = vand.u32 %v1380, 4294901760
    %1382 = vmatmul.mubr.f32.gmra.mrb[0].mxu0 %v1381
    %v1383 = vpop.f32.mrb[0].mxu0
    %v1384 = vadd.f32 0.0, %v1383
    %v1385 = vpop.f32.mrb[0].mxu0
    %1386 = vmatprep.mubr.f32.mxu0 0.0
    %v1387 = vand.u32 %v1073, 4294901760
    %v1388 = vsub.f32 %v1073, %v1387
    %v1389 = vand.u32 %v1388, 4294901760
    %v1390 = vsub.f32 %v1388, %v1389
    %v1391 = vand.u32 %v1390, 4294901760
    %1392 = vmatmul.mubr.f32.gmra.mrb[0].mxu0 %v1391
    %v1393 = vpop.f32.mrb[0].mxu0
    %v1394 = vadd.f32 0.0, %v1393
    %v1395 = vpop.f32.mrb[0].mxu0
    %1396 = vmatprep.mubr.f32.mxu0 0.0
    %v1397 = vand.u32 %v1076, 4294901760
    %v1398 = vsub.f32 %v1076, %v1397
    %v1399 = vand.u32 %v1398, 4294901760
    %v1400 = vsub.f32 %v1398, %v1399
    %v1401 = vand.u32 %v1400, 4294901760
    %1402 = vmatmul.mubr.f32.gmra.mrb[0].mxu0 %v1401
    %v1403 = vpop.f32.mrb[0].mxu0
    %v1404 = vadd.f32 0.0, %v1403
    %v1405 = vpop.f32.mrb[0].mxu0
    %1406 = vmatprep.mubr.f32.mxu0 0.0
    %v1407 = vand.u32 %v1079, 4294901760
    %v1408 = vsub.f32 %v1079, %v1407
    %v1409 = vand.u32 %v1408, 4294901760
    %v1410 = vsub.f32 %v1408, %v1409
    %v1411 = vand.u32 %v1410, 4294901760
    %1412 = vmatmul.mubr.f32.gmra.mrb[0].mxu0 %v1411
    %v1413 = vpop.f32.mrb[0].mxu0
    %v1414 = vadd.f32 0.0, %v1413
    %v1415 = vpop.f32.mrb[0].mxu0
    %1416 = vmatprep.mubr.f32.mxu0 0.0
    %v1417 = vand.u32 %v1082, 4294901760
    %v1418 = vsub.f32 %v1082, %v1417
    %v1419 = vand.u32 %v1418, 4294901760
    %v1420 = vsub.f32 %v1418, %v1419
    %v1421 = vand.u32 %v1420, 4294901760
    %1422 = vmatmul.mubr.f32.gmra.mrb[0].mxu0 %v1421
    %v1423 = vpop.f32.mrb[0].mxu0
    %v1424 = vadd.f32 0.0, %v1423
    %v1425 = vpop.f32.mrb[0].mxu0
    %1426 = vmatprep.mubr.f32.mxu0 0.0
    %v1427 = vand.u32 %v1085, 4294901760
    %v1428 = vsub.f32 %v1085, %v1427
    %v1429 = vand.u32 %v1428, 4294901760
    %v1430 = vsub.f32 %v1428, %v1429
    %v1431 = vand.u32 %v1430, 4294901760
    %1432 = vmatmul.mubr.f32.gmra.mrb[0].mxu0 %v1431
    %v1433 = vpop.f32.mrb[0].mxu0
    %v1434 = vadd.f32 0.0, %v1433
    %v1435 = vpop.f32.mrb[0].mxu0
    %1436 = vmatprep.mubr.f32.mxu0 0.0
    %v1437 = vand.u32 %v1088, 4294901760
    %v1438 = vsub.f32 %v1088, %v1437
    %v1439 = vand.u32 %v1438, 4294901760
    %v1440 = vsub.f32 %v1438, %v1439
    %v1441 = vand.u32 %v1440, 4294901760
    %1442 = vmatmul.mubr.f32.gmra.mrb[0].mxu0 %v1441
    %v1443 = vpop.f32.mrb[0].mxu0
    %v1444 = vadd.f32 0.0, %v1443
    %v1445 = vpop.f32.mrb[0].mxu0
    %1446 = vmatprep.mubr.f32.mxu0 0.0
    %v1447 = vand.u32 %v1091, 4294901760
    %v1448 = vsub.f32 %v1091, %v1447
    %v1449 = vand.u32 %v1448, 4294901760
    %v1450 = vsub.f32 %v1448, %v1449
    %v1451 = vand.u32 %v1450, 4294901760
    %1452 = vmatmul.mubr.f32.gmra.mrb[0].mxu0 %v1451
    %v1453 = vpop.f32.mrb[0].mxu0
    %v1454 = vadd.f32 0.0, %v1453
    %v1455 = vpop.f32.mrb[0].mxu0
    %1456 = vmatprep.mubr.f32.mxu0 0.0
    %v1457 = vand.u32 %v1094, 4294901760
    %v1458 = vsub.f32 %v1094, %v1457
    %v1459 = vand.u32 %v1458, 4294901760
    %v1460 = vsub.f32 %v1458, %v1459
    %v1461 = vand.u32 %v1460, 4294901760
    %1462 = vmatmul.mubr.f32.gmra.mrb[0].mxu0 %v1461
    %v1463 = vpop.f32.mrb[0].mxu0
    %v1464 = vadd.f32 0.0, %v1463
    %v1465 = vpop.f32.mrb[0].mxu0
    %1466 = vmatprep.mubr.f32.mxu0 0.0
    %v1467 = vand.u32 %v1097, 4294901760
    %v1468 = vsub.f32 %v1097, %v1467
    %v1469 = vand.u32 %v1468, 4294901760
    %v1470 = vsub.f32 %v1468, %v1469
    %v1471 = vand.u32 %v1470, 4294901760
    %1472 = vmatmul.mubr.f32.gmra.mrb[0].mxu0 %v1471
    %v1473 = vpop.f32.mrb[0].mxu0
    %v1474 = vadd.f32 0.0, %v1473
    %v1475 = vpop.f32.mrb[0].mxu0
    %1476 = vmatprep.mubr.f32.mxu0 0.0
    %v1477 = vand.u32 %v1100, 4294901760
    %v1478 = vsub.f32 %v1100, %v1477
    %v1479 = vand.u32 %v1478, 4294901760
    %v1480 = vsub.f32 %v1478, %v1479
    %v1481 = vand.u32 %v1480, 4294901760
    %1482 = vmatmul.mubr.f32.gmra.mrb[0].mxu0 %v1481
    %v1483 = vpop.f32.mrb[0].mxu0
    %v1484 = vadd.f32 0.0, %v1483
    %v1485 = vpop.f32.mrb[0].mxu0
    %1486 = vmatprep.mubr.f32.mxu0 0.0
    %v1487 = vand.u32 %v1103, 4294901760
    %v1488 = vsub.f32 %v1103, %v1487
    %v1489 = vand.u32 %v1488, 4294901760
    %v1490 = vsub.f32 %v1488, %v1489
    %v1491 = vand.u32 %v1490, 4294901760
    %1492 = vmatmul.mubr.f32.gmra.mrb[0].mxu0 %v1491
    %v1493 = vpop.f32.mrb[0].mxu0
    %v1494 = vadd.f32 0.0, %v1493
    %v1495 = vpop.f32.mrb[0].mxu0
    %1496 = vmatprep.mubr.f32.mxu0 0.0
    %v1497 = vand.u32 %v1106, 4294901760
    %v1498 = vsub.f32 %v1106, %v1497
    %v1499 = vand.u32 %v1498, 4294901760
    %v1500 = vsub.f32 %v1498, %v1499
    %v1501 = vand.u32 %v1500, 4294901760
    %1502 = vmatmul.mubr.f32.gmra.mrb[0].mxu0 %v1501
    %v1503 = vpop.f32.mrb[0].mxu0
    %v1504 = vadd.f32 0.0, %v1503
    %v1505 = vpop.f32.mrb[0].mxu0
    %1506 = vmatprep.mubr.f32.mxu0 0.0
    %v1507 = vand.u32 %v1109, 4294901760
    %v1508 = vsub.f32 %v1109, %v1507
    %v1509 = vand.u32 %v1508, 4294901760
    %v1510 = vsub.f32 %v1508, %v1509
    %v1511 = vand.u32 %v1510, 4294901760
    %1512 = vmatmul.mubr.f32.gmra.mrb[0].mxu0 %v1511
    %v1513 = vpop.f32.mrb[0].mxu0
    %v1514 = vadd.f32 0.0, %v1513
    %v1515 = vpop.f32.mrb[0].mxu0
    %1516 = vmatprep.mubr.f32.mxu0 0.0
    %v1517 = vand.u32 %v1112, 4294901760
    %v1518 = vsub.f32 %v1112, %v1517
    %v1519 = vand.u32 %v1518, 4294901760
    %v1520 = vsub.f32 %v1518, %v1519
    %v1521 = vand.u32 %v1520, 4294901760
    %1522 = vmatmul.mubr.f32.gmra.mrb[0].mxu0 %v1521
    %v1523 = vpop.f32.mrb[0].mxu0
    %v1524 = vadd.f32 0.0, %v1523
    %v1525 = vpop.f32.mrb[0].mxu0
    %1526 = vmatprep.mubr.f32.mxu0 0.0
    %v1527 = vand.u32 %v1115, 4294901760
    %v1528 = vsub.f32 %v1115, %v1527
    %v1529 = vand.u32 %v1528, 4294901760
    %v1530 = vsub.f32 %v1528, %v1529
    %v1531 = vand.u32 %v1530, 4294901760
    %1532 = vmatmul.mubr.f32.gmra.mrb[0].mxu0 %v1531
    %v1533 = vpop.f32.mrb[0].mxu0
    %v1534 = vadd.f32 0.0, %v1533
    %v1535 = vpop.f32.mrb[0].mxu0
    %1536 = vmatprep.mubr.f32.mxu0 0.0
    %v1537 = vand.u32 %v1118, 4294901760
    %v1538 = vsub.f32 %v1118, %v1537
    %v1539 = vand.u32 %v1538, 4294901760
    %v1540 = vsub.f32 %v1538, %v1539
    %v1541 = vand.u32 %v1540, 4294901760
    %1542 = vmatmul.mubr.f32.gmra.mrb[0].mxu0 %v1541
    %v1543 = vpop.f32.mrb[0].mxu0
    %v1544 = vadd.f32 0.0, %v1543
    %v1545 = vpop.f32.mrb[0].mxu0
    %1546 = vmatprep.mubr.f32.mxu0 0.0
    %v1547 = vand.u32 %v1121, 4294901760
    %v1548 = vsub.f32 %v1121, %v1547
    %v1549 = vand.u32 %v1548, 4294901760
    %v1550 = vsub.f32 %v1548, %v1549
    %v1551 = vand.u32 %v1550, 4294901760
    %1552 = vmatmul.mubr.f32.gmra.mrb[0].mxu0 %v1551
    %v1553 = vpop.f32.mrb[0].mxu0
    %v1554 = vadd.f32 0.0, %v1553
    %v1555 = vpop.f32.mrb[0].mxu0
    %1556 = vmatprep.mubr.f32.mxu0 0.0
    %v1557 = vand.u32 %v1124, 4294901760
    %v1558 = vsub.f32 %v1124, %v1557
    %v1559 = vand.u32 %v1558, 4294901760
    %v1560 = vsub.f32 %v1558, %v1559
    %v1561 = vand.u32 %v1560, 4294901760
    %1562 = vmatmul.mubr.f32.gmra.mrb[0].mxu0 %v1561
    %v1563 = vpop.f32.mrb[0].mxu0
    %v1564 = vadd.f32 0.0, %v1563
    %v1565 = vpop.f32.mrb[0].mxu0
    %1566 = vmatprep.mubr.f32.mxu0 0.0
    %v1567 = vand.u32 %v1127, 4294901760
    %v1568 = vsub.f32 %v1127, %v1567
    %v1569 = vand.u32 %v1568, 4294901760
    %v1570 = vsub.f32 %v1568, %v1569
    %v1571 = vand.u32 %v1570, 4294901760
    %1572 = vmatmul.mubr.f32.gmra.mrb[0].mxu0 %v1571
    %v1573 = vpop.f32.mrb[0].mxu0
    %v1574 = vadd.f32 0.0, %v1573
    %v1575 = vpop.f32.mrb[0].mxu0
    %1576 = vmatprep.mubr.f32.mxu0 0.0
    %v1577 = vand.u32 %v1130, 4294901760
    %v1578 = vsub.f32 %v1130, %v1577
    %v1579 = vand.u32 %v1578, 4294901760
    %v1580 = vsub.f32 %v1578, %v1579
    %v1581 = vand.u32 %v1580, 4294901760
    %1582 = vmatmul.mubr.f32.gmra.mrb[0].mxu0 %v1581
    %v1583 = vpop.f32.mrb[0].mxu0
    %v1584 = vadd.f32 0.0, %v1583
    %v1585 = vpop.f32.mrb[0].mxu0
    %1586 = vmatprep.mubr.f32.mxu0 0.0
    %v1587 = vand.u32 %v1133, 4294901760
    %v1588 = vsub.f32 %v1133, %v1587
    %v1589 = vand.u32 %v1588, 4294901760
    %v1590 = vsub.f32 %v1588, %v1589
    %v1591 = vand.u32 %v1590, 4294901760
    %1592 = vmatmul.mubr.f32.gmra.mrb[0].mxu0 %v1591
    %v1593 = vpop.f32.mrb[0].mxu0
    %v1594 = vadd.f32 0.0, %v1593
    %v1595 = vpop.f32.mrb[0].mxu0
    %1596 = vmatprep.mubr.f32.mxu0 0.0
    %v1597 = vand.u32 %v1136, 4294901760
    %v1598 = vsub.f32 %v1136, %v1597
    %v1599 = vand.u32 %v1598, 4294901760
    %v1600 = vsub.f32 %v1598, %v1599
    %v1601 = vand.u32 %v1600, 4294901760
    %1602 = vmatmul.mubr.f32.gmra.mrb[0].mxu0 %v1601
    %v1603 = vpop.f32.mrb[0].mxu0
    %v1604 = vadd.f32 0.0, %v1603
    %v1605 = vpop.f32.mrb[0].mxu0
    %1606 = vmatprep.mubr.f32.mxu0 0.0
    %v1607 = vand.u32 %v1139, 4294901760
    %v1608 = vsub.f32 %v1139, %v1607
    %v1609 = vand.u32 %v1608, 4294901760
    %v1610 = vsub.f32 %v1608, %v1609
    %v1611 = vand.u32 %v1610, 4294901760
    %1612 = vmatmul.mubr.f32.gmra.mrb[0].mxu0 %v1611
    %v1613 = vpop.f32.mrb[0].mxu0
    %v1614 = vadd.f32 0.0, %v1613
    %v1615 = vpop.f32.mrb[0].mxu0
    %1616 = vmatprep.mubr.f32.mxu0 0.0
    %v1617 = vand.u32 %v1142, 4294901760
    %v1618 = vsub.f32 %v1142, %v1617
    %v1619 = vand.u32 %v1618, 4294901760
    %v1620 = vsub.f32 %v1618, %v1619
    %v1621 = vand.u32 %v1620, 4294901760
    %1622 = vmatmul.mubr.f32.gmra.mrb[0].mxu0 %v1621
    %v1623 = vpop.f32.mrb[0].mxu0
    %v1624 = vadd.f32 0.0, %v1623
    %v1625 = vpop.f32.mrb[0].mxu0
    %1626 = vmatprep.mubr.f32.mxu0 0.0
    %v1627 = vand.u32 %v1145, 4294901760
    %v1628 = vsub.f32 %v1145, %v1627
    %v1629 = vand.u32 %v1628, 4294901760
    %v1630 = vsub.f32 %v1628, %v1629
    %v1631 = vand.u32 %v1630, 4294901760
    %1632 = vmatmul.mubr.f32.gmra.mrb[0].mxu0 %v1631
    %v1633 = vpop.f32.mrb[0].mxu0
    %v1634 = vadd.f32 0.0, %v1633
    %v1635 = vpop.f32.mrb[0].mxu0
    %1636 = vmatprep.mubr.f32.mxu0 0.0
    %v1637 = vand.u32 %v1148, 4294901760
    %v1638 = vsub.f32 %v1148, %v1637
    %v1639 = vand.u32 %v1638, 4294901760
    %v1640 = vsub.f32 %v1638, %v1639
    %v1641 = vand.u32 %v1640, 4294901760
    %1642 = vmatmul.mubr.f32.gmra.mrb[0].mxu0 %v1641
    %v1643 = vpop.f32.mrb[0].mxu0
    %v1644 = vadd.f32 0.0, %v1643
    %v1645 = vpop.f32.mrb[0].mxu0
    %1646 = vmatprep.mubr.f32.mxu0 0.0
    %v1647 = vand.u32 %v1151, 4294901760
    %v1648 = vsub.f32 %v1151, %v1647
    %v1649 = vand.u32 %v1648, 4294901760
    %v1650 = vsub.f32 %v1648, %v1649
    %v1651 = vand.u32 %v1650, 4294901760
    %1652 = vmatmul.mubr.f32.gmra.mrb[0].mxu0 %v1651
    %v1653 = vpop.f32.mrb[0].mxu0
    %v1654 = vadd.f32 0.0, %v1653
    %v1655 = vpop.f32.mrb[0].mxu0
    %1656 = vmatprep.mubr.f32.mxu0 0.0
    %v1657 = vand.u32 %v1154, 4294901760
    %v1658 = vsub.f32 %v1154, %v1657
    %v1659 = vand.u32 %v1658, 4294901760
    %v1660 = vsub.f32 %v1658, %v1659
    %v1661 = vand.u32 %v1660, 4294901760
    %1662 = vmatmul.mubr.f32.gmra.mrb[0].mxu0 %v1661
    %v1663 = vpop.f32.mrb[0].mxu0
    %v1664 = vadd.f32 0.0, %v1663
    %v1665 = vpop.f32.mrb[0].mxu0
    %1666 = vmatprep.mubr.f32.mxu0 0.0
    %v1667 = vand.u32 %v1157, 4294901760
    %v1668 = vsub.f32 %v1157, %v1667
    %v1669 = vand.u32 %v1668, 4294901760
    %v1670 = vsub.f32 %v1668, %v1669
    %v1671 = vand.u32 %v1670, 4294901760
    %1672 = vmatmul.mubr.f32.gmra.mrb[0].mxu0 %v1671
    %v1673 = vpop.f32.mrb[0].mxu0
    %v1674 = vadd.f32 0.0, %v1673
    %v1675 = vpop.f32.mrb[0].mxu0
    %1676 = vmatprep.mubr.f32.mxu0 0.0
    %v1677 = vand.u32 %v1160, 4294901760
    %v1678 = vsub.f32 %v1160, %v1677
    %v1679 = vand.u32 %v1678, 4294901760
    %v1680 = vsub.f32 %v1678, %v1679
    %v1681 = vand.u32 %v1680, 4294901760
    %1682 = vmatmul.mubr.f32.gmra.mrb[0].mxu0 %v1681
    %v1683 = vpop.f32.mrb[0].mxu0
    %v1684 = vadd.f32 0.0, %v1683
    %v1685 = vpop.f32.mrb[0].mxu0
    %1686 = vmatprep.mubr.f32.mxu0 0.0
    %v1687 = vand.u32 %v1163, 4294901760
    %v1688 = vsub.f32 %v1163, %v1687
    %v1689 = vand.u32 %v1688, 4294901760
    %v1690 = vsub.f32 %v1688, %v1689
    %v1691 = vand.u32 %v1690, 4294901760
    %1692 = vmatmul.mubr.f32.gmra.mrb[0].mxu0 %v1691
    %v1693 = vpop.f32.mrb[0].mxu0
    %v1694 = vadd.f32 0.0, %v1693
    %v1695 = vpop.f32.mrb[0].mxu0
    %1696 = vmatprep.mubr.f32.mxu0 0.0
    %v1697 = vand.u32 %v1166, 4294901760
    %v1698 = vsub.f32 %v1166, %v1697
    %v1699 = vand.u32 %v1698, 4294901760
    %v1700 = vsub.f32 %v1698, %v1699
    %v1701 = vand.u32 %v1700, 4294901760
    %1702 = vmatmul.mubr.f32.gmra.mrb[0].mxu0 %v1701
    %v1703 = vpop.f32.mrb[0].mxu0
    %v1704 = vadd.f32 0.0, %v1703
    %v1705 = vpop.f32.mrb[0].mxu0
    %1706 = vmatprep.mubr.f32.mxu0 0.0
    %v1707 = vand.u32 %v1169, 4294901760
    %v1708 = vsub.f32 %v1169, %v1707
    %v1709 = vand.u32 %v1708, 4294901760
    %v1710 = vsub.f32 %v1708, %v1709
    %v1711 = vand.u32 %v1710, 4294901760
    %1712 = vmatmul.mubr.f32.gmra.mrb[0].mxu0 %v1711
    %v1713 = vpop.f32.mrb[0].mxu0
    %v1714 = vadd.f32 0.0, %v1713
    %v1715 = vpop.f32.mrb[0].mxu0
    %1716 = vmatprep.mubr.f32.mxu0 0.0
    %v1717 = vand.u32 %v1172, 4294901760
    %v1718 = vsub.f32 %v1172, %v1717
    %v1719 = vand.u32 %v1718, 4294901760
    %v1720 = vsub.f32 %v1718, %v1719
    %v1721 = vand.u32 %v1720, 4294901760
    %1722 = vmatmul.mubr.f32.gmra.mrb[0].mxu0 %v1721
    %v1723 = vpop.f32.mrb[0].mxu0
    %v1724 = vadd.f32 0.0, %v1723
    %v1725 = vpop.f32.mrb[0].mxu0
    %1726 = vmatprep.mubr.f32.mxu0 0.0
    %v1727 = vand.u32 %v1175, 4294901760
    %v1728 = vsub.f32 %v1175, %v1727
    %v1729 = vand.u32 %v1728, 4294901760
    %v1730 = vsub.f32 %v1728, %v1729
    %v1731 = vand.u32 %v1730, 4294901760
    %1732 = vmatmul.mubr.f32.gmra.mrb[0].mxu0 %v1731
    %v1733 = vpop.f32.mrb[0].mxu0
    %v1734 = vadd.f32 0.0, %v1733
    %v1735 = vpop.f32.mrb[0].mxu0
    %1736 = vmatprep.mubr.f32.mxu0 0.0
    %v1737 = vand.u32 %v1178, 4294901760
    %v1738 = vsub.f32 %v1178, %v1737
    %v1739 = vand.u32 %v1738, 4294901760
    %v1740 = vsub.f32 %v1738, %v1739
    %v1741 = vand.u32 %v1740, 4294901760
    %1742 = vmatmul.mubr.f32.gmra.mrb[0].mxu0 %v1741
    %v1743 = vpop.f32.mrb[0].mxu0
    %v1744 = vadd.f32 0.0, %v1743
    %v1745 = vpop.f32.mrb[0].mxu0
    %1746 = vmatprep.mubr.f32.mxu0 0.0
    %v1747 = vand.u32 %v1181, 4294901760
    %v1748 = vsub.f32 %v1181, %v1747
    %v1749 = vand.u32 %v1748, 4294901760
    %v1750 = vsub.f32 %v1748, %v1749
    %v1751 = vand.u32 %v1750, 4294901760
    %1752 = vmatmul.mubr.f32.gmra.mrb[0].mxu0 %v1751
    %v1753 = vpop.f32.mrb[0].mxu0
    %v1754 = vadd.f32 0.0, %v1753
    %v1755 = vpop.f32.mrb[0].mxu0
    %1756 = vmatprep.mubr.f32.mxu0 0.0
    %v1757 = vand.u32 %v1184, 4294901760
    %v1758 = vsub.f32 %v1184, %v1757
    %v1759 = vand.u32 %v1758, 4294901760
    %v1760 = vsub.f32 %v1758, %v1759
    %v1761 = vand.u32 %v1760, 4294901760
    %1762 = vmatmul.mubr.f32.gmra.mrb[0].mxu0 %v1761
    %v1763 = vpop.f32.mrb[0].mxu0
    %v1764 = vadd.f32 0.0, %v1763
    %v1765 = vpop.f32.mrb[0].mxu0
    %1766 = vmatprep.mubr.f32.mxu0 0.0
    %v1767 = vand.u32 %v1187, 4294901760
    %v1768 = vsub.f32 %v1187, %v1767
    %v1769 = vand.u32 %v1768, 4294901760
    %v1770 = vsub.f32 %v1768, %v1769
    %v1771 = vand.u32 %v1770, 4294901760
    %1772 = vmatmul.mubr.f32.gmra.mrb[0].mxu0 %v1771
    %v1773 = vpop.f32.mrb[0].mxu0
    %v1774 = vadd.f32 0.0, %v1773
    %v1775 = vpop.f32.mrb[0].mxu0
    %1776 = vmatprep.mubr.f32.mxu0 0.0
    %v1777 = vand.u32 %v1190, 4294901760
    %v1778 = vsub.f32 %v1190, %v1777
    %v1779 = vand.u32 %v1778, 4294901760
    %v1780 = vsub.f32 %v1778, %v1779
    %v1781 = vand.u32 %v1780, 4294901760
    %1782 = vmatmul.mubr.f32.gmra.mrb[0].mxu0 %v1781
    %v1783 = vpop.f32.mrb[0].mxu0
    %v1784 = vadd.f32 0.0, %v1783
    %v1785 = vpop.f32.mrb[0].mxu0
    %1786 = vmatprep.mubr.f32.mxu0 0.0
    %v1787 = vand.u32 %v1193, 4294901760
    %v1788 = vsub.f32 %v1193, %v1787
    %v1789 = vand.u32 %v1788, 4294901760
    %v1790 = vsub.f32 %v1788, %v1789
    %v1791 = vand.u32 %v1790, 4294901760
    %1792 = vmatmul.mubr.f32.gmra.mrb[0].mxu0 %v1791
    %v1793 = vpop.f32.mrb[0].mxu0
    %v1794 = vadd.f32 0.0, %v1793
    %v1795 = vpop.f32.mrb[0].mxu0
    %1796 = vmatprep.mubr.f32.mxu0 0.0
    %v1797 = vand.u32 %v1196, 4294901760
    %v1798 = vsub.f32 %v1196, %v1797
    %v1799 = vand.u32 %v1798, 4294901760
    %v1800 = vsub.f32 %v1798, %v1799
    %v1801 = vand.u32 %v1800, 4294901760
    %1802 = vmatmul.mubr.f32.gmra.mrb[0].mxu0 %v1801
    %v1803 = vpop.f32.mrb[0].mxu0
    %v1804 = vadd.f32 0.0, %v1803
    %v1805 = vpop.f32.mrb[0].mxu0
    %1806 = vmatprep.mubr.f32.mxu0 0.0
    %v1807 = vand.u32 %v1199, 4294901760
    %v1808 = vsub.f32 %v1199, %v1807
    %v1809 = vand.u32 %v1808, 4294901760
    %v1810 = vsub.f32 %v1808, %v1809
    %v1811 = vand.u32 %v1810, 4294901760
    %1812 = vmatmul.mubr.f32.gmra.mrb[0].mxu0 %v1811
    %v1813 = vpop.f32.mrb[0].mxu0
    %v1814 = vadd.f32 0.0, %v1813
    %v1815 = vpop.f32.mrb[0].mxu0
    %1816 = vmatprep.mubr.f32.mxu0 0.0
    %v1817 = vand.u32 %v1202, 4294901760
    %v1818 = vsub.f32 %v1202, %v1817
    %v1819 = vand.u32 %v1818, 4294901760
    %v1820 = vsub.f32 %v1818, %v1819
    %v1821 = vand.u32 %v1820, 4294901760
    %1822 = vmatmul.mubr.f32.gmra.mrb[0].mxu0 %v1821
    %v1823 = vpop.f32.mrb[0].mxu0
    %v1824 = vadd.f32 0.0, %v1823
    %v1825 = vpop.f32.mrb[0].mxu0
    %1826 = vmatprep.mubr.f32.mxu0 0.0
    %v1827 = vand.u32 %v1205, 4294901760
    %v1828 = vsub.f32 %v1205, %v1827
    %v1829 = vand.u32 %v1828, 4294901760
    %v1830 = vsub.f32 %v1828, %v1829
    %v1831 = vand.u32 %v1830, 4294901760
    %1832 = vmatmul.mubr.f32.gmra.mrb[0].mxu0 %v1831
    %v1833 = vpop.f32.mrb[0].mxu0
    %v1834 = vadd.f32 0.0, %v1833
    %v1835 = vpop.f32.mrb[0].mxu0
    %1836 = vmatprep.mubr.f32.mxu0 0.0
    %v1837 = vand.u32 %v1208, 4294901760
    %v1838 = vsub.f32 %v1208, %v1837
    %v1839 = vand.u32 %v1838, 4294901760
    %v1840 = vsub.f32 %v1838, %v1839
    %v1841 = vand.u32 %v1840, 4294901760
    %1842 = vmatmul.mubr.f32.gmra.mrb[0].mxu0 %v1841
    %v1843 = vpop.f32.mrb[0].mxu0
    %v1844 = vadd.f32 0.0, %v1843
    %v1845 = vpop.f32.mrb[0].mxu0
    %1846 = vmatprep.mubr.f32.mxu0 0.0
    %v1847 = vand.u32 %v1211, 4294901760
    %v1848 = vsub.f32 %v1211, %v1847
    %v1849 = vand.u32 %v1848, 4294901760
    %v1850 = vsub.f32 %v1848, %v1849
    %v1851 = vand.u32 %v1850, 4294901760
    %1852 = vmatmul.mubr.f32.gmra.mrb[0].mxu0 %v1851
    %v1853 = vpop.f32.mrb[0].mxu0
    %v1854 = vadd.f32 0.0, %v1853
    %v1855 = vpop.f32.mrb[0].mxu0
    %1856 = vmatprep.mubr.f32.mxu0 0.0
    %v1857 = vand.u32 %v1214, 4294901760
    %v1858 = vsub.f32 %v1214, %v1857
    %v1859 = vand.u32 %v1858, 4294901760
    %v1860 = vsub.f32 %v1858, %v1859
    %v1861 = vand.u32 %v1860, 4294901760
    %1862 = vmatmul.mubr.f32.gmra.mrb[0].mxu0 %v1861
    %v1863 = vpop.f32.mrb[0].mxu0
    %v1864 = vadd.f32 0.0, %v1863
    %v1865 = vpop.f32.mrb[0].mxu0
    %1866 = vmatprep.mubr.f32.mxu0 0.0
    %v1867 = vand.u32 %v1217, 4294901760
    %v1868 = vsub.f32 %v1217, %v1867
    %v1869 = vand.u32 %v1868, 4294901760
    %v1870 = vsub.f32 %v1868, %v1869
    %v1871 = vand.u32 %v1870, 4294901760
    %1872 = vmatmul.mubr.f32.gmra.mrb[0].mxu0 %v1871
    %v1873 = vpop.f32.mrb[0].mxu0
    %v1874 = vadd.f32 0.0, %v1873
    %v1875 = vpop.f32.mrb[0].mxu0
    %1876 = vmatprep.mubr.f32.mxu0 0.0
    %v1877 = vand.u32 %v1220, 4294901760
    %v1878 = vsub.f32 %v1220, %v1877
    %v1879 = vand.u32 %v1878, 4294901760
    %v1880 = vsub.f32 %v1878, %v1879
    %v1881 = vand.u32 %v1880, 4294901760
    %1882 = vmatmul.mubr.f32.gmra.mrb[0].mxu0 %v1881
    %v1883 = vpop.f32.mrb[0].mxu0
    %v1884 = vadd.f32 0.0, %v1883
    %v1885 = vpop.f32.mrb[0].mxu0
    %1886 = vmatprep.mubr.f32.mxu0 0.0
    %v1887 = vand.u32 %v1223, 4294901760
    %v1888 = vsub.f32 %v1223, %v1887
    %v1889 = vand.u32 %v1888, 4294901760
    %v1890 = vsub.f32 %v1888, %v1889
    %v1891 = vand.u32 %v1890, 4294901760
    %1892 = vmatmul.mubr.f32.gmra.mrb[0].mxu0 %v1891
    %v1893 = vpop.f32.mrb[0].mxu0
    %v1894 = vadd.f32 0.0, %v1893
    %v1895 = vpop.f32.mrb[0].mxu0
    %1896 = vmatprep.mubr.f32.mxu0 0.0
    %v1897 = vand.u32 %v1226, 4294901760
    %v1898 = vsub.f32 %v1226, %v1897
    %v1899 = vand.u32 %v1898, 4294901760
    %v1900 = vsub.f32 %v1898, %v1899
    %v1901 = vand.u32 %v1900, 4294901760
    %1902 = vmatmul.mubr.f32.gmra.mrb[0].mxu0 %v1901
    %v1903 = vpop.f32.mrb[0].mxu0
    %v1904 = vadd.f32 0.0, %v1903
    %v1905 = vpop.f32.mrb[0].mxu0
    %1906 = vmatprep.mubr.f32.mxu0 0.0
    %v1907 = vand.u32 %v1229, 4294901760
    %v1908 = vsub.f32 %v1229, %v1907
    %v1909 = vand.u32 %v1908, 4294901760
    %v1910 = vsub.f32 %v1908, %v1909
    %v1911 = vand.u32 %v1910, 4294901760
    %1912 = vmatmul.mubr.f32.gmra.mrb[0].mxu0 %v1911
    %v1913 = vpop.f32.mrb[0].mxu0
    %v1914 = vadd.f32 0.0, %v1913
    %v1915 = vpop.f32.mrb[0].mxu0
    %1916 = vmatprep.mubr.f32.mxu0 0.0
    %v1917 = vand.u32 %v1232, 4294901760
    %v1918 = vsub.f32 %v1232, %v1917
    %v1919 = vand.u32 %v1918, 4294901760
    %v1920 = vsub.f32 %v1918, %v1919
    %v1921 = vand.u32 %v1920, 4294901760
    %1922 = vmatmul.mubr.f32.gmra.mrb[0].mxu0 %v1921
    %v1923 = vpop.f32.mrb[0].mxu0
    %v1924 = vadd.f32 0.0, %v1923
    %v1925 = vpop.f32.mrb[0].mxu0
    %1926 = vmatprep.mubr.f32.mxu0 0.0
    %v1927 = vand.u32 %v1235, 4294901760
    %v1928 = vsub.f32 %v1235, %v1927
    %v1929 = vand.u32 %v1928, 4294901760
    %v1930 = vsub.f32 %v1928, %v1929
    %v1931 = vand.u32 %v1930, 4294901760
    %1932 = vmatmul.mubr.f32.gmra.mrb[0].mxu0 %v1931
    %v1933 = vpop.f32.mrb[0].mxu0
    %v1934 = vadd.f32 0.0, %v1933
    %v1935 = vpop.f32.mrb[0].mxu0
    %1936 = vmatprep.mubr.f32.mxu0 0.0
    %v1937 = vand.u32 %v1238, 4294901760
    %v1938 = vsub.f32 %v1238, %v1937
    %v1939 = vand.u32 %v1938, 4294901760
    %v1940 = vsub.f32 %v1938, %v1939
    %v1941 = vand.u32 %v1940, 4294901760
    %1942 = vmatmul.mubr.f32.gmra.mrb[0].mxu0 %v1941
    %v1943 = vpop.f32.mrb[0].mxu0
    %v1944 = vadd.f32 0.0, %v1943
    %v1945 = vpop.f32.mrb[0].mxu0
    %1946 = vdwg.mxu0
    %1947 = vmatprep.subr.mxu0 0.0
    %v1948 = vand.u32 %v1045, 4294901760
    %v1949 = vsub.f32 %v1045, %v1948
    %v1950 = vand.u32 %v1949, 4294901760
    %v1951 = vsub.f32 %v1949, %v1950
    %v1952 = vand.u32 %v1951, 4294901760
    %1953 = vmatpush1.msra.mxu0 %v1952
    %1954 = vmatprep.subr.mxu0 0.0
    %v1955 = vand.u32 %v1046, 4294901760
    %v1956 = vsub.f32 %v1046, %v1955
    %v1957 = vand.u32 %v1956, 4294901760
    %v1958 = vsub.f32 %v1956, %v1957
    %v1959 = vand.u32 %v1958, 4294901760
    %1960 = vmatpush1.msra.mxu0 %v1959
    %1961 = vmatprep.subr.mxu0 0.0
    %1962 = vmatpush1.msra.mxu0 0.0
    %1963 = vmatprep.subr.mxu0 0.0
    %1964 = vmatpush1.msra.mxu0 0.0
    %1965 = vmatprep.subr.mxu0 0.0
    %1966 = vmatpush1.msra.mxu0 0.0
    %1967 = vmatprep.subr.mxu0 0.0
    %1968 = vmatpush1.msra.mxu0 0.0
    %1969 = vmatprep.subr.mxu0 0.0
    %1970 = vmatpush1.msra.mxu0 0.0
    %1971 = vmatprep.subr.mxu0 0.0
    %1972 = vmatpush1.msra.mxu0 0.0
    %1973 = vmatprep.subr.mxu0 0.0
    %1974 = vmatpush1.msra.mxu0 0.0
    %1975 = vmatprep.subr.mxu0 0.0
    %1976 = vmatpush1.msra.mxu0 0.0
    %1977 = vmatprep.subr.mxu0 0.0
    %1978 = vmatpush1.msra.mxu0 0.0
    %1979 = vmatprep.subr.mxu0 0.0
    %1980 = vmatpush1.msra.mxu0 0.0
    %1981 = vmatprep.subr.mxu0 0.0
    %1982 = vmatpush1.msra.mxu0 0.0
    %1983 = vmatprep.subr.mxu0 0.0
    %1984 = vmatpush1.msra.mxu0 0.0
    %1985 = vmatprep.subr.mxu0 0.0
    %1986 = vmatpush1.msra.mxu0 0.0
    %1987 = vmatprep.subr.mxu0 0.0
    %1988 = vmatpush1.msra.mxu0 0.0
    %1989 = vmatprep.subr.mxu0 0.0
    %1990 = vmatpush1.msra.mxu0 0.0
    %1991 = vmatprep.subr.mxu0 0.0
    %1992 = vmatpush1.msra.mxu0 0.0
    %1993 = vmatprep.subr.mxu0 0.0
    %1994 = vmatpush1.msra.mxu0 0.0
    %1995 = vmatprep.subr.mxu0 0.0
    %1996 = vmatpush1.msra.mxu0 0.0
    %1997 = vmatprep.subr.mxu0 0.0
    %1998 = vmatpush1.msra.mxu0 0.0
    %1999 = vmatprep.subr.mxu0 0.0
    %2000 = vmatpush1.msra.mxu0 0.0
    %2001 = vmatprep.subr.mxu0 0.0
    %2002 = vmatpush1.msra.mxu0 0.0
    %2003 = vmatprep.subr.mxu0 0.0
    %2004 = vmatpush1.msra.mxu0 0.0
    %2005 = vmatprep.subr.mxu0 0.0
    %2006 = vmatpush1.msra.mxu0 0.0
    %2007 = vmatprep.subr.mxu0 0.0
    %2008 = vmatpush1.msra.mxu0 0.0
    %2009 = vmatprep.subr.mxu0 0.0
    %2010 = vmatpush1.msra.mxu0 0.0
    %2011 = vmatprep.subr.mxu0 0.0
    %2012 = vmatpush1.msra.mxu0 0.0
    %2013 = vmatprep.subr.mxu0 0.0
    %2014 = vmatpush1.msra.mxu0 0.0
    %2015 = vmatprep.subr.mxu0 0.0
    %2016 = vmatpush1.msra.mxu0 0.0
    %2017 = vmatprep.subr.mxu0 0.0
    %2018 = vmatpush1.msra.mxu0 0.0
    %2019 = vmatprep.subr.mxu0 0.0
    %2020 = vmatpush1.msra.mxu0 0.0
    %2021 = vmatprep.mubr.f32.mxu0 0.0
    %v2022 = vand.u32 %v1049, 4294901760
    %2023 = vmatmul.mubr.f32.gmra.mrb[0].mxu0 %v2022
    %v2024 = vpop.f32.mrb[0].mxu0
    %v2025 = vadd.f32 %v1314, %v2024
    %v2026 = vpop.f32.mrb[0].mxu0
    %2027 = vmatprep.mubr.f32.mxu0 0.0
    %v2028 = vand.u32 %v1052, 4294901760
    %2029 = vmatmul.mubr.f32.gmra.mrb[0].mxu0 %v2028
    %v2030 = vpop.f32.mrb[0].mxu0
    %v2031 = vadd.f32 %v1324, %v2030
    %v2032 = vpop.f32.mrb[0].mxu0
    %2033 = vmatprep.mubr.f32.mxu0 0.0
    %v2034 = vand.u32 %v1055, 4294901760
    %2035 = vmatmul.mubr.f32.gmra.mrb[0].mxu0 %v2034
    %v2036 = vpop.f32.mrb[0].mxu0
    %v2037 = vadd.f32 %v1334, %v2036
    %v2038 = vpop.f32.mrb[0].mxu0
    %2039 = vmatprep.mubr.f32.mxu0 0.0
    %v2040 = vand.u32 %v1058, 4294901760
    %2041 = vmatmul.mubr.f32.gmra.mrb[0].mxu0 %v2040
    %v2042 = vpop.f32.mrb[0].mxu0
    %v2043 = vadd.f32 %v1344, %v2042
    %v2044 = vpop.f32.mrb[0].mxu0
    %2045 = vmatprep.mubr.f32.mxu0 0.0
    %v2046 = vand.u32 %v1061, 4294901760
    %2047 = vmatmul.mubr.f32.gmra.mrb[0].mxu0 %v2046
    %v2048 = vpop.f32.mrb[0].mxu0
    %v2049 = vadd.f32 %v1354, %v2048
    %v2050 = vpop.f32.mrb[0].mxu0
    %2051 = vmatprep.mubr.f32.mxu0 0.0
    %v2052 = vand.u32 %v1064, 4294901760
    %2053 = vmatmul.mubr.f32.gmra.mrb[0].mxu0 %v2052
    %v2054 = vpop.f32.mrb[0].mxu0
    %v2055 = vadd.f32 %v1364, %v2054
    %v2056 = vpop.f32.mrb[0].mxu0
    %2057 = vmatprep.mubr.f32.mxu0 0.0
    %v2058 = vand.u32 %v1067, 4294901760
    %2059 = vmatmul.mubr.f32.gmra.mrb[0].mxu0 %v2058
    %v2060 = vpop.f32.mrb[0].mxu0
    %v2061 = vadd.f32 %v1374, %v2060
    %v2062 = vpop.f32.mrb[0].mxu0
    %2063 = vmatprep.mubr.f32.mxu0 0.0
    %v2064 = vand.u32 %v1070, 4294901760
    %2065 = vmatmul.mubr.f32.gmra.mrb[0].mxu0 %v2064
    %v2066 = vpop.f32.mrb[0].mxu0
    %v2067 = vadd.f32 %v1384, %v2066
    %v2068 = vpop.f32.mrb[0].mxu0
    %2069 = vmatprep.mubr.f32.mxu0 0.0
    %v2070 = vand.u32 %v1073, 4294901760
    %2071 = vmatmul.mubr.f32.gmra.mrb[0].mxu0 %v2070
    %v2072 = vpop.f32.mrb[0].mxu0
    %v2073 = vadd.f32 %v1394, %v2072
    %v2074 = vpop.f32.mrb[0].mxu0
    %2075 = vmatprep.mubr.f32.mxu0 0.0
    %v2076 = vand.u32 %v1076, 4294901760
    %2077 = vmatmul.mubr.f32.gmra.mrb[0].mxu0 %v2076
    %v2078 = vpop.f32.mrb[0].mxu0
    %v2079 = vadd.f32 %v1404, %v2078
    %v2080 = vpop.f32.mrb[0].mxu0
    %2081 = vmatprep.mubr.f32.mxu0 0.0
    %v2082 = vand.u32 %v1079, 4294901760
    %2083 = vmatmul.mubr.f32.gmra.mrb[0].mxu0 %v2082
    %v2084 = vpop.f32.mrb[0].mxu0
    %v2085 = vadd.f32 %v1414, %v2084
    %v2086 = vpop.f32.mrb[0].mxu0
    %2087 = vmatprep.mubr.f32.mxu0 0.0
    %v2088 = vand.u32 %v1082, 4294901760
    %2089 = vmatmul.mubr.f32.gmra.mrb[0].mxu0 %v2088
    %v2090 = vpop.f32.mrb[0].mxu0
    %v2091 = vadd.f32 %v1424, %v2090
    %v2092 = vpop.f32.mrb[0].mxu0
    %2093 = vmatprep.mubr.f32.mxu0 0.0
    %v2094 = vand.u32 %v1085, 4294901760
    %2095 = vmatmul.mubr.f32.gmra.mrb[0].mxu0 %v2094
    %v2096 = vpop.f32.mrb[0].mxu0
    %v2097 = vadd.f32 %v1434, %v2096
    %v2098 = vpop.f32.mrb[0].mxu0
    %2099 = vmatprep.mubr.f32.mxu0 0.0
    %v2100 = vand.u32 %v1088, 4294901760
    %2101 = vmatmul.mubr.f32.gmra.mrb[0].mxu0 %v2100
    %v2102 = vpop.f32.mrb[0].mxu0
    %v2103 = vadd.f32 %v1444, %v2102
    %v2104 = vpop.f32.mrb[0].mxu0
    %2105 = vmatprep.mubr.f32.mxu0 0.0
    %v2106 = vand.u32 %v1091, 4294901760
    %2107 = vmatmul.mubr.f32.gmra.mrb[0].mxu0 %v2106
    %v2108 = vpop.f32.mrb[0].mxu0
    %v2109 = vadd.f32 %v1454, %v2108
    %v2110 = vpop.f32.mrb[0].mxu0
    %2111 = vmatprep.mubr.f32.mxu0 0.0
    %v2112 = vand.u32 %v1094, 4294901760
    %2113 = vmatmul.mubr.f32.gmra.mrb[0].mxu0 %v2112
    %v2114 = vpop.f32.mrb[0].mxu0
    %v2115 = vadd.f32 %v1464, %v2114
    %v2116 = vpop.f32.mrb[0].mxu0
    %2117 = vmatprep.mubr.f32.mxu0 0.0
    %v2118 = vand.u32 %v1097, 4294901760
    %2119 = vmatmul.mubr.f32.gmra.mrb[0].mxu0 %v2118
    %v2120 = vpop.f32.mrb[0].mxu0
    %v2121 = vadd.f32 %v1474, %v2120
    %v2122 = vpop.f32.mrb[0].mxu0
    %2123 = vmatprep.mubr.f32.mxu0 0.0
    %v2124 = vand.u32 %v1100, 4294901760
    %2125 = vmatmul.mubr.f32.gmra.mrb[0].mxu0 %v2124
    %v2126 = vpop.f32.mrb[0].mxu0
    %v2127 = vadd.f32 %v1484, %v2126
    %v2128 = vpop.f32.mrb[0].mxu0
    %2129 = vmatprep.mubr.f32.mxu0 0.0
    %v2130 = vand.u32 %v1103, 4294901760
    %2131 = vmatmul.mubr.f32.gmra.mrb[0].mxu0 %v2130
    %v2132 = vpop.f32.mrb[0].mxu0
    %v2133 = vadd.f32 %v1494, %v2132
    %v2134 = vpop.f32.mrb[0].mxu0
    %2135 = vmatprep.mubr.f32.mxu0 0.0
    %v2136 = vand.u32 %v1106, 4294901760
    %2137 = vmatmul.mubr.f32.gmra.mrb[0].mxu0 %v2136
    %v2138 = vpop.f32.mrb[0].mxu0
    %v2139 = vadd.f32 %v1504, %v2138
    %v2140 = vpop.f32.mrb[0].mxu0
    %2141 = vmatprep.mubr.f32.mxu0 0.0
    %v2142 = vand.u32 %v1109, 4294901760
    %2143 = vmatmul.mubr.f32.gmra.mrb[0].mxu0 %v2142
    %v2144 = vpop.f32.mrb[0].mxu0
    %v2145 = vadd.f32 %v1514, %v2144
    %v2146 = vpop.f32.mrb[0].mxu0
    %2147 = vmatprep.mubr.f32.mxu0 0.0
    %v2148 = vand.u32 %v1112, 4294901760
    %2149 = vmatmul.mubr.f32.gmra.mrb[0].mxu0 %v2148
    %v2150 = vpop.f32.mrb[0].mxu0
    %v2151 = vadd.f32 %v1524, %v2150
    %v2152 = vpop.f32.mrb[0].mxu0
    %2153 = vmatprep.mubr.f32.mxu0 0.0
    %v2154 = vand.u32 %v1115, 4294901760
    %2155 = vmatmul.mubr.f32.gmra.mrb[0].mxu0 %v2154
    %v2156 = vpop.f32.mrb[0].mxu0
    %v2157 = vadd.f32 %v1534, %v2156
    %v2158 = vpop.f32.mrb[0].mxu0
    %2159 = vmatprep.mubr.f32.mxu0 0.0
    %v2160 = vand.u32 %v1118, 4294901760
    %2161 = vmatmul.mubr.f32.gmra.mrb[0].mxu0 %v2160
    %v2162 = vpop.f32.mrb[0].mxu0
    %v2163 = vadd.f32 %v1544, %v2162
    %v2164 = vpop.f32.mrb[0].mxu0
    %2165 = vmatprep.mubr.f32.mxu0 0.0
    %v2166 = vand.u32 %v1121, 4294901760
    %2167 = vmatmul.mubr.f32.gmra.mrb[0].mxu0 %v2166
    %v2168 = vpop.f32.mrb[0].mxu0
    %v2169 = vadd.f32 %v1554, %v2168
    %v2170 = vpop.f32.mrb[0].mxu0
    %2171 = vmatprep.mubr.f32.mxu0 0.0
    %v2172 = vand.u32 %v1124, 4294901760
    %2173 = vmatmul.mubr.f32.gmra.mrb[0].mxu0 %v2172
    %v2174 = vpop.f32.mrb[0].mxu0
    %v2175 = vadd.f32 %v1564, %v2174
    %v2176 = vpop.f32.mrb[0].mxu0
    %2177 = vmatprep.mubr.f32.mxu0 0.0
    %v2178 = vand.u32 %v1127, 4294901760
    %2179 = vmatmul.mubr.f32.gmra.mrb[0].mxu0 %v2178
    %v2180 = vpop.f32.mrb[0].mxu0
    %v2181 = vadd.f32 %v1574, %v2180
    %v2182 = vpop.f32.mrb[0].mxu0
    %2183 = vmatprep.mubr.f32.mxu0 0.0
    %v2184 = vand.u32 %v1130, 4294901760
    %2185 = vmatmul.mubr.f32.gmra.mrb[0].mxu0 %v2184
    %v2186 = vpop.f32.mrb[0].mxu0
    %v2187 = vadd.f32 %v1584, %v2186
    %v2188 = vpop.f32.mrb[0].mxu0
    %2189 = vmatprep.mubr.f32.mxu0 0.0
    %v2190 = vand.u32 %v1133, 4294901760
    %2191 = vmatmul.mubr.f32.gmra.mrb[0].mxu0 %v2190
    %v2192 = vpop.f32.mrb[0].mxu0
    %v2193 = vadd.f32 %v1594, %v2192
    %v2194 = vpop.f32.mrb[0].mxu0
    %2195 = vmatprep.mubr.f32.mxu0 0.0
    %v2196 = vand.u32 %v1136, 4294901760
    %2197 = vmatmul.mubr.f32.gmra.mrb[0].mxu0 %v2196
    %v2198 = vpop.f32.mrb[0].mxu0
    %v2199 = vadd.f32 %v1604, %v2198
    %v2200 = vpop.f32.mrb[0].mxu0
    %2201 = vmatprep.mubr.f32.mxu0 0.0
    %v2202 = vand.u32 %v1139, 4294901760
    %2203 = vmatmul.mubr.f32.gmra.mrb[0].mxu0 %v2202
    %v2204 = vpop.f32.mrb[0].mxu0
    %v2205 = vadd.f32 %v1614, %v2204
    %v2206 = vpop.f32.mrb[0].mxu0
    %2207 = vmatprep.mubr.f32.mxu0 0.0
    %v2208 = vand.u32 %v1142, 4294901760
    %2209 = vmatmul.mubr.f32.gmra.mrb[0].mxu0 %v2208
    %v2210 = vpop.f32.mrb[0].mxu0
    %v2211 = vadd.f32 %v1624, %v2210
    %v2212 = vpop.f32.mrb[0].mxu0
    %2213 = vmatprep.mubr.f32.mxu0 0.0
    %v2214 = vand.u32 %v1145, 4294901760
    %2215 = vmatmul.mubr.f32.gmra.mrb[0].mxu0 %v2214
    %v2216 = vpop.f32.mrb[0].mxu0
    %v2217 = vadd.f32 %v1634, %v2216
    %v2218 = vpop.f32.mrb[0].mxu0
    %2219 = vmatprep.mubr.f32.mxu0 0.0
    %v2220 = vand.u32 %v1148, 4294901760
    %2221 = vmatmul.mubr.f32.gmra.mrb[0].mxu0 %v2220
    %v2222 = vpop.f32.mrb[0].mxu0
    %v2223 = vadd.f32 %v1644, %v2222
    %v2224 = vpop.f32.mrb[0].mxu0
    %2225 = vmatprep.mubr.f32.mxu0 0.0
    %v2226 = vand.u32 %v1151, 4294901760
    %2227 = vmatmul.mubr.f32.gmra.mrb[0].mxu0 %v2226
    %v2228 = vpop.f32.mrb[0].mxu0
    %v2229 = vadd.f32 %v1654, %v2228
    %v2230 = vpop.f32.mrb[0].mxu0
    %2231 = vmatprep.mubr.f32.mxu0 0.0
    %v2232 = vand.u32 %v1154, 4294901760
    %2233 = vmatmul.mubr.f32.gmra.mrb[0].mxu0 %v2232
    %v2234 = vpop.f32.mrb[0].mxu0
    %v2235 = vadd.f32 %v1664, %v2234
    %v2236 = vpop.f32.mrb[0].mxu0
    %2237 = vmatprep.mubr.f32.mxu0 0.0
    %v2238 = vand.u32 %v1157, 4294901760
    %2239 = vmatmul.mubr.f32.gmra.mrb[0].mxu0 %v2238
    %v2240 = vpop.f32.mrb[0].mxu0
    %v2241 = vadd.f32 %v1674, %v2240
    %v2242 = vpop.f32.mrb[0].mxu0
    %2243 = vmatprep.mubr.f32.mxu0 0.0
    %v2244 = vand.u32 %v1160, 4294901760
    %2245 = vmatmul.mubr.f32.gmra.mrb[0].mxu0 %v2244
    %v2246 = vpop.f32.mrb[0].mxu0
    %v2247 = vadd.f32 %v1684, %v2246
    %v2248 = vpop.f32.mrb[0].mxu0
    %2249 = vmatprep.mubr.f32.mxu0 0.0
    %v2250 = vand.u32 %v1163, 4294901760
    %2251 = vmatmul.mubr.f32.gmra.mrb[0].mxu0 %v2250
    %v2252 = vpop.f32.mrb[0].mxu0
    %v2253 = vadd.f32 %v1694, %v2252
    %v2254 = vpop.f32.mrb[0].mxu0
    %2255 = vmatprep.mubr.f32.mxu0 0.0
    %v2256 = vand.u32 %v1166, 4294901760
    %2257 = vmatmul.mubr.f32.gmra.mrb[0].mxu0 %v2256
    %v2258 = vpop.f32.mrb[0].mxu0
    %v2259 = vadd.f32 %v1704, %v2258
    %v2260 = vpop.f32.mrb[0].mxu0
    %2261 = vmatprep.mubr.f32.mxu0 0.0
    %v2262 = vand.u32 %v1169, 4294901760
    %2263 = vmatmul.mubr.f32.gmra.mrb[0].mxu0 %v2262
    %v2264 = vpop.f32.mrb[0].mxu0
    %v2265 = vadd.f32 %v1714, %v2264
    %v2266 = vpop.f32.mrb[0].mxu0
    %2267 = vmatprep.mubr.f32.mxu0 0.0
    %v2268 = vand.u32 %v1172, 4294901760
    %2269 = vmatmul.mubr.f32.gmra.mrb[0].mxu0 %v2268
    %v2270 = vpop.f32.mrb[0].mxu0
    %v2271 = vadd.f32 %v1724, %v2270
    %v2272 = vpop.f32.mrb[0].mxu0
    %2273 = vmatprep.mubr.f32.mxu0 0.0
    %v2274 = vand.u32 %v1175, 4294901760
    %2275 = vmatmul.mubr.f32.gmra.mrb[0].mxu0 %v2274
    %v2276 = vpop.f32.mrb[0].mxu0
    %v2277 = vadd.f32 %v1734, %v2276
    %v2278 = vpop.f32.mrb[0].mxu0
    %2279 = vmatprep.mubr.f32.mxu0 0.0
    %v2280 = vand.u32 %v1178, 4294901760
    %2281 = vmatmul.mubr.f32.gmra.mrb[0].mxu0 %v2280
    %v2282 = vpop.f32.mrb[0].mxu0
    %v2283 = vadd.f32 %v1744, %v2282
    %v2284 = vpop.f32.mrb[0].mxu0
    %2285 = vmatprep.mubr.f32.mxu0 0.0
    %v2286 = vand.u32 %v1181, 4294901760
    %2287 = vmatmul.mubr.f32.gmra.mrb[0].mxu0 %v2286
    %v2288 = vpop.f32.mrb[0].mxu0
    %v2289 = vadd.f32 %v1754, %v2288
    %v2290 = vpop.f32.mrb[0].mxu0
    %2291 = vmatprep.mubr.f32.mxu0 0.0
    %v2292 = vand.u32 %v1184, 4294901760
    %2293 = vmatmul.mubr.f32.gmra.mrb[0].mxu0 %v2292
    %v2294 = vpop.f32.mrb[0].mxu0
    %v2295 = vadd.f32 %v1764, %v2294
    %v2296 = vpop.f32.mrb[0].mxu0
    %2297 = vmatprep.mubr.f32.mxu0 0.0
    %v2298 = vand.u32 %v1187, 4294901760
    %2299 = vmatmul.mubr.f32.gmra.mrb[0].mxu0 %v2298
    %v2300 = vpop.f32.mrb[0].mxu0
    %v2301 = vadd.f32 %v1774, %v2300
    %v2302 = vpop.f32.mrb[0].mxu0
    %2303 = vmatprep.mubr.f32.mxu0 0.0
    %v2304 = vand.u32 %v1190, 4294901760
    %2305 = vmatmul.mubr.f32.gmra.mrb[0].mxu0 %v2304
    %v2306 = vpop.f32.mrb[0].mxu0
    %v2307 = vadd.f32 %v1784, %v2306
    %v2308 = vpop.f32.mrb[0].mxu0
    %2309 = vmatprep.mubr.f32.mxu0 0.0
    %v2310 = vand.u32 %v1193, 4294901760
    %2311 = vmatmul.mubr.f32.gmra.mrb[0].mxu0 %v2310
    %v2312 = vpop.f32.mrb[0].mxu0
    %v2313 = vadd.f32 %v1794, %v2312
    %v2314 = vpop.f32.mrb[0].mxu0
    %2315 = vmatprep.mubr.f32.mxu0 0.0
    %v2316 = vand.u32 %v1196, 4294901760
    %2317 = vmatmul.mubr.f32.gmra.mrb[0].mxu0 %v2316
    %v2318 = vpop.f32.mrb[0].mxu0
    %v2319 = vadd.f32 %v1804, %v2318
    %v2320 = vpop.f32.mrb[0].mxu0
    %2321 = vmatprep.mubr.f32.mxu0 0.0
    %v2322 = vand.u32 %v1199, 4294901760
    %2323 = vmatmul.mubr.f32.gmra.mrb[0].mxu0 %v2322
    %v2324 = vpop.f32.mrb[0].mxu0
    %v2325 = vadd.f32 %v1814, %v2324
    %v2326 = vpop.f32.mrb[0].mxu0
    %2327 = vmatprep.mubr.f32.mxu0 0.0
    %v2328 = vand.u32 %v1202, 4294901760
    %2329 = vmatmul.mubr.f32.gmra.mrb[0].mxu0 %v2328
    %v2330 = vpop.f32.mrb[0].mxu0
    %v2331 = vadd.f32 %v1824, %v2330
    %v2332 = vpop.f32.mrb[0].mxu0
    %2333 = vmatprep.mubr.f32.mxu0 0.0
    %v2334 = vand.u32 %v1205, 4294901760
    %2335 = vmatmul.mubr.f32.gmra.mrb[0].mxu0 %v2334
    %v2336 = vpop.f32.mrb[0].mxu0
    %v2337 = vadd.f32 %v1834, %v2336
    %v2338 = vpop.f32.mrb[0].mxu0
    %2339 = vmatprep.mubr.f32.mxu0 0.0
    %v2340 = vand.u32 %v1208, 4294901760
    %2341 = vmatmul.mubr.f32.gmra.mrb[0].mxu0 %v2340
    %v2342 = vpop.f32.mrb[0].mxu0
    %v2343 = vadd.f32 %v1844, %v2342
    %v2344 = vpop.f32.mrb[0].mxu0
    %2345 = vmatprep.mubr.f32.mxu0 0.0
    %v2346 = vand.u32 %v1211, 4294901760
    %2347 = vmatmul.mubr.f32.gmra.mrb[0].mxu0 %v2346
    %v2348 = vpop.f32.mrb[0].mxu0
    %v2349 = vadd.f32 %v1854, %v2348
    %v2350 = vpop.f32.mrb[0].mxu0
    %2351 = vmatprep.mubr.f32.mxu0 0.0
    %v2352 = vand.u32 %v1214, 4294901760
    %2353 = vmatmul.mubr.f32.gmra.mrb[0].mxu0 %v2352
    %v2354 = vpop.f32.mrb[0].mxu0
    %v2355 = vadd.f32 %v1864, %v2354
    %v2356 = vpop.f32.mrb[0].mxu0
    %2357 = vmatprep.mubr.f32.mxu0 0.0
    %v2358 = vand.u32 %v1217, 4294901760
    %2359 = vmatmul.mubr.f32.gmra.mrb[0].mxu0 %v2358
    %v2360 = vpop.f32.mrb[0].mxu0
    %v2361 = vadd.f32 %v1874, %v2360
    %v2362 = vpop.f32.mrb[0].mxu0
    %2363 = vmatprep.mubr.f32.mxu0 0.0
    %v2364 = vand.u32 %v1220, 4294901760
    %2365 = vmatmul.mubr.f32.gmra.mrb[0].mxu0 %v2364
    %v2366 = vpop.f32.mrb[0].mxu0
    %v2367 = vadd.f32 %v1884, %v2366
    %v2368 = vpop.f32.mrb[0].mxu0
    %2369 = vmatprep.mubr.f32.mxu0 0.0
    %v2370 = vand.u32 %v1223, 4294901760
    %2371 = vmatmul.mubr.f32.gmra.mrb[0].mxu0 %v2370
    %v2372 = vpop.f32.mrb[0].mxu0
    %v2373 = vadd.f32 %v1894, %v2372
    %v2374 = vpop.f32.mrb[0].mxu0
    %2375 = vmatprep.mubr.f32.mxu0 0.0
    %v2376 = vand.u32 %v1226, 4294901760
    %2377 = vmatmul.mubr.f32.gmra.mrb[0].mxu0 %v2376
    %v2378 = vpop.f32.mrb[0].mxu0
    %v2379 = vadd.f32 %v1904, %v2378
    %v2380 = vpop.f32.mrb[0].mxu0
    %2381 = vmatprep.mubr.f32.mxu0 0.0
    %v2382 = vand.u32 %v1229, 4294901760
    %2383 = vmatmul.mubr.f32.gmra.mrb[0].mxu0 %v2382
    %v2384 = vpop.f32.mrb[0].mxu0
    %v2385 = vadd.f32 %v1914, %v2384
    %v2386 = vpop.f32.mrb[0].mxu0
    %2387 = vmatprep.mubr.f32.mxu0 0.0
    %v2388 = vand.u32 %v1232, 4294901760
    %2389 = vmatmul.mubr.f32.gmra.mrb[0].mxu0 %v2388
    %v2390 = vpop.f32.mrb[0].mxu0
    %v2391 = vadd.f32 %v1924, %v2390
    %v2392 = vpop.f32.mrb[0].mxu0
    %2393 = vmatprep.mubr.f32.mxu0 0.0
    %v2394 = vand.u32 %v1235, 4294901760
    %2395 = vmatmul.mubr.f32.gmra.mrb[0].mxu0 %v2394
    %v2396 = vpop.f32.mrb[0].mxu0
    %v2397 = vadd.f32 %v1934, %v2396
    %v2398 = vpop.f32.mrb[0].mxu0
    %2399 = vmatprep.mubr.f32.mxu0 0.0
    %v2400 = vand.u32 %v1238, 4294901760
    %2401 = vmatmul.mubr.f32.gmra.mrb[0].mxu0 %v2400
    %v2402 = vpop.f32.mrb[0].mxu0
    %v2403 = vadd.f32 %v1944, %v2402
    %v2404 = vpop.f32.mrb[0].mxu0
    %2405 = vdwg.mxu0
    %2406 = vmatprep.subr.mxu0 0.0
    %v2407 = vand.u32 %v1045, 4294901760
    %v2408 = vsub.f32 %v1045, %v2407
    %2409 = vmatpush1.msra.mxu0 %v2408
    %2410 = vmatprep.subr.mxu0 0.0
    %v2411 = vand.u32 %v1046, 4294901760
    %v2412 = vsub.f32 %v1046, %v2411
    %2413 = vmatpush1.msra.mxu0 %v2412
    %2414 = vmatprep.subr.mxu0 0.0
    %2415 = vmatpush1.msra.mxu0 0.0
    %2416 = vmatprep.subr.mxu0 0.0
    %2417 = vmatpush1.msra.mxu0 0.0
    %2418 = vmatprep.subr.mxu0 0.0
    %2419 = vmatpush1.msra.mxu0 0.0
    %2420 = vmatprep.subr.mxu0 0.0
    %2421 = vmatpush1.msra.mxu0 0.0
    %2422 = vmatprep.subr.mxu0 0.0
    %2423 = vmatpush1.msra.mxu0 0.0
    %2424 = vmatprep.subr.mxu0 0.0
    %2425 = vmatpush1.msra.mxu0 0.0
    %2426 = vmatprep.subr.mxu0 0.0
    %2427 = vmatpush1.msra.mxu0 0.0
    %2428 = vmatprep.subr.mxu0 0.0
    %2429 = vmatpush1.msra.mxu0 0.0
    %2430 = vmatprep.subr.mxu0 0.0
    %2431 = vmatpush1.msra.mxu0 0.0
    %2432 = vmatprep.subr.mxu0 0.0
    %2433 = vmatpush1.msra.mxu0 0.0
    %2434 = vmatprep.subr.mxu0 0.0
    %2435 = vmatpush1.msra.mxu0 0.0
    %2436 = vmatprep.subr.mxu0 0.0
    %2437 = vmatpush1.msra.mxu0 0.0
    %2438 = vmatprep.subr.mxu0 0.0
    %2439 = vmatpush1.msra.mxu0 0.0
    %2440 = vmatprep.subr.mxu0 0.0
    %2441 = vmatpush1.msra.mxu0 0.0
    %2442 = vmatprep.subr.mxu0 0.0
    %2443 = vmatpush1.msra.mxu0 0.0
    %2444 = vmatprep.subr.mxu0 0.0
    %2445 = vmatpush1.msra.mxu0 0.0
    %2446 = vmatprep.subr.mxu0 0.0
    %2447 = vmatpush1.msra.mxu0 0.0
    %2448 = vmatprep.subr.mxu0 0.0
    %2449 = vmatpush1.msra.mxu0 0.0
    %2450 = vmatprep.subr.mxu0 0.0
    %2451 = vmatpush1.msra.mxu0 0.0
    %2452 = vmatprep.subr.mxu0 0.0
    %2453 = vmatpush1.msra.mxu0 0.0
    %2454 = vmatprep.subr.mxu0 0.0
    %2455 = vmatpush1.msra.mxu0 0.0
    %2456 = vmatprep.subr.mxu0 0.0
    %2457 = vmatpush1.msra.mxu0 0.0
    %2458 = vmatprep.subr.mxu0 0.0
    %2459 = vmatpush1.msra.mxu0 0.0
    %2460 = vmatprep.subr.mxu0 0.0
    %2461 = vmatpush1.msra.mxu0 0.0
    %2462 = vmatprep.subr.mxu0 0.0
    %2463 = vmatpush1.msra.mxu0 0.0
    %2464 = vmatprep.subr.mxu0 0.0
    %2465 = vmatpush1.msra.mxu0 0.0
    %2466 = vmatprep.subr.mxu0 0.0
    %2467 = vmatpush1.msra.mxu0 0.0
    %2468 = vmatprep.subr.mxu0 0.0
    %2469 = vmatpush1.msra.mxu0 0.0
    %2470 = vmatprep.subr.mxu0 0.0
    %2471 = vmatpush1.msra.mxu0 0.0
    %2472 = vmatprep.subr.mxu0 0.0
    %2473 = vmatpush1.msra.mxu0 0.0
    %2474 = vmatprep.mubr.f32.mxu0 0.0
    %v2475 = vand.u32 %v1049, 4294901760
    %v2476 = vsub.f32 %v1049, %v2475
    %2477 = vmatmul.mubr.f32.gmra.mrb[0].mxu0 %v2476
    %v2478 = vpop.f32.mrb[0].mxu0
    %v2479 = vadd.f32 %v2025, %v2478
    %v2480 = vpop.f32.mrb[0].mxu0
    %2481 = vmatprep.mubr.f32.mxu0 0.0
    %v2482 = vand.u32 %v1052, 4294901760
    %v2483 = vsub.f32 %v1052, %v2482
    %2484 = vmatmul.mubr.f32.gmra.mrb[0].mxu0 %v2483
    %v2485 = vpop.f32.mrb[0].mxu0
    %v2486 = vadd.f32 %v2031, %v2485
    %v2487 = vpop.f32.mrb[0].mxu0
    %2488 = vmatprep.mubr.f32.mxu0 0.0
    %v2489 = vand.u32 %v1055, 4294901760
    %v2490 = vsub.f32 %v1055, %v2489
    %2491 = vmatmul.mubr.f32.gmra.mrb[0].mxu0 %v2490
    %v2492 = vpop.f32.mrb[0].mxu0
    %v2493 = vadd.f32 %v2037, %v2492
    %v2494 = vpop.f32.mrb[0].mxu0
    %2495 = vmatprep.mubr.f32.mxu0 0.0
    %v2496 = vand.u32 %v1058, 4294901760
    %v2497 = vsub.f32 %v1058, %v2496
    %2498 = vmatmul.mubr.f32.gmra.mrb[0].mxu0 %v2497
    %v2499 = vpop.f32.mrb[0].mxu0
    %v2500 = vadd.f32 %v2043, %v2499
    %v2501 = vpop.f32.mrb[0].mxu0
    %2502 = vmatprep.mubr.f32.mxu0 0.0
    %v2503 = vand.u32 %v1061, 4294901760
    %v2504 = vsub.f32 %v1061, %v2503
    %2505 = vmatmul.mubr.f32.gmra.mrb[0].mxu0 %v2504
    %v2506 = vpop.f32.mrb[0].mxu0
    %v2507 = vadd.f32 %v2049, %v2506
    %v2508 = vpop.f32.mrb[0].mxu0
    %2509 = vmatprep.mubr.f32.mxu0 0.0
    %v2510 = vand.u32 %v1064, 4294901760
    %v2511 = vsub.f32 %v1064, %v2510
    %2512 = vmatmul.mubr.f32.gmra.mrb[0].mxu0 %v2511
    %v2513 = vpop.f32.mrb[0].mxu0
    %v2514 = vadd.f32 %v2055, %v2513
    %v2515 = vpop.f32.mrb[0].mxu0
    %2516 = vmatprep.mubr.f32.mxu0 0.0
    %v2517 = vand.u32 %v1067, 4294901760
    %v2518 = vsub.f32 %v1067, %v2517
    %2519 = vmatmul.mubr.f32.gmra.mrb[0].mxu0 %v2518
    %v2520 = vpop.f32.mrb[0].mxu0
    %v2521 = vadd.f32 %v2061, %v2520
    %v2522 = vpop.f32.mrb[0].mxu0
    %2523 = vmatprep.mubr.f32.mxu0 0.0
    %v2524 = vand.u32 %v1070, 4294901760
    %v2525 = vsub.f32 %v1070, %v2524
    %2526 = vmatmul.mubr.f32.gmra.mrb[0].mxu0 %v2525
    %v2527 = vpop.f32.mrb[0].mxu0
    %v2528 = vadd.f32 %v2067, %v2527
    %v2529 = vpop.f32.mrb[0].mxu0
    %2530 = vmatprep.mubr.f32.mxu0 0.0
    %v2531 = vand.u32 %v1073, 4294901760
    %v2532 = vsub.f32 %v1073, %v2531
    %2533 = vmatmul.mubr.f32.gmra.mrb[0].mxu0 %v2532
    %v2534 = vpop.f32.mrb[0].mxu0
    %v2535 = vadd.f32 %v2073, %v2534
    %v2536 = vpop.f32.mrb[0].mxu0
    %2537 = vmatprep.mubr.f32.mxu0 0.0
    %v2538 = vand.u32 %v1076, 4294901760
    %v2539 = vsub.f32 %v1076, %v2538
    %2540 = vmatmul.mubr.f32.gmra.mrb[0].mxu0 %v2539
    %v2541 = vpop.f32.mrb[0].mxu0
    %v2542 = vadd.f32 %v2079, %v2541
    %v2543 = vpop.f32.mrb[0].mxu0
    %2544 = vmatprep.mubr.f32.mxu0 0.0
    %v2545 = vand.u32 %v1079, 4294901760
    %v2546 = vsub.f32 %v1079, %v2545
    %2547 = vmatmul.mubr.f32.gmra.mrb[0].mxu0 %v2546
    %v2548 = vpop.f32.mrb[0].mxu0
    %v2549 = vadd.f32 %v2085, %v2548
    %v2550 = vpop.f32.mrb[0].mxu0
    %2551 = vmatprep.mubr.f32.mxu0 0.0
    %v2552 = vand.u32 %v1082, 4294901760
    %v2553 = vsub.f32 %v1082, %v2552
    %2554 = vmatmul.mubr.f32.gmra.mrb[0].mxu0 %v2553
    %v2555 = vpop.f32.mrb[0].mxu0
    %v2556 = vadd.f32 %v2091, %v2555
    %v2557 = vpop.f32.mrb[0].mxu0
    %2558 = vmatprep.mubr.f32.mxu0 0.0
    %v2559 = vand.u32 %v1085, 4294901760
    %v2560 = vsub.f32 %v1085, %v2559
    %2561 = vmatmul.mubr.f32.gmra.mrb[0].mxu0 %v2560
    %v2562 = vpop.f32.mrb[0].mxu0
    %v2563 = vadd.f32 %v2097, %v2562
    %v2564 = vpop.f32.mrb[0].mxu0
    %2565 = vmatprep.mubr.f32.mxu0 0.0
    %v2566 = vand.u32 %v1088, 4294901760
    %v2567 = vsub.f32 %v1088, %v2566
    %2568 = vmatmul.mubr.f32.gmra.mrb[0].mxu0 %v2567
    %v2569 = vpop.f32.mrb[0].mxu0
    %v2570 = vadd.f32 %v2103, %v2569
    %v2571 = vpop.f32.mrb[0].mxu0
    %2572 = vmatprep.mubr.f32.mxu0 0.0
    %v2573 = vand.u32 %v1091, 4294901760
    %v2574 = vsub.f32 %v1091, %v2573
    %2575 = vmatmul.mubr.f32.gmra.mrb[0].mxu0 %v2574
    %v2576 = vpop.f32.mrb[0].mxu0
    %v2577 = vadd.f32 %v2109, %v2576
    %v2578 = vpop.f32.mrb[0].mxu0
    %2579 = vmatprep.mubr.f32.mxu0 0.0
    %v2580 = vand.u32 %v1094, 4294901760
    %v2581 = vsub.f32 %v1094, %v2580
    %2582 = vmatmul.mubr.f32.gmra.mrb[0].mxu0 %v2581
    %v2583 = vpop.f32.mrb[0].mxu0
    %v2584 = vadd.f32 %v2115, %v2583
    %v2585 = vpop.f32.mrb[0].mxu0
    %2586 = vmatprep.mubr.f32.mxu0 0.0
    %v2587 = vand.u32 %v1097, 4294901760
    %v2588 = vsub.f32 %v1097, %v2587
    %2589 = vmatmul.mubr.f32.gmra.mrb[0].mxu0 %v2588
    %v2590 = vpop.f32.mrb[0].mxu0
    %v2591 = vadd.f32 %v2121, %v2590
    %v2592 = vpop.f32.mrb[0].mxu0
    %2593 = vmatprep.mubr.f32.mxu0 0.0
    %v2594 = vand.u32 %v1100, 4294901760
    %v2595 = vsub.f32 %v1100, %v2594
    %2596 = vmatmul.mubr.f32.gmra.mrb[0].mxu0 %v2595
    %v2597 = vpop.f32.mrb[0].mxu0
    %v2598 = vadd.f32 %v2127, %v2597
    %v2599 = vpop.f32.mrb[0].mxu0
    %2600 = vmatprep.mubr.f32.mxu0 0.0
    %v2601 = vand.u32 %v1103, 4294901760
    %v2602 = vsub.f32 %v1103, %v2601
    %2603 = vmatmul.mubr.f32.gmra.mrb[0].mxu0 %v2602
    %v2604 = vpop.f32.mrb[0].mxu0
    %v2605 = vadd.f32 %v2133, %v2604
    %v2606 = vpop.f32.mrb[0].mxu0
    %2607 = vmatprep.mubr.f32.mxu0 0.0
    %v2608 = vand.u32 %v1106, 4294901760
    %v2609 = vsub.f32 %v1106, %v2608
    %2610 = vmatmul.mubr.f32.gmra.mrb[0].mxu0 %v2609
    %v2611 = vpop.f32.mrb[0].mxu0
    %v2612 = vadd.f32 %v2139, %v2611
    %v2613 = vpop.f32.mrb[0].mxu0
    %2614 = vmatprep.mubr.f32.mxu0 0.0
    %v2615 = vand.u32 %v1109, 4294901760
    %v2616 = vsub.f32 %v1109, %v2615
    %2617 = vmatmul.mubr.f32.gmra.mrb[0].mxu0 %v2616
    %v2618 = vpop.f32.mrb[0].mxu0
    %v2619 = vadd.f32 %v2145, %v2618
    %v2620 = vpop.f32.mrb[0].mxu0
    %2621 = vmatprep.mubr.f32.mxu0 0.0
    %v2622 = vand.u32 %v1112, 4294901760
    %v2623 = vsub.f32 %v1112, %v2622
    %2624 = vmatmul.mubr.f32.gmra.mrb[0].mxu0 %v2623
    %v2625 = vpop.f32.mrb[0].mxu0
    %v2626 = vadd.f32 %v2151, %v2625
    %v2627 = vpop.f32.mrb[0].mxu0
    %2628 = vmatprep.mubr.f32.mxu0 0.0
    %v2629 = vand.u32 %v1115, 4294901760
    %v2630 = vsub.f32 %v1115, %v2629
    %2631 = vmatmul.mubr.f32.gmra.mrb[0].mxu0 %v2630
    %v2632 = vpop.f32.mrb[0].mxu0
    %v2633 = vadd.f32 %v2157, %v2632
    %v2634 = vpop.f32.mrb[0].mxu0
    %2635 = vmatprep.mubr.f32.mxu0 0.0
    %v2636 = vand.u32 %v1118, 4294901760
    %v2637 = vsub.f32 %v1118, %v2636
    %2638 = vmatmul.mubr.f32.gmra.mrb[0].mxu0 %v2637
    %v2639 = vpop.f32.mrb[0].mxu0
    %v2640 = vadd.f32 %v2163, %v2639
    %v2641 = vpop.f32.mrb[0].mxu0
    %2642 = vmatprep.mubr.f32.mxu0 0.0
    %v2643 = vand.u32 %v1121, 4294901760
    %v2644 = vsub.f32 %v1121, %v2643
    %2645 = vmatmul.mubr.f32.gmra.mrb[0].mxu0 %v2644
    %v2646 = vpop.f32.mrb[0].mxu0
    %v2647 = vadd.f32 %v2169, %v2646
    %v2648 = vpop.f32.mrb[0].mxu0
    %2649 = vmatprep.mubr.f32.mxu0 0.0
    %v2650 = vand.u32 %v1124, 4294901760
    %v2651 = vsub.f32 %v1124, %v2650
    %2652 = vmatmul.mubr.f32.gmra.mrb[0].mxu0 %v2651
    %v2653 = vpop.f32.mrb[0].mxu0
    %v2654 = vadd.f32 %v2175, %v2653
    %v2655 = vpop.f32.mrb[0].mxu0
    %2656 = vmatprep.mubr.f32.mxu0 0.0
    %v2657 = vand.u32 %v1127, 4294901760
    %v2658 = vsub.f32 %v1127, %v2657
    %2659 = vmatmul.mubr.f32.gmra.mrb[0].mxu0 %v2658
    %v2660 = vpop.f32.mrb[0].mxu0
    %v2661 = vadd.f32 %v2181, %v2660
    %v2662 = vpop.f32.mrb[0].mxu0
    %2663 = vmatprep.mubr.f32.mxu0 0.0
    %v2664 = vand.u32 %v1130, 4294901760
    %v2665 = vsub.f32 %v1130, %v2664
    %2666 = vmatmul.mubr.f32.gmra.mrb[0].mxu0 %v2665
    %v2667 = vpop.f32.mrb[0].mxu0
    %v2668 = vadd.f32 %v2187, %v2667
    %v2669 = vpop.f32.mrb[0].mxu0
    %2670 = vmatprep.mubr.f32.mxu0 0.0
    %v2671 = vand.u32 %v1133, 4294901760
    %v2672 = vsub.f32 %v1133, %v2671
    %2673 = vmatmul.mubr.f32.gmra.mrb[0].mxu0 %v2672
    %v2674 = vpop.f32.mrb[0].mxu0
    %v2675 = vadd.f32 %v2193, %v2674
    %v2676 = vpop.f32.mrb[0].mxu0
    %2677 = vmatprep.mubr.f32.mxu0 0.0
    %v2678 = vand.u32 %v1136, 4294901760
    %v2679 = vsub.f32 %v1136, %v2678
    %2680 = vmatmul.mubr.f32.gmra.mrb[0].mxu0 %v2679
    %v2681 = vpop.f32.mrb[0].mxu0
    %v2682 = vadd.f32 %v2199, %v2681
    %v2683 = vpop.f32.mrb[0].mxu0
    %2684 = vmatprep.mubr.f32.mxu0 0.0
    %v2685 = vand.u32 %v1139, 4294901760
    %v2686 = vsub.f32 %v1139, %v2685
    %2687 = vmatmul.mubr.f32.gmra.mrb[0].mxu0 %v2686
    %v2688 = vpop.f32.mrb[0].mxu0
    %v2689 = vadd.f32 %v2205, %v2688
    %v2690 = vpop.f32.mrb[0].mxu0
    %2691 = vmatprep.mubr.f32.mxu0 0.0
    %v2692 = vand.u32 %v1142, 4294901760
    %v2693 = vsub.f32 %v1142, %v2692
    %2694 = vmatmul.mubr.f32.gmra.mrb[0].mxu0 %v2693
    %v2695 = vpop.f32.mrb[0].mxu0
    %v2696 = vadd.f32 %v2211, %v2695
    %v2697 = vpop.f32.mrb[0].mxu0
    %2698 = vmatprep.mubr.f32.mxu0 0.0
    %v2699 = vand.u32 %v1145, 4294901760
    %v2700 = vsub.f32 %v1145, %v2699
    %2701 = vmatmul.mubr.f32.gmra.mrb[0].mxu0 %v2700
    %v2702 = vpop.f32.mrb[0].mxu0
    %v2703 = vadd.f32 %v2217, %v2702
    %v2704 = vpop.f32.mrb[0].mxu0
    %2705 = vmatprep.mubr.f32.mxu0 0.0
    %v2706 = vand.u32 %v1148, 4294901760
    %v2707 = vsub.f32 %v1148, %v2706
    %2708 = vmatmul.mubr.f32.gmra.mrb[0].mxu0 %v2707
    %v2709 = vpop.f32.mrb[0].mxu0
    %v2710 = vadd.f32 %v2223, %v2709
    %v2711 = vpop.f32.mrb[0].mxu0
    %2712 = vmatprep.mubr.f32.mxu0 0.0
    %v2713 = vand.u32 %v1151, 4294901760
    %v2714 = vsub.f32 %v1151, %v2713
    %2715 = vmatmul.mubr.f32.gmra.mrb[0].mxu0 %v2714
    %v2716 = vpop.f32.mrb[0].mxu0
    %v2717 = vadd.f32 %v2229, %v2716
    %v2718 = vpop.f32.mrb[0].mxu0
    %2719 = vmatprep.mubr.f32.mxu0 0.0
    %v2720 = vand.u32 %v1154, 4294901760
    %v2721 = vsub.f32 %v1154, %v2720
    %2722 = vmatmul.mubr.f32.gmra.mrb[0].mxu0 %v2721
    %v2723 = vpop.f32.mrb[0].mxu0
    %v2724 = vadd.f32 %v2235, %v2723
    %v2725 = vpop.f32.mrb[0].mxu0
    %2726 = vmatprep.mubr.f32.mxu0 0.0
    %v2727 = vand.u32 %v1157, 4294901760
    %v2728 = vsub.f32 %v1157, %v2727
    %2729 = vmatmul.mubr.f32.gmra.mrb[0].mxu0 %v2728
    %v2730 = vpop.f32.mrb[0].mxu0
    %v2731 = vadd.f32 %v2241, %v2730
    %v2732 = vpop.f32.mrb[0].mxu0
    %2733 = vmatprep.mubr.f32.mxu0 0.0
    %v2734 = vand.u32 %v1160, 4294901760
    %v2735 = vsub.f32 %v1160, %v2734
    %2736 = vmatmul.mubr.f32.gmra.mrb[0].mxu0 %v2735
    %v2737 = vpop.f32.mrb[0].mxu0
    %v2738 = vadd.f32 %v2247, %v2737
    %v2739 = vpop.f32.mrb[0].mxu0
    %2740 = vmatprep.mubr.f32.mxu0 0.0
    %v2741 = vand.u32 %v1163, 4294901760
    %v2742 = vsub.f32 %v1163, %v2741
    %2743 = vmatmul.mubr.f32.gmra.mrb[0].mxu0 %v2742
    %v2744 = vpop.f32.mrb[0].mxu0
    %v2745 = vadd.f32 %v2253, %v2744
    %v2746 = vpop.f32.mrb[0].mxu0
    %2747 = vmatprep.mubr.f32.mxu0 0.0
    %v2748 = vand.u32 %v1166, 4294901760
    %v2749 = vsub.f32 %v1166, %v2748
    %2750 = vmatmul.mubr.f32.gmra.mrb[0].mxu0 %v2749
    %v2751 = vpop.f32.mrb[0].mxu0
    %v2752 = vadd.f32 %v2259, %v2751
    %v2753 = vpop.f32.mrb[0].mxu0
    %2754 = vmatprep.mubr.f32.mxu0 0.0
    %v2755 = vand.u32 %v1169, 4294901760
    %v2756 = vsub.f32 %v1169, %v2755
    %2757 = vmatmul.mubr.f32.gmra.mrb[0].mxu0 %v2756
    %v2758 = vpop.f32.mrb[0].mxu0
    %v2759 = vadd.f32 %v2265, %v2758
    %v2760 = vpop.f32.mrb[0].mxu0
    %2761 = vmatprep.mubr.f32.mxu0 0.0
    %v2762 = vand.u32 %v1172, 4294901760
    %v2763 = vsub.f32 %v1172, %v2762
    %2764 = vmatmul.mubr.f32.gmra.mrb[0].mxu0 %v2763
    %v2765 = vpop.f32.mrb[0].mxu0
    %v2766 = vadd.f32 %v2271, %v2765
    %v2767 = vpop.f32.mrb[0].mxu0
    %2768 = vmatprep.mubr.f32.mxu0 0.0
    %v2769 = vand.u32 %v1175, 4294901760
    %v2770 = vsub.f32 %v1175, %v2769
    %2771 = vmatmul.mubr.f32.gmra.mrb[0].mxu0 %v2770
    %v2772 = vpop.f32.mrb[0].mxu0
    %v2773 = vadd.f32 %v2277, %v2772
    %v2774 = vpop.f32.mrb[0].mxu0
    %2775 = vmatprep.mubr.f32.mxu0 0.0
    %v2776 = vand.u32 %v1178, 4294901760
    %v2777 = vsub.f32 %v1178, %v2776
    %2778 = vmatmul.mubr.f32.gmra.mrb[0].mxu0 %v2777
    %v2779 = vpop.f32.mrb[0].mxu0
    %v2780 = vadd.f32 %v2283, %v2779
    %v2781 = vpop.f32.mrb[0].mxu0
    %2782 = vmatprep.mubr.f32.mxu0 0.0
    %v2783 = vand.u32 %v1181, 4294901760
    %v2784 = vsub.f32 %v1181, %v2783
    %2785 = vmatmul.mubr.f32.gmra.mrb[0].mxu0 %v2784
    %v2786 = vpop.f32.mrb[0].mxu0
    %v2787 = vadd.f32 %v2289, %v2786
    %v2788 = vpop.f32.mrb[0].mxu0
    %2789 = vmatprep.mubr.f32.mxu0 0.0
    %v2790 = vand.u32 %v1184, 4294901760
    %v2791 = vsub.f32 %v1184, %v2790
    %2792 = vmatmul.mubr.f32.gmra.mrb[0].mxu0 %v2791
    %v2793 = vpop.f32.mrb[0].mxu0
    %v2794 = vadd.f32 %v2295, %v2793
    %v2795 = vpop.f32.mrb[0].mxu0
    %2796 = vmatprep.mubr.f32.mxu0 0.0
    %v2797 = vand.u32 %v1187, 4294901760
    %v2798 = vsub.f32 %v1187, %v2797
    %2799 = vmatmul.mubr.f32.gmra.mrb[0].mxu0 %v2798
    %v2800 = vpop.f32.mrb[0].mxu0
    %v2801 = vadd.f32 %v2301, %v2800
    %v2802 = vpop.f32.mrb[0].mxu0
    %2803 = vmatprep.mubr.f32.mxu0 0.0
    %v2804 = vand.u32 %v1190, 4294901760
    %v2805 = vsub.f32 %v1190, %v2804
    %2806 = vmatmul.mubr.f32.gmra.mrb[0].mxu0 %v2805
    %v2807 = vpop.f32.mrb[0].mxu0
    %v2808 = vadd.f32 %v2307, %v2807
    %v2809 = vpop.f32.mrb[0].mxu0
    %2810 = vmatprep.mubr.f32.mxu0 0.0
    %v2811 = vand.u32 %v1193, 4294901760
    %v2812 = vsub.f32 %v1193, %v2811
    %2813 = vmatmul.mubr.f32.gmra.mrb[0].mxu0 %v2812
    %v2814 = vpop.f32.mrb[0].mxu0
    %v2815 = vadd.f32 %v2313, %v2814
    %v2816 = vpop.f32.mrb[0].mxu0
    %2817 = vmatprep.mubr.f32.mxu0 0.0
    %v2818 = vand.u32 %v1196, 4294901760
    %v2819 = vsub.f32 %v1196, %v2818
    %2820 = vmatmul.mubr.f32.gmra.mrb[0].mxu0 %v2819
    %v2821 = vpop.f32.mrb[0].mxu0
    %v2822 = vadd.f32 %v2319, %v2821
    %v2823 = vpop.f32.mrb[0].mxu0
    %2824 = vmatprep.mubr.f32.mxu0 0.0
    %v2825 = vand.u32 %v1199, 4294901760
    %v2826 = vsub.f32 %v1199, %v2825
    %2827 = vmatmul.mubr.f32.gmra.mrb[0].mxu0 %v2826
    %v2828 = vpop.f32.mrb[0].mxu0
    %v2829 = vadd.f32 %v2325, %v2828
    %v2830 = vpop.f32.mrb[0].mxu0
    %2831 = vmatprep.mubr.f32.mxu0 0.0
    %v2832 = vand.u32 %v1202, 4294901760
    %v2833 = vsub.f32 %v1202, %v2832
    %2834 = vmatmul.mubr.f32.gmra.mrb[0].mxu0 %v2833
    %v2835 = vpop.f32.mrb[0].mxu0
    %v2836 = vadd.f32 %v2331, %v2835
    %v2837 = vpop.f32.mrb[0].mxu0
    %2838 = vmatprep.mubr.f32.mxu0 0.0
    %v2839 = vand.u32 %v1205, 4294901760
    %v2840 = vsub.f32 %v1205, %v2839
    %2841 = vmatmul.mubr.f32.gmra.mrb[0].mxu0 %v2840
    %v2842 = vpop.f32.mrb[0].mxu0
    %v2843 = vadd.f32 %v2337, %v2842
    %v2844 = vpop.f32.mrb[0].mxu0
    %2845 = vmatprep.mubr.f32.mxu0 0.0
    %v2846 = vand.u32 %v1208, 4294901760
    %v2847 = vsub.f32 %v1208, %v2846
    %2848 = vmatmul.mubr.f32.gmra.mrb[0].mxu0 %v2847
    %v2849 = vpop.f32.mrb[0].mxu0
    %v2850 = vadd.f32 %v2343, %v2849
    %v2851 = vpop.f32.mrb[0].mxu0
    %2852 = vmatprep.mubr.f32.mxu0 0.0
    %v2853 = vand.u32 %v1211, 4294901760
    %v2854 = vsub.f32 %v1211, %v2853
    %2855 = vmatmul.mubr.f32.gmra.mrb[0].mxu0 %v2854
    %v2856 = vpop.f32.mrb[0].mxu0
    %v2857 = vadd.f32 %v2349, %v2856
    %v2858 = vpop.f32.mrb[0].mxu0
    %2859 = vmatprep.mubr.f32.mxu0 0.0
    %v2860 = vand.u32 %v1214, 4294901760
    %v2861 = vsub.f32 %v1214, %v2860
    %2862 = vmatmul.mubr.f32.gmra.mrb[0].mxu0 %v2861
    %v2863 = vpop.f32.mrb[0].mxu0
    %v2864 = vadd.f32 %v2355, %v2863
    %v2865 = vpop.f32.mrb[0].mxu0
    %2866 = vmatprep.mubr.f32.mxu0 0.0
    %v2867 = vand.u32 %v1217, 4294901760
    %v2868 = vsub.f32 %v1217, %v2867
    %2869 = vmatmul.mubr.f32.gmra.mrb[0].mxu0 %v2868
    %v2870 = vpop.f32.mrb[0].mxu0
    %v2871 = vadd.f32 %v2361, %v2870
    %v2872 = vpop.f32.mrb[0].mxu0
    %2873 = vmatprep.mubr.f32.mxu0 0.0
    %v2874 = vand.u32 %v1220, 4294901760
    %v2875 = vsub.f32 %v1220, %v2874
    %2876 = vmatmul.mubr.f32.gmra.mrb[0].mxu0 %v2875
    %v2877 = vpop.f32.mrb[0].mxu0
    %v2878 = vadd.f32 %v2367, %v2877
    %v2879 = vpop.f32.mrb[0].mxu0
    %2880 = vmatprep.mubr.f32.mxu0 0.0
    %v2881 = vand.u32 %v1223, 4294901760
    %v2882 = vsub.f32 %v1223, %v2881
    %2883 = vmatmul.mubr.f32.gmra.mrb[0].mxu0 %v2882
    %v2884 = vpop.f32.mrb[0].mxu0
    %v2885 = vadd.f32 %v2373, %v2884
    %v2886 = vpop.f32.mrb[0].mxu0
    %2887 = vmatprep.mubr.f32.mxu0 0.0
    %v2888 = vand.u32 %v1226, 4294901760
    %v2889 = vsub.f32 %v1226, %v2888
    %2890 = vmatmul.mubr.f32.gmra.mrb[0].mxu0 %v2889
    %v2891 = vpop.f32.mrb[0].mxu0
    %v2892 = vadd.f32 %v2379, %v2891
    %v2893 = vpop.f32.mrb[0].mxu0
    %2894 = vmatprep.mubr.f32.mxu0 0.0
    %v2895 = vand.u32 %v1229, 4294901760
    %v2896 = vsub.f32 %v1229, %v2895
    %2897 = vmatmul.mubr.f32.gmra.mrb[0].mxu0 %v2896
    %v2898 = vpop.f32.mrb[0].mxu0
    %v2899 = vadd.f32 %v2385, %v2898
    %v2900 = vpop.f32.mrb[0].mxu0
    %2901 = vmatprep.mubr.f32.mxu0 0.0
    %v2902 = vand.u32 %v1232, 4294901760
    %v2903 = vsub.f32 %v1232, %v2902
    %2904 = vmatmul.mubr.f32.gmra.mrb[0].mxu0 %v2903
    %v2905 = vpop.f32.mrb[0].mxu0
    %v2906 = vadd.f32 %v2391, %v2905
    %v2907 = vpop.f32.mrb[0].mxu0
    %2908 = vmatprep.mubr.f32.mxu0 0.0
    %v2909 = vand.u32 %v1235, 4294901760
    %v2910 = vsub.f32 %v1235, %v2909
    %2911 = vmatmul.mubr.f32.gmra.mrb[0].mxu0 %v2910
    %v2912 = vpop.f32.mrb[0].mxu0
    %v2913 = vadd.f32 %v2397, %v2912
    %v2914 = vpop.f32.mrb[0].mxu0
    %2915 = vmatprep.mubr.f32.mxu0 0.0
    %v2916 = vand.u32 %v1238, 4294901760
    %v2917 = vsub.f32 %v1238, %v2916
    %2918 = vmatmul.mubr.f32.gmra.mrb[0].mxu0 %v2917
    %v2919 = vpop.f32.mrb[0].mxu0
    %v2920 = vadd.f32 %v2403, %v2919
    %v2921 = vpop.f32.mrb[0].mxu0
    %2922 = vdwg.mxu0
    %2923 = vmatprep.subr.mxu0 0.0
    %v2924 = vand.u32 %v1045, 4294901760
    %2925 = vmatpush1.msra.mxu0 %v2924
    %2926 = vmatprep.subr.mxu0 0.0
    %v2927 = vand.u32 %v1046, 4294901760
    %2928 = vmatpush1.msra.mxu0 %v2927
    %2929 = vmatprep.subr.mxu0 0.0
    %2930 = vmatpush1.msra.mxu0 0.0
    %2931 = vmatprep.subr.mxu0 0.0
    %2932 = vmatpush1.msra.mxu0 0.0
    %2933 = vmatprep.subr.mxu0 0.0
    %2934 = vmatpush1.msra.mxu0 0.0
    %2935 = vmatprep.subr.mxu0 0.0
    %2936 = vmatpush1.msra.mxu0 0.0
    %2937 = vmatprep.subr.mxu0 0.0
    %2938 = vmatpush1.msra.mxu0 0.0
    %2939 = vmatprep.subr.mxu0 0.0
    %2940 = vmatpush1.msra.mxu0 0.0
    %2941 = vmatprep.subr.mxu0 0.0
    %2942 = vmatpush1.msra.mxu0 0.0
    %2943 = vmatprep.subr.mxu0 0.0
    %2944 = vmatpush1.msra.mxu0 0.0
    %2945 = vmatprep.subr.mxu0 0.0
    %2946 = vmatpush1.msra.mxu0 0.0
    %2947 = vmatprep.subr.mxu0 0.0
    %2948 = vmatpush1.msra.mxu0 0.0
    %2949 = vmatprep.subr.mxu0 0.0
    %2950 = vmatpush1.msra.mxu0 0.0
    %2951 = vmatprep.subr.mxu0 0.0
    %2952 = vmatpush1.msra.mxu0 0.0
    %2953 = vmatprep.subr.mxu0 0.0
    %2954 = vmatpush1.msra.mxu0 0.0
    %2955 = vmatprep.subr.mxu0 0.0
    %2956 = vmatpush1.msra.mxu0 0.0
    %2957 = vmatprep.subr.mxu0 0.0
    %2958 = vmatpush1.msra.mxu0 0.0
    %2959 = vmatprep.subr.mxu0 0.0
    %2960 = vmatpush1.msra.mxu0 0.0
    %2961 = vmatprep.subr.mxu0 0.0
    %2962 = vmatpush1.msra.mxu0 0.0
    %2963 = vmatprep.subr.mxu0 0.0
    %2964 = vmatpush1.msra.mxu0 0.0
    %2965 = vmatprep.subr.mxu0 0.0
    %2966 = vmatpush1.msra.mxu0 0.0
    %2967 = vmatprep.subr.mxu0 0.0
    %2968 = vmatpush1.msra.mxu0 0.0
    %2969 = vmatprep.subr.mxu0 0.0
    %2970 = vmatpush1.msra.mxu0 0.0
    %2971 = vmatprep.subr.mxu0 0.0
    %2972 = vmatpush1.msra.mxu0 0.0
    %2973 = vmatprep.subr.mxu0 0.0
    %2974 = vmatpush1.msra.mxu0 0.0
    %2975 = vmatprep.subr.mxu0 0.0
    %2976 = vmatpush1.msra.mxu0 0.0
    %2977 = vmatprep.subr.mxu0 0.0
    %2978 = vmatpush1.msra.mxu0 0.0
    %2979 = vmatprep.subr.mxu0 0.0
    %2980 = vmatpush1.msra.mxu0 0.0
    %2981 = vmatprep.subr.mxu0 0.0
    %2982 = vmatpush1.msra.mxu0 0.0
    %2983 = vmatprep.subr.mxu0 0.0
    %2984 = vmatpush1.msra.mxu0 0.0
    %2985 = vmatprep.subr.mxu0 0.0
    %2986 = vmatpush1.msra.mxu0 0.0
    %2987 = vmatprep.subr.mxu0 0.0
    %2988 = vmatpush1.msra.mxu0 0.0
    %2989 = vmatprep.mubr.f32.mxu0 0.0
    %v2990 = vand.u32 %v1049, 4294901760
    %v2991 = vsub.f32 %v1049, %v2990
    %v2992 = vand.u32 %v2991, 4294901760
    %2993 = vmatmul.mubr.f32.gmra.mrb[0].mxu0 %v2992
    %v2994 = vpop.f32.mrb[0].mxu0
    %v2995 = vadd.f32 %v2479, %v2994
    %v2996 = vpop.f32.mrb[0].mxu0
    %2997 = vmatprep.mubr.f32.mxu0 0.0
    %v2998 = vand.u32 %v1052, 4294901760
    %v2999 = vsub.f32 %v1052, %v2998
    %v3000 = vand.u32 %v2999, 4294901760
    %3001 = vmatmul.mubr.f32.gmra.mrb[0].mxu0 %v3000
    %v3002 = vpop.f32.mrb[0].mxu0
    %v3003 = vadd.f32 %v2486, %v3002
    %v3004 = vpop.f32.mrb[0].mxu0
    %3005 = vmatprep.mubr.f32.mxu0 0.0
    %v3006 = vand.u32 %v1055, 4294901760
    %v3007 = vsub.f32 %v1055, %v3006
    %v3008 = vand.u32 %v3007, 4294901760
    %3009 = vmatmul.mubr.f32.gmra.mrb[0].mxu0 %v3008
    %v3010 = vpop.f32.mrb[0].mxu0
    %v3011 = vadd.f32 %v2493, %v3010
    %v3012 = vpop.f32.mrb[0].mxu0
    %3013 = vmatprep.mubr.f32.mxu0 0.0
    %v3014 = vand.u32 %v1058, 4294901760
    %v3015 = vsub.f32 %v1058, %v3014
    %v3016 = vand.u32 %v3015, 4294901760
    %3017 = vmatmul.mubr.f32.gmra.mrb[0].mxu0 %v3016
    %v3018 = vpop.f32.mrb[0].mxu0
    %v3019 = vadd.f32 %v2500, %v3018
    %v3020 = vpop.f32.mrb[0].mxu0
    %3021 = vmatprep.mubr.f32.mxu0 0.0
    %v3022 = vand.u32 %v1061, 4294901760
    %v3023 = vsub.f32 %v1061, %v3022
    %v3024 = vand.u32 %v3023, 4294901760
    %3025 = vmatmul.mubr.f32.gmra.mrb[0].mxu0 %v3024
    %v3026 = vpop.f32.mrb[0].mxu0
    %v3027 = vadd.f32 %v2507, %v3026
    %v3028 = vpop.f32.mrb[0].mxu0
    %3029 = vmatprep.mubr.f32.mxu0 0.0
    %v3030 = vand.u32 %v1064, 4294901760
    %v3031 = vsub.f32 %v1064, %v3030
    %v3032 = vand.u32 %v3031, 4294901760
    %3033 = vmatmul.mubr.f32.gmra.mrb[0].mxu0 %v3032
    %v3034 = vpop.f32.mrb[0].mxu0
    %v3035 = vadd.f32 %v2514, %v3034
    %v3036 = vpop.f32.mrb[0].mxu0
    %3037 = vmatprep.mubr.f32.mxu0 0.0
    %v3038 = vand.u32 %v1067, 4294901760
    %v3039 = vsub.f32 %v1067, %v3038
    %v3040 = vand.u32 %v3039, 4294901760
    %3041 = vmatmul.mubr.f32.gmra.mrb[0].mxu0 %v3040
    %v3042 = vpop.f32.mrb[0].mxu0
    %v3043 = vadd.f32 %v2521, %v3042
    %v3044 = vpop.f32.mrb[0].mxu0
    %3045 = vmatprep.mubr.f32.mxu0 0.0
    %v3046 = vand.u32 %v1070, 4294901760
    %v3047 = vsub.f32 %v1070, %v3046
    %v3048 = vand.u32 %v3047, 4294901760
    %3049 = vmatmul.mubr.f32.gmra.mrb[0].mxu0 %v3048
    %v3050 = vpop.f32.mrb[0].mxu0
    %v3051 = vadd.f32 %v2528, %v3050
    %v3052 = vpop.f32.mrb[0].mxu0
    %3053 = vmatprep.mubr.f32.mxu0 0.0
    %v3054 = vand.u32 %v1073, 4294901760
    %v3055 = vsub.f32 %v1073, %v3054
    %v3056 = vand.u32 %v3055, 4294901760
    %3057 = vmatmul.mubr.f32.gmra.mrb[0].mxu0 %v3056
    %v3058 = vpop.f32.mrb[0].mxu0
    %v3059 = vadd.f32 %v2535, %v3058
    %v3060 = vpop.f32.mrb[0].mxu0
    %3061 = vmatprep.mubr.f32.mxu0 0.0
    %v3062 = vand.u32 %v1076, 4294901760
    %v3063 = vsub.f32 %v1076, %v3062
    %v3064 = vand.u32 %v3063, 4294901760
    %3065 = vmatmul.mubr.f32.gmra.mrb[0].mxu0 %v3064
    %v3066 = vpop.f32.mrb[0].mxu0
    %v3067 = vadd.f32 %v2542, %v3066
    %v3068 = vpop.f32.mrb[0].mxu0
    %3069 = vmatprep.mubr.f32.mxu0 0.0
    %v3070 = vand.u32 %v1079, 4294901760
    %v3071 = vsub.f32 %v1079, %v3070
    %v3072 = vand.u32 %v3071, 4294901760
    %3073 = vmatmul.mubr.f32.gmra.mrb[0].mxu0 %v3072
    %v3074 = vpop.f32.mrb[0].mxu0
    %v3075 = vadd.f32 %v2549, %v3074
    %v3076 = vpop.f32.mrb[0].mxu0
    %3077 = vmatprep.mubr.f32.mxu0 0.0
    %v3078 = vand.u32 %v1082, 4294901760
    %v3079 = vsub.f32 %v1082, %v3078
    %v3080 = vand.u32 %v3079, 4294901760
    %3081 = vmatmul.mubr.f32.gmra.mrb[0].mxu0 %v3080
    %v3082 = vpop.f32.mrb[0].mxu0
    %v3083 = vadd.f32 %v2556, %v3082
    %v3084 = vpop.f32.mrb[0].mxu0
    %3085 = vmatprep.mubr.f32.mxu0 0.0
    %v3086 = vand.u32 %v1085, 4294901760
    %v3087 = vsub.f32 %v1085, %v3086
    %v3088 = vand.u32 %v3087, 4294901760
    %3089 = vmatmul.mubr.f32.gmra.mrb[0].mxu0 %v3088
    %v3090 = vpop.f32.mrb[0].mxu0
    %v3091 = vadd.f32 %v2563, %v3090
    %v3092 = vpop.f32.mrb[0].mxu0
    %3093 = vmatprep.mubr.f32.mxu0 0.0
    %v3094 = vand.u32 %v1088, 4294901760
    %v3095 = vsub.f32 %v1088, %v3094
    %v3096 = vand.u32 %v3095, 4294901760
    %3097 = vmatmul.mubr.f32.gmra.mrb[0].mxu0 %v3096
    %v3098 = vpop.f32.mrb[0].mxu0
    %v3099 = vadd.f32 %v2570, %v3098
    %v3100 = vpop.f32.mrb[0].mxu0
    %3101 = vmatprep.mubr.f32.mxu0 0.0
    %v3102 = vand.u32 %v1091, 4294901760
    %v3103 = vsub.f32 %v1091, %v3102
    %v3104 = vand.u32 %v3103, 4294901760
    %3105 = vmatmul.mubr.f32.gmra.mrb[0].mxu0 %v3104
    %v3106 = vpop.f32.mrb[0].mxu0
    %v3107 = vadd.f32 %v2577, %v3106
    %v3108 = vpop.f32.mrb[0].mxu0
    %3109 = vmatprep.mubr.f32.mxu0 0.0
    %v3110 = vand.u32 %v1094, 4294901760
    %v3111 = vsub.f32 %v1094, %v3110
    %v3112 = vand.u32 %v3111, 4294901760
    %3113 = vmatmul.mubr.f32.gmra.mrb[0].mxu0 %v3112
    %v3114 = vpop.f32.mrb[0].mxu0
    %v3115 = vadd.f32 %v2584, %v3114
    %v3116 = vpop.f32.mrb[0].mxu0
    %3117 = vmatprep.mubr.f32.mxu0 0.0
    %v3118 = vand.u32 %v1097, 4294901760
    %v3119 = vsub.f32 %v1097, %v3118
    %v3120 = vand.u32 %v3119, 4294901760
    %3121 = vmatmul.mubr.f32.gmra.mrb[0].mxu0 %v3120
    %v3122 = vpop.f32.mrb[0].mxu0
    %v3123 = vadd.f32 %v2591, %v3122
    %v3124 = vpop.f32.mrb[0].mxu0
    %3125 = vmatprep.mubr.f32.mxu0 0.0
    %v3126 = vand.u32 %v1100, 4294901760
    %v3127 = vsub.f32 %v1100, %v3126
    %v3128 = vand.u32 %v3127, 4294901760
    %3129 = vmatmul.mubr.f32.gmra.mrb[0].mxu0 %v3128
    %v3130 = vpop.f32.mrb[0].mxu0
    %v3131 = vadd.f32 %v2598, %v3130
    %v3132 = vpop.f32.mrb[0].mxu0
    %3133 = vmatprep.mubr.f32.mxu0 0.0
    %v3134 = vand.u32 %v1103, 4294901760
    %v3135 = vsub.f32 %v1103, %v3134
    %v3136 = vand.u32 %v3135, 4294901760
    %3137 = vmatmul.mubr.f32.gmra.mrb[0].mxu0 %v3136
    %v3138 = vpop.f32.mrb[0].mxu0
    %v3139 = vadd.f32 %v2605, %v3138
    %v3140 = vpop.f32.mrb[0].mxu0
    %3141 = vmatprep.mubr.f32.mxu0 0.0
    %v3142 = vand.u32 %v1106, 4294901760
    %v3143 = vsub.f32 %v1106, %v3142
    %v3144 = vand.u32 %v3143, 4294901760
    %3145 = vmatmul.mubr.f32.gmra.mrb[0].mxu0 %v3144
    %v3146 = vpop.f32.mrb[0].mxu0
    %v3147 = vadd.f32 %v2612, %v3146
    %v3148 = vpop.f32.mrb[0].mxu0
    %3149 = vmatprep.mubr.f32.mxu0 0.0
    %v3150 = vand.u32 %v1109, 4294901760
    %v3151 = vsub.f32 %v1109, %v3150
    %v3152 = vand.u32 %v3151, 4294901760
    %3153 = vmatmul.mubr.f32.gmra.mrb[0].mxu0 %v3152
    %v3154 = vpop.f32.mrb[0].mxu0
    %v3155 = vadd.f32 %v2619, %v3154
    %v3156 = vpop.f32.mrb[0].mxu0
    %3157 = vmatprep.mubr.f32.mxu0 0.0
    %v3158 = vand.u32 %v1112, 4294901760
    %v3159 = vsub.f32 %v1112, %v3158
    %v3160 = vand.u32 %v3159, 4294901760
    %3161 = vmatmul.mubr.f32.gmra.mrb[0].mxu0 %v3160
    %v3162 = vpop.f32.mrb[0].mxu0
    %v3163 = vadd.f32 %v2626, %v3162
    %v3164 = vpop.f32.mrb[0].mxu0
    %3165 = vmatprep.mubr.f32.mxu0 0.0
    %v3166 = vand.u32 %v1115, 4294901760
    %v3167 = vsub.f32 %v1115, %v3166
    %v3168 = vand.u32 %v3167, 4294901760
    %3169 = vmatmul.mubr.f32.gmra.mrb[0].mxu0 %v3168
    %v3170 = vpop.f32.mrb[0].mxu0
    %v3171 = vadd.f32 %v2633, %v3170
    %v3172 = vpop.f32.mrb[0].mxu0
    %3173 = vmatprep.mubr.f32.mxu0 0.0
    %v3174 = vand.u32 %v1118, 4294901760
    %v3175 = vsub.f32 %v1118, %v3174
    %v3176 = vand.u32 %v3175, 4294901760
    %3177 = vmatmul.mubr.f32.gmra.mrb[0].mxu0 %v3176
    %v3178 = vpop.f32.mrb[0].mxu0
    %v3179 = vadd.f32 %v2640, %v3178
    %v3180 = vpop.f32.mrb[0].mxu0
    %3181 = vmatprep.mubr.f32.mxu0 0.0
    %v3182 = vand.u32 %v1121, 4294901760
    %v3183 = vsub.f32 %v1121, %v3182
    %v3184 = vand.u32 %v3183, 4294901760
    %3185 = vmatmul.mubr.f32.gmra.mrb[0].mxu0 %v3184
    %v3186 = vpop.f32.mrb[0].mxu0
    %v3187 = vadd.f32 %v2647, %v3186
    %v3188 = vpop.f32.mrb[0].mxu0
    %3189 = vmatprep.mubr.f32.mxu0 0.0
    %v3190 = vand.u32 %v1124, 4294901760
    %v3191 = vsub.f32 %v1124, %v3190
    %v3192 = vand.u32 %v3191, 4294901760
    %3193 = vmatmul.mubr.f32.gmra.mrb[0].mxu0 %v3192
    %v3194 = vpop.f32.mrb[0].mxu0
    %v3195 = vadd.f32 %v2654, %v3194
    %v3196 = vpop.f32.mrb[0].mxu0
    %3197 = vmatprep.mubr.f32.mxu0 0.0
    %v3198 = vand.u32 %v1127, 4294901760
    %v3199 = vsub.f32 %v1127, %v3198
    %v3200 = vand.u32 %v3199, 4294901760
    %3201 = vmatmul.mubr.f32.gmra.mrb[0].mxu0 %v3200
    %v3202 = vpop.f32.mrb[0].mxu0
    %v3203 = vadd.f32 %v2661, %v3202
    %v3204 = vpop.f32.mrb[0].mxu0
    %3205 = vmatprep.mubr.f32.mxu0 0.0
    %v3206 = vand.u32 %v1130, 4294901760
    %v3207 = vsub.f32 %v1130, %v3206
    %v3208 = vand.u32 %v3207, 4294901760
    %3209 = vmatmul.mubr.f32.gmra.mrb[0].mxu0 %v3208
    %v3210 = vpop.f32.mrb[0].mxu0
    %v3211 = vadd.f32 %v2668, %v3210
    %v3212 = vpop.f32.mrb[0].mxu0
    %3213 = vmatprep.mubr.f32.mxu0 0.0
    %v3214 = vand.u32 %v1133, 4294901760
    %v3215 = vsub.f32 %v1133, %v3214
    %v3216 = vand.u32 %v3215, 4294901760
    %3217 = vmatmul.mubr.f32.gmra.mrb[0].mxu0 %v3216
    %v3218 = vpop.f32.mrb[0].mxu0
    %v3219 = vadd.f32 %v2675, %v3218
    %v3220 = vpop.f32.mrb[0].mxu0
    %3221 = vmatprep.mubr.f32.mxu0 0.0
    %v3222 = vand.u32 %v1136, 4294901760
    %v3223 = vsub.f32 %v1136, %v3222
    %v3224 = vand.u32 %v3223, 4294901760
    %3225 = vmatmul.mubr.f32.gmra.mrb[0].mxu0 %v3224
    %v3226 = vpop.f32.mrb[0].mxu0
    %v3227 = vadd.f32 %v2682, %v3226
    %v3228 = vpop.f32.mrb[0].mxu0
    %3229 = vmatprep.mubr.f32.mxu0 0.0
    %v3230 = vand.u32 %v1139, 4294901760
    %v3231 = vsub.f32 %v1139, %v3230
    %v3232 = vand.u32 %v3231, 4294901760
    %3233 = vmatmul.mubr.f32.gmra.mrb[0].mxu0 %v3232
    %v3234 = vpop.f32.mrb[0].mxu0
    %v3235 = vadd.f32 %v2689, %v3234
    %v3236 = vpop.f32.mrb[0].mxu0
    %3237 = vmatprep.mubr.f32.mxu0 0.0
    %v3238 = vand.u32 %v1142, 4294901760
    %v3239 = vsub.f32 %v1142, %v3238
    %v3240 = vand.u32 %v3239, 4294901760
    %3241 = vmatmul.mubr.f32.gmra.mrb[0].mxu0 %v3240
    %v3242 = vpop.f32.mrb[0].mxu0
    %v3243 = vadd.f32 %v2696, %v3242
    %v3244 = vpop.f32.mrb[0].mxu0
    %3245 = vmatprep.mubr.f32.mxu0 0.0
    %v3246 = vand.u32 %v1145, 4294901760
    %v3247 = vsub.f32 %v1145, %v3246
    %v3248 = vand.u32 %v3247, 4294901760
    %3249 = vmatmul.mubr.f32.gmra.mrb[0].mxu0 %v3248
    %v3250 = vpop.f32.mrb[0].mxu0
    %v3251 = vadd.f32 %v2703, %v3250
    %v3252 = vpop.f32.mrb[0].mxu0
    %3253 = vmatprep.mubr.f32.mxu0 0.0
    %v3254 = vand.u32 %v1148, 4294901760
    %v3255 = vsub.f32 %v1148, %v3254
    %v3256 = vand.u32 %v3255, 4294901760
    %3257 = vmatmul.mubr.f32.gmra.mrb[0].mxu0 %v3256
    %v3258 = vpop.f32.mrb[0].mxu0
    %v3259 = vadd.f32 %v2710, %v3258
    %v3260 = vpop.f32.mrb[0].mxu0
    %3261 = vmatprep.mubr.f32.mxu0 0.0
    %v3262 = vand.u32 %v1151, 4294901760
    %v3263 = vsub.f32 %v1151, %v3262
    %v3264 = vand.u32 %v3263, 4294901760
    %3265 = vmatmul.mubr.f32.gmra.mrb[0].mxu0 %v3264
    %v3266 = vpop.f32.mrb[0].mxu0
    %v3267 = vadd.f32 %v2717, %v3266
    %v3268 = vpop.f32.mrb[0].mxu0
    %3269 = vmatprep.mubr.f32.mxu0 0.0
    %v3270 = vand.u32 %v1154, 4294901760
    %v3271 = vsub.f32 %v1154, %v3270
    %v3272 = vand.u32 %v3271, 4294901760
    %3273 = vmatmul.mubr.f32.gmra.mrb[0].mxu0 %v3272
    %v3274 = vpop.f32.mrb[0].mxu0
    %v3275 = vadd.f32 %v2724, %v3274
    %v3276 = vpop.f32.mrb[0].mxu0
    %3277 = vmatprep.mubr.f32.mxu0 0.0
    %v3278 = vand.u32 %v1157, 4294901760
    %v3279 = vsub.f32 %v1157, %v3278
    %v3280 = vand.u32 %v3279, 4294901760
    %3281 = vmatmul.mubr.f32.gmra.mrb[0].mxu0 %v3280
    %v3282 = vpop.f32.mrb[0].mxu0
    %v3283 = vadd.f32 %v2731, %v3282
    %v3284 = vpop.f32.mrb[0].mxu0
    %3285 = vmatprep.mubr.f32.mxu0 0.0
    %v3286 = vand.u32 %v1160, 4294901760
    %v3287 = vsub.f32 %v1160, %v3286
    %v3288 = vand.u32 %v3287, 4294901760
    %3289 = vmatmul.mubr.f32.gmra.mrb[0].mxu0 %v3288
    %v3290 = vpop.f32.mrb[0].mxu0
    %v3291 = vadd.f32 %v2738, %v3290
    %v3292 = vpop.f32.mrb[0].mxu0
    %3293 = vmatprep.mubr.f32.mxu0 0.0
    %v3294 = vand.u32 %v1163, 4294901760
    %v3295 = vsub.f32 %v1163, %v3294
    %v3296 = vand.u32 %v3295, 4294901760
    %3297 = vmatmul.mubr.f32.gmra.mrb[0].mxu0 %v3296
    %v3298 = vpop.f32.mrb[0].mxu0
    %v3299 = vadd.f32 %v2745, %v3298
    %v3300 = vpop.f32.mrb[0].mxu0
    %3301 = vmatprep.mubr.f32.mxu0 0.0
    %v3302 = vand.u32 %v1166, 4294901760
    %v3303 = vsub.f32 %v1166, %v3302
    %v3304 = vand.u32 %v3303, 4294901760
    %3305 = vmatmul.mubr.f32.gmra.mrb[0].mxu0 %v3304
    %v3306 = vpop.f32.mrb[0].mxu0
    %v3307 = vadd.f32 %v2752, %v3306
    %v3308 = vpop.f32.mrb[0].mxu0
    %3309 = vmatprep.mubr.f32.mxu0 0.0
    %v3310 = vand.u32 %v1169, 4294901760
    %v3311 = vsub.f32 %v1169, %v3310
    %v3312 = vand.u32 %v3311, 4294901760
    %3313 = vmatmul.mubr.f32.gmra.mrb[0].mxu0 %v3312
    %v3314 = vpop.f32.mrb[0].mxu0
    %v3315 = vadd.f32 %v2759, %v3314
    %v3316 = vpop.f32.mrb[0].mxu0
    %3317 = vmatprep.mubr.f32.mxu0 0.0
    %v3318 = vand.u32 %v1172, 4294901760
    %v3319 = vsub.f32 %v1172, %v3318
    %v3320 = vand.u32 %v3319, 4294901760
    %3321 = vmatmul.mubr.f32.gmra.mrb[0].mxu0 %v3320
    %v3322 = vpop.f32.mrb[0].mxu0
    %v3323 = vadd.f32 %v2766, %v3322
    %v3324 = vpop.f32.mrb[0].mxu0
    %3325 = vmatprep.mubr.f32.mxu0 0.0
    %v3326 = vand.u32 %v1175, 4294901760
    %v3327 = vsub.f32 %v1175, %v3326
    %v3328 = vand.u32 %v3327, 4294901760
    %3329 = vmatmul.mubr.f32.gmra.mrb[0].mxu0 %v3328
    %v3330 = vpop.f32.mrb[0].mxu0
    %v3331 = vadd.f32 %v2773, %v3330
    %v3332 = vpop.f32.mrb[0].mxu0
    %3333 = vmatprep.mubr.f32.mxu0 0.0
    %v3334 = vand.u32 %v1178, 4294901760
    %v3335 = vsub.f32 %v1178, %v3334
    %v3336 = vand.u32 %v3335, 4294901760
    %3337 = vmatmul.mubr.f32.gmra.mrb[0].mxu0 %v3336
    %v3338 = vpop.f32.mrb[0].mxu0
    %v3339 = vadd.f32 %v2780, %v3338
    %v3340 = vpop.f32.mrb[0].mxu0
    %3341 = vmatprep.mubr.f32.mxu0 0.0
    %v3342 = vand.u32 %v1181, 4294901760
    %v3343 = vsub.f32 %v1181, %v3342
    %v3344 = vand.u32 %v3343, 4294901760
    %3345 = vmatmul.mubr.f32.gmra.mrb[0].mxu0 %v3344
    %v3346 = vpop.f32.mrb[0].mxu0
    %v3347 = vadd.f32 %v2787, %v3346
    %v3348 = vpop.f32.mrb[0].mxu0
    %3349 = vmatprep.mubr.f32.mxu0 0.0
    %v3350 = vand.u32 %v1184, 4294901760
    %v3351 = vsub.f32 %v1184, %v3350
    %v3352 = vand.u32 %v3351, 4294901760
    %3353 = vmatmul.mubr.f32.gmra.mrb[0].mxu0 %v3352
    %v3354 = vpop.f32.mrb[0].mxu0
    %v3355 = vadd.f32 %v2794, %v3354
    %v3356 = vpop.f32.mrb[0].mxu0
    %3357 = vmatprep.mubr.f32.mxu0 0.0
    %v3358 = vand.u32 %v1187, 4294901760
    %v3359 = vsub.f32 %v1187, %v3358
    %v3360 = vand.u32 %v3359, 4294901760
    %3361 = vmatmul.mubr.f32.gmra.mrb[0].mxu0 %v3360
    %v3362 = vpop.f32.mrb[0].mxu0
    %v3363 = vadd.f32 %v2801, %v3362
    %v3364 = vpop.f32.mrb[0].mxu0
    %3365 = vmatprep.mubr.f32.mxu0 0.0
    %v3366 = vand.u32 %v1190, 4294901760
    %v3367 = vsub.f32 %v1190, %v3366
    %v3368 = vand.u32 %v3367, 4294901760
    %3369 = vmatmul.mubr.f32.gmra.mrb[0].mxu0 %v3368
    %v3370 = vpop.f32.mrb[0].mxu0
    %v3371 = vadd.f32 %v2808, %v3370
    %v3372 = vpop.f32.mrb[0].mxu0
    %3373 = vmatprep.mubr.f32.mxu0 0.0
    %v3374 = vand.u32 %v1193, 4294901760
    %v3375 = vsub.f32 %v1193, %v3374
    %v3376 = vand.u32 %v3375, 4294901760
    %3377 = vmatmul.mubr.f32.gmra.mrb[0].mxu0 %v3376
    %v3378 = vpop.f32.mrb[0].mxu0
    %v3379 = vadd.f32 %v2815, %v3378
    %v3380 = vpop.f32.mrb[0].mxu0
    %3381 = vmatprep.mubr.f32.mxu0 0.0
    %v3382 = vand.u32 %v1196, 4294901760
    %v3383 = vsub.f32 %v1196, %v3382
    %v3384 = vand.u32 %v3383, 4294901760
    %3385 = vmatmul.mubr.f32.gmra.mrb[0].mxu0 %v3384
    %v3386 = vpop.f32.mrb[0].mxu0
    %v3387 = vadd.f32 %v2822, %v3386
    %v3388 = vpop.f32.mrb[0].mxu0
    %3389 = vmatprep.mubr.f32.mxu0 0.0
    %v3390 = vand.u32 %v1199, 4294901760
    %v3391 = vsub.f32 %v1199, %v3390
    %v3392 = vand.u32 %v3391, 4294901760
    %3393 = vmatmul.mubr.f32.gmra.mrb[0].mxu0 %v3392
    %v3394 = vpop.f32.mrb[0].mxu0
    %v3395 = vadd.f32 %v2829, %v3394
    %v3396 = vpop.f32.mrb[0].mxu0
    %3397 = vmatprep.mubr.f32.mxu0 0.0
    %v3398 = vand.u32 %v1202, 4294901760
    %v3399 = vsub.f32 %v1202, %v3398
    %v3400 = vand.u32 %v3399, 4294901760
    %3401 = vmatmul.mubr.f32.gmra.mrb[0].mxu0 %v3400
    %v3402 = vpop.f32.mrb[0].mxu0
    %v3403 = vadd.f32 %v2836, %v3402
    %v3404 = vpop.f32.mrb[0].mxu0
    %3405 = vmatprep.mubr.f32.mxu0 0.0
    %v3406 = vand.u32 %v1205, 4294901760
    %v3407 = vsub.f32 %v1205, %v3406
    %v3408 = vand.u32 %v3407, 4294901760
    %3409 = vmatmul.mubr.f32.gmra.mrb[0].mxu0 %v3408
    %v3410 = vpop.f32.mrb[0].mxu0
    %v3411 = vadd.f32 %v2843, %v3410
    %v3412 = vpop.f32.mrb[0].mxu0
    %3413 = vmatprep.mubr.f32.mxu0 0.0
    %v3414 = vand.u32 %v1208, 4294901760
    %v3415 = vsub.f32 %v1208, %v3414
    %v3416 = vand.u32 %v3415, 4294901760
    %3417 = vmatmul.mubr.f32.gmra.mrb[0].mxu0 %v3416
    %v3418 = vpop.f32.mrb[0].mxu0
    %v3419 = vadd.f32 %v2850, %v3418
    %v3420 = vpop.f32.mrb[0].mxu0
    %3421 = vmatprep.mubr.f32.mxu0 0.0
    %v3422 = vand.u32 %v1211, 4294901760
    %v3423 = vsub.f32 %v1211, %v3422
    %v3424 = vand.u32 %v3423, 4294901760
    %3425 = vmatmul.mubr.f32.gmra.mrb[0].mxu0 %v3424
    %v3426 = vpop.f32.mrb[0].mxu0
    %v3427 = vadd.f32 %v2857, %v3426
    %v3428 = vpop.f32.mrb[0].mxu0
    %3429 = vmatprep.mubr.f32.mxu0 0.0
    %v3430 = vand.u32 %v1214, 4294901760
    %v3431 = vsub.f32 %v1214, %v3430
    %v3432 = vand.u32 %v3431, 4294901760
    %3433 = vmatmul.mubr.f32.gmra.mrb[0].mxu0 %v3432
    %v3434 = vpop.f32.mrb[0].mxu0
    %v3435 = vadd.f32 %v2864, %v3434
    %v3436 = vpop.f32.mrb[0].mxu0
    %3437 = vmatprep.mubr.f32.mxu0 0.0
    %v3438 = vand.u32 %v1217, 4294901760
    %v3439 = vsub.f32 %v1217, %v3438
    %v3440 = vand.u32 %v3439, 4294901760
    %3441 = vmatmul.mubr.f32.gmra.mrb[0].mxu0 %v3440
    %v3442 = vpop.f32.mrb[0].mxu0
    %v3443 = vadd.f32 %v2871, %v3442
    %v3444 = vpop.f32.mrb[0].mxu0
    %3445 = vmatprep.mubr.f32.mxu0 0.0
    %v3446 = vand.u32 %v1220, 4294901760
    %v3447 = vsub.f32 %v1220, %v3446
    %v3448 = vand.u32 %v3447, 4294901760
    %3449 = vmatmul.mubr.f32.gmra.mrb[0].mxu0 %v3448
    %v3450 = vpop.f32.mrb[0].mxu0
    %v3451 = vadd.f32 %v2878, %v3450
    %v3452 = vpop.f32.mrb[0].mxu0
    %3453 = vmatprep.mubr.f32.mxu0 0.0
    %v3454 = vand.u32 %v1223, 4294901760
    %v3455 = vsub.f32 %v1223, %v3454
    %v3456 = vand.u32 %v3455, 4294901760
    %3457 = vmatmul.mubr.f32.gmra.mrb[0].mxu0 %v3456
    %v3458 = vpop.f32.mrb[0].mxu0
    %v3459 = vadd.f32 %v2885, %v3458
    %v3460 = vpop.f32.mrb[0].mxu0
    %3461 = vmatprep.mubr.f32.mxu0 0.0
    %v3462 = vand.u32 %v1226, 4294901760
    %v3463 = vsub.f32 %v1226, %v3462
    %v3464 = vand.u32 %v3463, 4294901760
    %3465 = vmatmul.mubr.f32.gmra.mrb[0].mxu0 %v3464
    %v3466 = vpop.f32.mrb[0].mxu0
    %v3467 = vadd.f32 %v2892, %v3466
    %v3468 = vpop.f32.mrb[0].mxu0
    %3469 = vmatprep.mubr.f32.mxu0 0.0
    %v3470 = vand.u32 %v1229, 4294901760
    %v3471 = vsub.f32 %v1229, %v3470
    %v3472 = vand.u32 %v3471, 4294901760
    %3473 = vmatmul.mubr.f32.gmra.mrb[0].mxu0 %v3472
    %v3474 = vpop.f32.mrb[0].mxu0
    %v3475 = vadd.f32 %v2899, %v3474
    %v3476 = vpop.f32.mrb[0].mxu0
    %3477 = vmatprep.mubr.f32.mxu0 0.0
    %v3478 = vand.u32 %v1232, 4294901760
    %v3479 = vsub.f32 %v1232, %v3478
    %v3480 = vand.u32 %v3479, 4294901760
    %3481 = vmatmul.mubr.f32.gmra.mrb[0].mxu0 %v3480
    %v3482 = vpop.f32.mrb[0].mxu0
    %v3483 = vadd.f32 %v2906, %v3482
    %v3484 = vpop.f32.mrb[0].mxu0
    %3485 = vmatprep.mubr.f32.mxu0 0.0
    %v3486 = vand.u32 %v1235, 4294901760
    %v3487 = vsub.f32 %v1235, %v3486
    %v3488 = vand.u32 %v3487, 4294901760
    %3489 = vmatmul.mubr.f32.gmra.mrb[0].mxu0 %v3488
    %v3490 = vpop.f32.mrb[0].mxu0
    %v3491 = vadd.f32 %v2913, %v3490
    %v3492 = vpop.f32.mrb[0].mxu0
    %3493 = vmatprep.mubr.f32.mxu0 0.0
    %v3494 = vand.u32 %v1238, 4294901760
    %v3495 = vsub.f32 %v1238, %v3494
    %v3496 = vand.u32 %v3495, 4294901760
    %3497 = vmatmul.mubr.f32.gmra.mrb[0].mxu0 %v3496
    %v3498 = vpop.f32.mrb[0].mxu0
    %v3499 = vadd.f32 %v2920, %v3498
    %v3500 = vpop.f32.mrb[0].mxu0
    %3501 = vdwg.mxu0
    %3502 = vmatprep.subr.mxu0 0.0
    %v3503 = vand.u32 %v1045, 4294901760
    %v3504 = vsub.f32 %v1045, %v3503
    %v3505 = vand.u32 %v3504, 4294901760
    %3506 = vmatpush1.msra.mxu0 %v3505
    %3507 = vmatprep.subr.mxu0 0.0
    %v3508 = vand.u32 %v1046, 4294901760
    %v3509 = vsub.f32 %v1046, %v3508
    %v3510 = vand.u32 %v3509, 4294901760
    %3511 = vmatpush1.msra.mxu0 %v3510
    %3512 = vmatprep.subr.mxu0 0.0
    %3513 = vmatpush1.msra.mxu0 0.0
    %3514 = vmatprep.subr.mxu0 0.0
    %3515 = vmatpush1.msra.mxu0 0.0
    %3516 = vmatprep.subr.mxu0 0.0
    %3517 = vmatpush1.msra.mxu0 0.0
    %3518 = vmatprep.subr.mxu0 0.0
    %3519 = vmatpush1.msra.mxu0 0.0
    %3520 = vmatprep.subr.mxu0 0.0
    %3521 = vmatpush1.msra.mxu0 0.0
    %3522 = vmatprep.subr.mxu0 0.0
    %3523 = vmatpush1.msra.mxu0 0.0
    %3524 = vmatprep.subr.mxu0 0.0
    %3525 = vmatpush1.msra.mxu0 0.0
    %3526 = vmatprep.subr.mxu0 0.0
    %3527 = vmatpush1.msra.mxu0 0.0
    %3528 = vmatprep.subr.mxu0 0.0
    %3529 = vmatpush1.msra.mxu0 0.0
    %3530 = vmatprep.subr.mxu0 0.0
    %3531 = vmatpush1.msra.mxu0 0.0
    %3532 = vmatprep.subr.mxu0 0.0
    %3533 = vmatpush1.msra.mxu0 0.0
    %3534 = vmatprep.subr.mxu0 0.0
    %3535 = vmatpush1.msra.mxu0 0.0
    %3536 = vmatprep.subr.mxu0 0.0
    %3537 = vmatpush1.msra.mxu0 0.0
    %3538 = vmatprep.subr.mxu0 0.0
    %3539 = vmatpush1.msra.mxu0 0.0
    %3540 = vmatprep.subr.mxu0 0.0
    %3541 = vmatpush1.msra.mxu0 0.0
    %3542 = vmatprep.subr.mxu0 0.0
    %3543 = vmatpush1.msra.mxu0 0.0
    %3544 = vmatprep.subr.mxu0 0.0
    %3545 = vmatpush1.msra.mxu0 0.0
    %3546 = vmatprep.subr.mxu0 0.0
    %3547 = vmatpush1.msra.mxu0 0.0
    %3548 = vmatprep.subr.mxu0 0.0
    %3549 = vmatpush1.msra.mxu0 0.0
    %3550 = vmatprep.subr.mxu0 0.0
    %3551 = vmatpush1.msra.mxu0 0.0
    %3552 = vmatprep.subr.mxu0 0.0
    %3553 = vmatpush1.msra.mxu0 0.0
    %3554 = vmatprep.subr.mxu0 0.0
    %3555 = vmatpush1.msra.mxu0 0.0
    %3556 = vmatprep.subr.mxu0 0.0
    %3557 = vmatpush1.msra.mxu0 0.0
    %3558 = vmatprep.subr.mxu0 0.0
    %3559 = vmatpush1.msra.mxu0 0.0
    %3560 = vmatprep.subr.mxu0 0.0
    %3561 = vmatpush1.msra.mxu0 0.0
    %3562 = vmatprep.subr.mxu0 0.0
    %3563 = vmatpush1.msra.mxu0 0.0
    %3564 = vmatprep.subr.mxu0 0.0
    %3565 = vmatpush1.msra.mxu0 0.0
    %3566 = vmatprep.subr.mxu0 0.0
    %3567 = vmatpush1.msra.mxu0 0.0
    %3568 = vmatprep.subr.mxu0 0.0
    %3569 = vmatpush1.msra.mxu0 0.0
    %3570 = vmatprep.subr.mxu0 0.0
    %3571 = vmatpush1.msra.mxu0 0.0
    %3572 = vmatprep.mubr.f32.mxu0 0.0
    %v3573 = vand.u32 %v1049, 4294901760
    %3574 = vmatmul.mubr.f32.gmra.mrb[0].mxu0 %v3573
    %v3575 = vpop.f32.mrb[0].mxu0
    %v3576 = vadd.f32 %v2995, %v3575
    %v3577 = vpop.f32.mrb[0].mxu0
    %3578 = vmatprep.mubr.f32.mxu0 0.0
    %v3579 = vand.u32 %v1052, 4294901760
    %3580 = vmatmul.mubr.f32.gmra.mrb[0].mxu0 %v3579
    %v3581 = vpop.f32.mrb[0].mxu0
    %v3582 = vadd.f32 %v3003, %v3581
    %v3583 = vpop.f32.mrb[0].mxu0
    %3584 = vmatprep.mubr.f32.mxu0 0.0
    %v3585 = vand.u32 %v1055, 4294901760
    %3586 = vmatmul.mubr.f32.gmra.mrb[0].mxu0 %v3585
    %v3587 = vpop.f32.mrb[0].mxu0
    %v3588 = vadd.f32 %v3011, %v3587
    %v3589 = vpop.f32.mrb[0].mxu0
    %3590 = vmatprep.mubr.f32.mxu0 0.0
    %v3591 = vand.u32 %v1058, 4294901760
    %3592 = vmatmul.mubr.f32.gmra.mrb[0].mxu0 %v3591
    %v3593 = vpop.f32.mrb[0].mxu0
    %v3594 = vadd.f32 %v3019, %v3593
    %v3595 = vpop.f32.mrb[0].mxu0
    %3596 = vmatprep.mubr.f32.mxu0 0.0
    %v3597 = vand.u32 %v1061, 4294901760
    %3598 = vmatmul.mubr.f32.gmra.mrb[0].mxu0 %v3597
    %v3599 = vpop.f32.mrb[0].mxu0
    %v3600 = vadd.f32 %v3027, %v3599
    %v3601 = vpop.f32.mrb[0].mxu0
    %3602 = vmatprep.mubr.f32.mxu0 0.0
    %v3603 = vand.u32 %v1064, 4294901760
    %3604 = vmatmul.mubr.f32.gmra.mrb[0].mxu0 %v3603
    %v3605 = vpop.f32.mrb[0].mxu0
    %v3606 = vadd.f32 %v3035, %v3605
    %v3607 = vpop.f32.mrb[0].mxu0
    %3608 = vmatprep.mubr.f32.mxu0 0.0
    %v3609 = vand.u32 %v1067, 4294901760
    %3610 = vmatmul.mubr.f32.gmra.mrb[0].mxu0 %v3609
    %v3611 = vpop.f32.mrb[0].mxu0
    %v3612 = vadd.f32 %v3043, %v3611
    %v3613 = vpop.f32.mrb[0].mxu0
    %3614 = vmatprep.mubr.f32.mxu0 0.0
    %v3615 = vand.u32 %v1070, 4294901760
    %3616 = vmatmul.mubr.f32.gmra.mrb[0].mxu0 %v3615
    %v3617 = vpop.f32.mrb[0].mxu0
    %v3618 = vadd.f32 %v3051, %v3617
    %v3619 = vpop.f32.mrb[0].mxu0
    %3620 = vmatprep.mubr.f32.mxu0 0.0
    %v3621 = vand.u32 %v1073, 4294901760
    %3622 = vmatmul.mubr.f32.gmra.mrb[0].mxu0 %v3621
    %v3623 = vpop.f32.mrb[0].mxu0
    %v3624 = vadd.f32 %v3059, %v3623
    %v3625 = vpop.f32.mrb[0].mxu0
    %3626 = vmatprep.mubr.f32.mxu0 0.0
    %v3627 = vand.u32 %v1076, 4294901760
    %3628 = vmatmul.mubr.f32.gmra.mrb[0].mxu0 %v3627
    %v3629 = vpop.f32.mrb[0].mxu0
    %v3630 = vadd.f32 %v3067, %v3629
    %v3631 = vpop.f32.mrb[0].mxu0
    %3632 = vmatprep.mubr.f32.mxu0 0.0
    %v3633 = vand.u32 %v1079, 4294901760
    %3634 = vmatmul.mubr.f32.gmra.mrb[0].mxu0 %v3633
    %v3635 = vpop.f32.mrb[0].mxu0
    %v3636 = vadd.f32 %v3075, %v3635
    %v3637 = vpop.f32.mrb[0].mxu0
    %3638 = vmatprep.mubr.f32.mxu0 0.0
    %v3639 = vand.u32 %v1082, 4294901760
    %3640 = vmatmul.mubr.f32.gmra.mrb[0].mxu0 %v3639
    %v3641 = vpop.f32.mrb[0].mxu0
    %v3642 = vadd.f32 %v3083, %v3641
    %v3643 = vpop.f32.mrb[0].mxu0
    %3644 = vmatprep.mubr.f32.mxu0 0.0
    %v3645 = vand.u32 %v1085, 4294901760
    %3646 = vmatmul.mubr.f32.gmra.mrb[0].mxu0 %v3645
    %v3647 = vpop.f32.mrb[0].mxu0
    %v3648 = vadd.f32 %v3091, %v3647
    %v3649 = vpop.f32.mrb[0].mxu0
    %3650 = vmatprep.mubr.f32.mxu0 0.0
    %v3651 = vand.u32 %v1088, 4294901760
    %3652 = vmatmul.mubr.f32.gmra.mrb[0].mxu0 %v3651
    %v3653 = vpop.f32.mrb[0].mxu0
    %v3654 = vadd.f32 %v3099, %v3653
    %v3655 = vpop.f32.mrb[0].mxu0
    %3656 = vmatprep.mubr.f32.mxu0 0.0
    %v3657 = vand.u32 %v1091, 4294901760
    %3658 = vmatmul.mubr.f32.gmra.mrb[0].mxu0 %v3657
    %v3659 = vpop.f32.mrb[0].mxu0
    %v3660 = vadd.f32 %v3107, %v3659
    %v3661 = vpop.f32.mrb[0].mxu0
    %3662 = vmatprep.mubr.f32.mxu0 0.0
    %v3663 = vand.u32 %v1094, 4294901760
    %3664 = vmatmul.mubr.f32.gmra.mrb[0].mxu0 %v3663
    %v3665 = vpop.f32.mrb[0].mxu0
    %v3666 = vadd.f32 %v3115, %v3665
    %v3667 = vpop.f32.mrb[0].mxu0
    %3668 = vmatprep.mubr.f32.mxu0 0.0
    %v3669 = vand.u32 %v1097, 4294901760
    %3670 = vmatmul.mubr.f32.gmra.mrb[0].mxu0 %v3669
    %v3671 = vpop.f32.mrb[0].mxu0
    %v3672 = vadd.f32 %v3123, %v3671
    %v3673 = vpop.f32.mrb[0].mxu0
    %3674 = vmatprep.mubr.f32.mxu0 0.0
    %v3675 = vand.u32 %v1100, 4294901760
    %3676 = vmatmul.mubr.f32.gmra.mrb[0].mxu0 %v3675
    %v3677 = vpop.f32.mrb[0].mxu0
    %v3678 = vadd.f32 %v3131, %v3677
    %v3679 = vpop.f32.mrb[0].mxu0
    %3680 = vmatprep.mubr.f32.mxu0 0.0
    %v3681 = vand.u32 %v1103, 4294901760
    %3682 = vmatmul.mubr.f32.gmra.mrb[0].mxu0 %v3681
    %v3683 = vpop.f32.mrb[0].mxu0
    %v3684 = vadd.f32 %v3139, %v3683
    %v3685 = vpop.f32.mrb[0].mxu0
    %3686 = vmatprep.mubr.f32.mxu0 0.0
    %v3687 = vand.u32 %v1106, 4294901760
    %3688 = vmatmul.mubr.f32.gmra.mrb[0].mxu0 %v3687
    %v3689 = vpop.f32.mrb[0].mxu0
    %v3690 = vadd.f32 %v3147, %v3689
    %v3691 = vpop.f32.mrb[0].mxu0
    %3692 = vmatprep.mubr.f32.mxu0 0.0
    %v3693 = vand.u32 %v1109, 4294901760
    %3694 = vmatmul.mubr.f32.gmra.mrb[0].mxu0 %v3693
    %v3695 = vpop.f32.mrb[0].mxu0
    %v3696 = vadd.f32 %v3155, %v3695
    %v3697 = vpop.f32.mrb[0].mxu0
    %3698 = vmatprep.mubr.f32.mxu0 0.0
    %v3699 = vand.u32 %v1112, 4294901760
    %3700 = vmatmul.mubr.f32.gmra.mrb[0].mxu0 %v3699
    %v3701 = vpop.f32.mrb[0].mxu0
    %v3702 = vadd.f32 %v3163, %v3701
    %v3703 = vpop.f32.mrb[0].mxu0
    %3704 = vmatprep.mubr.f32.mxu0 0.0
    %v3705 = vand.u32 %v1115, 4294901760
    %3706 = vmatmul.mubr.f32.gmra.mrb[0].mxu0 %v3705
    %v3707 = vpop.f32.mrb[0].mxu0
    %v3708 = vadd.f32 %v3171, %v3707
    %v3709 = vpop.f32.mrb[0].mxu0
    %3710 = vmatprep.mubr.f32.mxu0 0.0
    %v3711 = vand.u32 %v1118, 4294901760
    %3712 = vmatmul.mubr.f32.gmra.mrb[0].mxu0 %v3711
    %v3713 = vpop.f32.mrb[0].mxu0
    %v3714 = vadd.f32 %v3179, %v3713
    %v3715 = vpop.f32.mrb[0].mxu0
    %3716 = vmatprep.mubr.f32.mxu0 0.0
    %v3717 = vand.u32 %v1121, 4294901760
    %3718 = vmatmul.mubr.f32.gmra.mrb[0].mxu0 %v3717
    %v3719 = vpop.f32.mrb[0].mxu0
    %v3720 = vadd.f32 %v3187, %v3719
    %v3721 = vpop.f32.mrb[0].mxu0
    %3722 = vmatprep.mubr.f32.mxu0 0.0
    %v3723 = vand.u32 %v1124, 4294901760
    %3724 = vmatmul.mubr.f32.gmra.mrb[0].mxu0 %v3723
    %v3725 = vpop.f32.mrb[0].mxu0
    %v3726 = vadd.f32 %v3195, %v3725
    %v3727 = vpop.f32.mrb[0].mxu0
    %3728 = vmatprep.mubr.f32.mxu0 0.0
    %v3729 = vand.u32 %v1127, 4294901760
    %3730 = vmatmul.mubr.f32.gmra.mrb[0].mxu0 %v3729
    %v3731 = vpop.f32.mrb[0].mxu0
    %v3732 = vadd.f32 %v3203, %v3731
    %v3733 = vpop.f32.mrb[0].mxu0
    %3734 = vmatprep.mubr.f32.mxu0 0.0
    %v3735 = vand.u32 %v1130, 4294901760
    %3736 = vmatmul.mubr.f32.gmra.mrb[0].mxu0 %v3735
    %v3737 = vpop.f32.mrb[0].mxu0
    %v3738 = vadd.f32 %v3211, %v3737
    %v3739 = vpop.f32.mrb[0].mxu0
    %3740 = vmatprep.mubr.f32.mxu0 0.0
    %v3741 = vand.u32 %v1133, 4294901760
    %3742 = vmatmul.mubr.f32.gmra.mrb[0].mxu0 %v3741
    %v3743 = vpop.f32.mrb[0].mxu0
    %v3744 = vadd.f32 %v3219, %v3743
    %v3745 = vpop.f32.mrb[0].mxu0
    %3746 = vmatprep.mubr.f32.mxu0 0.0
    %v3747 = vand.u32 %v1136, 4294901760
    %3748 = vmatmul.mubr.f32.gmra.mrb[0].mxu0 %v3747
    %v3749 = vpop.f32.mrb[0].mxu0
    %v3750 = vadd.f32 %v3227, %v3749
    %v3751 = vpop.f32.mrb[0].mxu0
    %3752 = vmatprep.mubr.f32.mxu0 0.0
    %v3753 = vand.u32 %v1139, 4294901760
    %3754 = vmatmul.mubr.f32.gmra.mrb[0].mxu0 %v3753
    %v3755 = vpop.f32.mrb[0].mxu0
    %v3756 = vadd.f32 %v3235, %v3755
    %v3757 = vpop.f32.mrb[0].mxu0
    %3758 = vmatprep.mubr.f32.mxu0 0.0
    %v3759 = vand.u32 %v1142, 4294901760
    %3760 = vmatmul.mubr.f32.gmra.mrb[0].mxu0 %v3759
    %v3761 = vpop.f32.mrb[0].mxu0
    %v3762 = vadd.f32 %v3243, %v3761
    %v3763 = vpop.f32.mrb[0].mxu0
    %3764 = vmatprep.mubr.f32.mxu0 0.0
    %v3765 = vand.u32 %v1145, 4294901760
    %3766 = vmatmul.mubr.f32.gmra.mrb[0].mxu0 %v3765
    %v3767 = vpop.f32.mrb[0].mxu0
    %v3768 = vadd.f32 %v3251, %v3767
    %v3769 = vpop.f32.mrb[0].mxu0
    %3770 = vmatprep.mubr.f32.mxu0 0.0
    %v3771 = vand.u32 %v1148, 4294901760
    %3772 = vmatmul.mubr.f32.gmra.mrb[0].mxu0 %v3771
    %v3773 = vpop.f32.mrb[0].mxu0
    %v3774 = vadd.f32 %v3259, %v3773
    %v3775 = vpop.f32.mrb[0].mxu0
    %3776 = vmatprep.mubr.f32.mxu0 0.0
    %v3777 = vand.u32 %v1151, 4294901760
    %3778 = vmatmul.mubr.f32.gmra.mrb[0].mxu0 %v3777
    %v3779 = vpop.f32.mrb[0].mxu0
    %v3780 = vadd.f32 %v3267, %v3779
    %v3781 = vpop.f32.mrb[0].mxu0
    %3782 = vmatprep.mubr.f32.mxu0 0.0
    %v3783 = vand.u32 %v1154, 4294901760
    %3784 = vmatmul.mubr.f32.gmra.mrb[0].mxu0 %v3783
    %v3785 = vpop.f32.mrb[0].mxu0
    %v3786 = vadd.f32 %v3275, %v3785
    %v3787 = vpop.f32.mrb[0].mxu0
    %3788 = vmatprep.mubr.f32.mxu0 0.0
    %v3789 = vand.u32 %v1157, 4294901760
    %3790 = vmatmul.mubr.f32.gmra.mrb[0].mxu0 %v3789
    %v3791 = vpop.f32.mrb[0].mxu0
    %v3792 = vadd.f32 %v3283, %v3791
    %v3793 = vpop.f32.mrb[0].mxu0
    %3794 = vmatprep.mubr.f32.mxu0 0.0
    %v3795 = vand.u32 %v1160, 4294901760
    %3796 = vmatmul.mubr.f32.gmra.mrb[0].mxu0 %v3795
    %v3797 = vpop.f32.mrb[0].mxu0
    %v3798 = vadd.f32 %v3291, %v3797
    %v3799 = vpop.f32.mrb[0].mxu0
    %3800 = vmatprep.mubr.f32.mxu0 0.0
    %v3801 = vand.u32 %v1163, 4294901760
    %3802 = vmatmul.mubr.f32.gmra.mrb[0].mxu0 %v3801
    %v3803 = vpop.f32.mrb[0].mxu0
    %v3804 = vadd.f32 %v3299, %v3803
    %v3805 = vpop.f32.mrb[0].mxu0
    %3806 = vmatprep.mubr.f32.mxu0 0.0
    %v3807 = vand.u32 %v1166, 4294901760
    %3808 = vmatmul.mubr.f32.gmra.mrb[0].mxu0 %v3807
    %v3809 = vpop.f32.mrb[0].mxu0
    %v3810 = vadd.f32 %v3307, %v3809
    %v3811 = vpop.f32.mrb[0].mxu0
    %3812 = vmatprep.mubr.f32.mxu0 0.0
    %v3813 = vand.u32 %v1169, 4294901760
    %3814 = vmatmul.mubr.f32.gmra.mrb[0].mxu0 %v3813
    %v3815 = vpop.f32.mrb[0].mxu0
    %v3816 = vadd.f32 %v3315, %v3815
    %v3817 = vpop.f32.mrb[0].mxu0
    %3818 = vmatprep.mubr.f32.mxu0 0.0
    %v3819 = vand.u32 %v1172, 4294901760
    %3820 = vmatmul.mubr.f32.gmra.mrb[0].mxu0 %v3819
    %v3821 = vpop.f32.mrb[0].mxu0
    %v3822 = vadd.f32 %v3323, %v3821
    %v3823 = vpop.f32.mrb[0].mxu0
    %3824 = vmatprep.mubr.f32.mxu0 0.0
    %v3825 = vand.u32 %v1175, 4294901760
    %3826 = vmatmul.mubr.f32.gmra.mrb[0].mxu0 %v3825
    %v3827 = vpop.f32.mrb[0].mxu0
    %v3828 = vadd.f32 %v3331, %v3827
    %v3829 = vpop.f32.mrb[0].mxu0
    %3830 = vmatprep.mubr.f32.mxu0 0.0
    %v3831 = vand.u32 %v1178, 4294901760
    %3832 = vmatmul.mubr.f32.gmra.mrb[0].mxu0 %v3831
    %v3833 = vpop.f32.mrb[0].mxu0
    %v3834 = vadd.f32 %v3339, %v3833
    %v3835 = vpop.f32.mrb[0].mxu0
    %3836 = vmatprep.mubr.f32.mxu0 0.0
    %v3837 = vand.u32 %v1181, 4294901760
    %3838 = vmatmul.mubr.f32.gmra.mrb[0].mxu0 %v3837
    %v3839 = vpop.f32.mrb[0].mxu0
    %v3840 = vadd.f32 %v3347, %v3839
    %v3841 = vpop.f32.mrb[0].mxu0
    %3842 = vmatprep.mubr.f32.mxu0 0.0
    %v3843 = vand.u32 %v1184, 4294901760
    %3844 = vmatmul.mubr.f32.gmra.mrb[0].mxu0 %v3843
    %v3845 = vpop.f32.mrb[0].mxu0
    %v3846 = vadd.f32 %v3355, %v3845
    %v3847 = vpop.f32.mrb[0].mxu0
    %3848 = vmatprep.mubr.f32.mxu0 0.0
    %v3849 = vand.u32 %v1187, 4294901760
    %3850 = vmatmul.mubr.f32.gmra.mrb[0].mxu0 %v3849
    %v3851 = vpop.f32.mrb[0].mxu0
    %v3852 = vadd.f32 %v3363, %v3851
    %v3853 = vpop.f32.mrb[0].mxu0
    %3854 = vmatprep.mubr.f32.mxu0 0.0
    %v3855 = vand.u32 %v1190, 4294901760
    %3856 = vmatmul.mubr.f32.gmra.mrb[0].mxu0 %v3855
    %v3857 = vpop.f32.mrb[0].mxu0
    %v3858 = vadd.f32 %v3371, %v3857
    %v3859 = vpop.f32.mrb[0].mxu0
    %3860 = vmatprep.mubr.f32.mxu0 0.0
    %v3861 = vand.u32 %v1193, 4294901760
    %3862 = vmatmul.mubr.f32.gmra.mrb[0].mxu0 %v3861
    %v3863 = vpop.f32.mrb[0].mxu0
    %v3864 = vadd.f32 %v3379, %v3863
    %v3865 = vpop.f32.mrb[0].mxu0
    %3866 = vmatprep.mubr.f32.mxu0 0.0
    %v3867 = vand.u32 %v1196, 4294901760
    %3868 = vmatmul.mubr.f32.gmra.mrb[0].mxu0 %v3867
    %v3869 = vpop.f32.mrb[0].mxu0
    %v3870 = vadd.f32 %v3387, %v3869
    %v3871 = vpop.f32.mrb[0].mxu0
    %3872 = vmatprep.mubr.f32.mxu0 0.0
    %v3873 = vand.u32 %v1199, 4294901760
    %3874 = vmatmul.mubr.f32.gmra.mrb[0].mxu0 %v3873
    %v3875 = vpop.f32.mrb[0].mxu0
    %v3876 = vadd.f32 %v3395, %v3875
    %v3877 = vpop.f32.mrb[0].mxu0
    %3878 = vmatprep.mubr.f32.mxu0 0.0
    %v3879 = vand.u32 %v1202, 4294901760
    %3880 = vmatmul.mubr.f32.gmra.mrb[0].mxu0 %v3879
    %v3881 = vpop.f32.mrb[0].mxu0
    %v3882 = vadd.f32 %v3403, %v3881
    %v3883 = vpop.f32.mrb[0].mxu0
    %3884 = vmatprep.mubr.f32.mxu0 0.0
    %v3885 = vand.u32 %v1205, 4294901760
    %3886 = vmatmul.mubr.f32.gmra.mrb[0].mxu0 %v3885
    %v3887 = vpop.f32.mrb[0].mxu0
    %v3888 = vadd.f32 %v3411, %v3887
    %v3889 = vpop.f32.mrb[0].mxu0
    %3890 = vmatprep.mubr.f32.mxu0 0.0
    %v3891 = vand.u32 %v1208, 4294901760
    %3892 = vmatmul.mubr.f32.gmra.mrb[0].mxu0 %v3891
    %v3893 = vpop.f32.mrb[0].mxu0
    %v3894 = vadd.f32 %v3419, %v3893
    %v3895 = vpop.f32.mrb[0].mxu0
    %3896 = vmatprep.mubr.f32.mxu0 0.0
    %v3897 = vand.u32 %v1211, 4294901760
    %3898 = vmatmul.mubr.f32.gmra.mrb[0].mxu0 %v3897
    %v3899 = vpop.f32.mrb[0].mxu0
    %v3900 = vadd.f32 %v3427, %v3899
    %v3901 = vpop.f32.mrb[0].mxu0
    %3902 = vmatprep.mubr.f32.mxu0 0.0
    %v3903 = vand.u32 %v1214, 4294901760
    %3904 = vmatmul.mubr.f32.gmra.mrb[0].mxu0 %v3903
    %v3905 = vpop.f32.mrb[0].mxu0
    %v3906 = vadd.f32 %v3435, %v3905
    %v3907 = vpop.f32.mrb[0].mxu0
    %3908 = vmatprep.mubr.f32.mxu0 0.0
    %v3909 = vand.u32 %v1217, 4294901760
    %3910 = vmatmul.mubr.f32.gmra.mrb[0].mxu0 %v3909
    %v3911 = vpop.f32.mrb[0].mxu0
    %v3912 = vadd.f32 %v3443, %v3911
    %v3913 = vpop.f32.mrb[0].mxu0
    %3914 = vmatprep.mubr.f32.mxu0 0.0
    %v3915 = vand.u32 %v1220, 4294901760
    %3916 = vmatmul.mubr.f32.gmra.mrb[0].mxu0 %v3915
    %v3917 = vpop.f32.mrb[0].mxu0
    %v3918 = vadd.f32 %v3451, %v3917
    %v3919 = vpop.f32.mrb[0].mxu0
    %3920 = vmatprep.mubr.f32.mxu0 0.0
    %v3921 = vand.u32 %v1223, 4294901760
    %3922 = vmatmul.mubr.f32.gmra.mrb[0].mxu0 %v3921
    %v3923 = vpop.f32.mrb[0].mxu0
    %v3924 = vadd.f32 %v3459, %v3923
    %v3925 = vpop.f32.mrb[0].mxu0
    %3926 = vmatprep.mubr.f32.mxu0 0.0
    %v3927 = vand.u32 %v1226, 4294901760
    %3928 = vmatmul.mubr.f32.gmra.mrb[0].mxu0 %v3927
    %v3929 = vpop.f32.mrb[0].mxu0
    %v3930 = vadd.f32 %v3467, %v3929
    %v3931 = vpop.f32.mrb[0].mxu0
    %3932 = vmatprep.mubr.f32.mxu0 0.0
    %v3933 = vand.u32 %v1229, 4294901760
    %3934 = vmatmul.mubr.f32.gmra.mrb[0].mxu0 %v3933
    %v3935 = vpop.f32.mrb[0].mxu0
    %v3936 = vadd.f32 %v3475, %v3935
    %v3937 = vpop.f32.mrb[0].mxu0
    %3938 = vmatprep.mubr.f32.mxu0 0.0
    %v3939 = vand.u32 %v1232, 4294901760
    %3940 = vmatmul.mubr.f32.gmra.mrb[0].mxu0 %v3939
    %v3941 = vpop.f32.mrb[0].mxu0
    %v3942 = vadd.f32 %v3483, %v3941
    %v3943 = vpop.f32.mrb[0].mxu0
    %3944 = vmatprep.mubr.f32.mxu0 0.0
    %v3945 = vand.u32 %v1235, 4294901760
    %3946 = vmatmul.mubr.f32.gmra.mrb[0].mxu0 %v3945
    %v3947 = vpop.f32.mrb[0].mxu0
    %v3948 = vadd.f32 %v3491, %v3947
    %v3949 = vpop.f32.mrb[0].mxu0
    %3950 = vmatprep.mubr.f32.mxu0 0.0
    %v3951 = vand.u32 %v1238, 4294901760
    %3952 = vmatmul.mubr.f32.gmra.mrb[0].mxu0 %v3951
    %v3953 = vpop.f32.mrb[0].mxu0
    %v3954 = vadd.f32 %v3499, %v3953
    %v3955 = vpop.f32.mrb[0].mxu0
    %3956 = vdwg.mxu0
    %3957 = vmatprep.subr.mxu0 0.0
    %v3958 = vand.u32 %v1045, 4294901760
    %3959 = vmatpush1.msra.mxu0 %v3958
    %3960 = vmatprep.subr.mxu0 0.0
    %v3961 = vand.u32 %v1046, 4294901760
    %3962 = vmatpush1.msra.mxu0 %v3961
    %3963 = vmatprep.subr.mxu0 0.0
    %3964 = vmatpush1.msra.mxu0 0.0
    %3965 = vmatprep.subr.mxu0 0.0
    %3966 = vmatpush1.msra.mxu0 0.0
    %3967 = vmatprep.subr.mxu0 0.0
    %3968 = vmatpush1.msra.mxu0 0.0
    %3969 = vmatprep.subr.mxu0 0.0
    %3970 = vmatpush1.msra.mxu0 0.0
    %3971 = vmatprep.subr.mxu0 0.0
    %3972 = vmatpush1.msra.mxu0 0.0
    %3973 = vmatprep.subr.mxu0 0.0
    %3974 = vmatpush1.msra.mxu0 0.0
    %3975 = vmatprep.subr.mxu0 0.0
    %3976 = vmatpush1.msra.mxu0 0.0
    %3977 = vmatprep.subr.mxu0 0.0
    %3978 = vmatpush1.msra.mxu0 0.0
    %3979 = vmatprep.subr.mxu0 0.0
    %3980 = vmatpush1.msra.mxu0 0.0
    %3981 = vmatprep.subr.mxu0 0.0
    %3982 = vmatpush1.msra.mxu0 0.0
    %3983 = vmatprep.subr.mxu0 0.0
    %3984 = vmatpush1.msra.mxu0 0.0
    %3985 = vmatprep.subr.mxu0 0.0
    %3986 = vmatpush1.msra.mxu0 0.0
    %3987 = vmatprep.subr.mxu0 0.0
    %3988 = vmatpush1.msra.mxu0 0.0
    %3989 = vmatprep.subr.mxu0 0.0
    %3990 = vmatpush1.msra.mxu0 0.0
    %3991 = vmatprep.subr.mxu0 0.0
    %3992 = vmatpush1.msra.mxu0 0.0
    %3993 = vmatprep.subr.mxu0 0.0
    %3994 = vmatpush1.msra.mxu0 0.0
    %3995 = vmatprep.subr.mxu0 0.0
    %3996 = vmatpush1.msra.mxu0 0.0
    %3997 = vmatprep.subr.mxu0 0.0
    %3998 = vmatpush1.msra.mxu0 0.0
    %3999 = vmatprep.subr.mxu0 0.0
    %4000 = vmatpush1.msra.mxu0 0.0
    %4001 = vmatprep.subr.mxu0 0.0
    %4002 = vmatpush1.msra.mxu0 0.0
    %4003 = vmatprep.subr.mxu0 0.0
    %4004 = vmatpush1.msra.mxu0 0.0
    %4005 = vmatprep.subr.mxu0 0.0
    %4006 = vmatpush1.msra.mxu0 0.0
    %4007 = vmatprep.subr.mxu0 0.0
    %4008 = vmatpush1.msra.mxu0 0.0
    %4009 = vmatprep.subr.mxu0 0.0
    %4010 = vmatpush1.msra.mxu0 0.0
    %4011 = vmatprep.subr.mxu0 0.0
    %4012 = vmatpush1.msra.mxu0 0.0
    %4013 = vmatprep.subr.mxu0 0.0
    %4014 = vmatpush1.msra.mxu0 0.0
    %4015 = vmatprep.subr.mxu0 0.0
    %4016 = vmatpush1.msra.mxu0 0.0
    %4017 = vmatprep.subr.mxu0 0.0
    %4018 = vmatpush1.msra.mxu0 0.0
    %4019 = vmatprep.subr.mxu0 0.0
    %4020 = vmatpush1.msra.mxu0 0.0
    %4021 = vmatprep.subr.mxu0 0.0
    %4022 = vmatpush1.msra.mxu0 0.0
    %4023 = vmatprep.mubr.f32.mxu0 0.0
    %v4024 = vand.u32 %v1049, 4294901760
    %4025 = vmatmul.mubr.f32.gmra.mrb[0].mxu0 %v4024
    %v4026 = vpop.f32.mrb[0].mxu0
    %v4027 = vadd.f32 %v3576, %v4026
    %v4028 = vpop.f32.mrb[0].mxu0
    %4029 = vmatprep.mubr.f32.mxu0 0.0
    %v4030 = vand.u32 %v1052, 4294901760
    %4031 = vmatmul.mubr.f32.gmra.mrb[0].mxu0 %v4030
    %v4032 = vpop.f32.mrb[0].mxu0
    %v4033 = vadd.f32 %v3582, %v4032
    %v4034 = vpop.f32.mrb[0].mxu0
    %4035 = vmatprep.mubr.f32.mxu0 0.0
    %v4036 = vand.u32 %v1055, 4294901760
    %4037 = vmatmul.mubr.f32.gmra.mrb[0].mxu0 %v4036
    %v4038 = vpop.f32.mrb[0].mxu0
    %v4039 = vadd.f32 %v3588, %v4038
    %v4040 = vpop.f32.mrb[0].mxu0
    %4041 = vmatprep.mubr.f32.mxu0 0.0
    %v4042 = vand.u32 %v1058, 4294901760
    %4043 = vmatmul.mubr.f32.gmra.mrb[0].mxu0 %v4042
    %v4044 = vpop.f32.mrb[0].mxu0
    %v4045 = vadd.f32 %v3594, %v4044
    %v4046 = vpop.f32.mrb[0].mxu0
    %4047 = vmatprep.mubr.f32.mxu0 0.0
    %v4048 = vand.u32 %v1061, 4294901760
    %4049 = vmatmul.mubr.f32.gmra.mrb[0].mxu0 %v4048
    %v4050 = vpop.f32.mrb[0].mxu0
    %v4051 = vadd.f32 %v3600, %v4050
    %v4052 = vpop.f32.mrb[0].mxu0
    %4053 = vmatprep.mubr.f32.mxu0 0.0
    %v4054 = vand.u32 %v1064, 4294901760
    %4055 = vmatmul.mubr.f32.gmra.mrb[0].mxu0 %v4054
    %v4056 = vpop.f32.mrb[0].mxu0
    %v4057 = vadd.f32 %v3606, %v4056
    %v4058 = vpop.f32.mrb[0].mxu0
    %4059 = vmatprep.mubr.f32.mxu0 0.0
    %v4060 = vand.u32 %v1067, 4294901760
    %4061 = vmatmul.mubr.f32.gmra.mrb[0].mxu0 %v4060
    %v4062 = vpop.f32.mrb[0].mxu0
    %v4063 = vadd.f32 %v3612, %v4062
    %v4064 = vpop.f32.mrb[0].mxu0
    %4065 = vmatprep.mubr.f32.mxu0 0.0
    %v4066 = vand.u32 %v1070, 4294901760
    %4067 = vmatmul.mubr.f32.gmra.mrb[0].mxu0 %v4066
    %v4068 = vpop.f32.mrb[0].mxu0
    %v4069 = vadd.f32 %v3618, %v4068
    %v4070 = vpop.f32.mrb[0].mxu0
    %4071 = vmatprep.mubr.f32.mxu0 0.0
    %v4072 = vand.u32 %v1073, 4294901760
    %4073 = vmatmul.mubr.f32.gmra.mrb[0].mxu0 %v4072
    %v4074 = vpop.f32.mrb[0].mxu0
    %v4075 = vadd.f32 %v3624, %v4074
    %v4076 = vpop.f32.mrb[0].mxu0
    %4077 = vmatprep.mubr.f32.mxu0 0.0
    %v4078 = vand.u32 %v1076, 4294901760
    %4079 = vmatmul.mubr.f32.gmra.mrb[0].mxu0 %v4078
    %v4080 = vpop.f32.mrb[0].mxu0
    %v4081 = vadd.f32 %v3630, %v4080
    %v4082 = vpop.f32.mrb[0].mxu0
    %4083 = vmatprep.mubr.f32.mxu0 0.0
    %v4084 = vand.u32 %v1079, 4294901760
    %4085 = vmatmul.mubr.f32.gmra.mrb[0].mxu0 %v4084
    %v4086 = vpop.f32.mrb[0].mxu0
    %v4087 = vadd.f32 %v3636, %v4086
    %v4088 = vpop.f32.mrb[0].mxu0
    %4089 = vmatprep.mubr.f32.mxu0 0.0
    %v4090 = vand.u32 %v1082, 4294901760
    %4091 = vmatmul.mubr.f32.gmra.mrb[0].mxu0 %v4090
    %v4092 = vpop.f32.mrb[0].mxu0
    %v4093 = vadd.f32 %v3642, %v4092
    %v4094 = vpop.f32.mrb[0].mxu0
    %4095 = vmatprep.mubr.f32.mxu0 0.0
    %v4096 = vand.u32 %v1085, 4294901760
    %4097 = vmatmul.mubr.f32.gmra.mrb[0].mxu0 %v4096
    %v4098 = vpop.f32.mrb[0].mxu0
    %v4099 = vadd.f32 %v3648, %v4098
    %v4100 = vpop.f32.mrb[0].mxu0
    %4101 = vmatprep.mubr.f32.mxu0 0.0
    %v4102 = vand.u32 %v1088, 4294901760
    %4103 = vmatmul.mubr.f32.gmra.mrb[0].mxu0 %v4102
    %v4104 = vpop.f32.mrb[0].mxu0
    %v4105 = vadd.f32 %v3654, %v4104
    %v4106 = vpop.f32.mrb[0].mxu0
    %4107 = vmatprep.mubr.f32.mxu0 0.0
    %v4108 = vand.u32 %v1091, 4294901760
    %4109 = vmatmul.mubr.f32.gmra.mrb[0].mxu0 %v4108
    %v4110 = vpop.f32.mrb[0].mxu0
    %v4111 = vadd.f32 %v3660, %v4110
    %v4112 = vpop.f32.mrb[0].mxu0
    %4113 = vmatprep.mubr.f32.mxu0 0.0
    %v4114 = vand.u32 %v1094, 4294901760
    %4115 = vmatmul.mubr.f32.gmra.mrb[0].mxu0 %v4114
    %v4116 = vpop.f32.mrb[0].mxu0
    %v4117 = vadd.f32 %v3666, %v4116
    %v4118 = vpop.f32.mrb[0].mxu0
    %4119 = vmatprep.mubr.f32.mxu0 0.0
    %v4120 = vand.u32 %v1097, 4294901760
    %4121 = vmatmul.mubr.f32.gmra.mrb[0].mxu0 %v4120
    %v4122 = vpop.f32.mrb[0].mxu0
    %v4123 = vadd.f32 %v3672, %v4122
    %v4124 = vpop.f32.mrb[0].mxu0
    %4125 = vmatprep.mubr.f32.mxu0 0.0
    %v4126 = vand.u32 %v1100, 4294901760
    %4127 = vmatmul.mubr.f32.gmra.mrb[0].mxu0 %v4126
    %v4128 = vpop.f32.mrb[0].mxu0
    %v4129 = vadd.f32 %v3678, %v4128
    %v4130 = vpop.f32.mrb[0].mxu0
    %4131 = vmatprep.mubr.f32.mxu0 0.0
    %v4132 = vand.u32 %v1103, 4294901760
    %4133 = vmatmul.mubr.f32.gmra.mrb[0].mxu0 %v4132
    %v4134 = vpop.f32.mrb[0].mxu0
    %v4135 = vadd.f32 %v3684, %v4134
    %v4136 = vpop.f32.mrb[0].mxu0
    %4137 = vmatprep.mubr.f32.mxu0 0.0
    %v4138 = vand.u32 %v1106, 4294901760
    %4139 = vmatmul.mubr.f32.gmra.mrb[0].mxu0 %v4138
    %v4140 = vpop.f32.mrb[0].mxu0
    %v4141 = vadd.f32 %v3690, %v4140
    %v4142 = vpop.f32.mrb[0].mxu0
    %4143 = vmatprep.mubr.f32.mxu0 0.0
    %v4144 = vand.u32 %v1109, 4294901760
    %4145 = vmatmul.mubr.f32.gmra.mrb[0].mxu0 %v4144
    %v4146 = vpop.f32.mrb[0].mxu0
    %v4147 = vadd.f32 %v3696, %v4146
    %v4148 = vpop.f32.mrb[0].mxu0
    %4149 = vmatprep.mubr.f32.mxu0 0.0
    %v4150 = vand.u32 %v1112, 4294901760
    %4151 = vmatmul.mubr.f32.gmra.mrb[0].mxu0 %v4150
    %v4152 = vpop.f32.mrb[0].mxu0
    %v4153 = vadd.f32 %v3702, %v4152
    %v4154 = vpop.f32.mrb[0].mxu0
    %4155 = vmatprep.mubr.f32.mxu0 0.0
    %v4156 = vand.u32 %v1115, 4294901760
    %4157 = vmatmul.mubr.f32.gmra.mrb[0].mxu0 %v4156
    %v4158 = vpop.f32.mrb[0].mxu0
    %v4159 = vadd.f32 %v3708, %v4158
    %v4160 = vpop.f32.mrb[0].mxu0
    %4161 = vmatprep.mubr.f32.mxu0 0.0
    %v4162 = vand.u32 %v1118, 4294901760
    %4163 = vmatmul.mubr.f32.gmra.mrb[0].mxu0 %v4162
    %v4164 = vpop.f32.mrb[0].mxu0
    %v4165 = vadd.f32 %v3714, %v4164
    %v4166 = vpop.f32.mrb[0].mxu0
    %4167 = vmatprep.mubr.f32.mxu0 0.0
    %v4168 = vand.u32 %v1121, 4294901760
    %4169 = vmatmul.mubr.f32.gmra.mrb[0].mxu0 %v4168
    %v4170 = vpop.f32.mrb[0].mxu0
    %v4171 = vadd.f32 %v3720, %v4170
    %v4172 = vpop.f32.mrb[0].mxu0
    %4173 = vmatprep.mubr.f32.mxu0 0.0
    %v4174 = vand.u32 %v1124, 4294901760
    %4175 = vmatmul.mubr.f32.gmra.mrb[0].mxu0 %v4174
    %v4176 = vpop.f32.mrb[0].mxu0
    %v4177 = vadd.f32 %v3726, %v4176
    %v4178 = vpop.f32.mrb[0].mxu0
    %4179 = vmatprep.mubr.f32.mxu0 0.0
    %v4180 = vand.u32 %v1127, 4294901760
    %4181 = vmatmul.mubr.f32.gmra.mrb[0].mxu0 %v4180
    %v4182 = vpop.f32.mrb[0].mxu0
    %v4183 = vadd.f32 %v3732, %v4182
    %v4184 = vpop.f32.mrb[0].mxu0
    %4185 = vmatprep.mubr.f32.mxu0 0.0
    %v4186 = vand.u32 %v1130, 4294901760
    %4187 = vmatmul.mubr.f32.gmra.mrb[0].mxu0 %v4186
    %v4188 = vpop.f32.mrb[0].mxu0
    %v4189 = vadd.f32 %v3738, %v4188
    %v4190 = vpop.f32.mrb[0].mxu0
    %4191 = vmatprep.mubr.f32.mxu0 0.0
    %v4192 = vand.u32 %v1133, 4294901760
    %4193 = vmatmul.mubr.f32.gmra.mrb[0].mxu0 %v4192
    %v4194 = vpop.f32.mrb[0].mxu0
    %v4195 = vadd.f32 %v3744, %v4194
    %v4196 = vpop.f32.mrb[0].mxu0
    %4197 = vmatprep.mubr.f32.mxu0 0.0
    %v4198 = vand.u32 %v1136, 4294901760
    %4199 = vmatmul.mubr.f32.gmra.mrb[0].mxu0 %v4198
    %v4200 = vpop.f32.mrb[0].mxu0
    %v4201 = vadd.f32 %v3750, %v4200
    %v4202 = vpop.f32.mrb[0].mxu0
    %4203 = vmatprep.mubr.f32.mxu0 0.0
    %v4204 = vand.u32 %v1139, 4294901760
    %4205 = vmatmul.mubr.f32.gmra.mrb[0].mxu0 %v4204
    %v4206 = vpop.f32.mrb[0].mxu0
    %v4207 = vadd.f32 %v3756, %v4206
    %v4208 = vpop.f32.mrb[0].mxu0
    %4209 = vmatprep.mubr.f32.mxu0 0.0
    %v4210 = vand.u32 %v1142, 4294901760
    %4211 = vmatmul.mubr.f32.gmra.mrb[0].mxu0 %v4210
    %v4212 = vpop.f32.mrb[0].mxu0
    %v4213 = vadd.f32 %v3762, %v4212
    %v4214 = vpop.f32.mrb[0].mxu0
    %4215 = vmatprep.mubr.f32.mxu0 0.0
    %v4216 = vand.u32 %v1145, 4294901760
    %4217 = vmatmul.mubr.f32.gmra.mrb[0].mxu0 %v4216
    %v4218 = vpop.f32.mrb[0].mxu0
    %v4219 = vadd.f32 %v3768, %v4218
    %v4220 = vpop.f32.mrb[0].mxu0
    %4221 = vmatprep.mubr.f32.mxu0 0.0
    %v4222 = vand.u32 %v1148, 4294901760
    %4223 = vmatmul.mubr.f32.gmra.mrb[0].mxu0 %v4222
    %v4224 = vpop.f32.mrb[0].mxu0
    %v4225 = vadd.f32 %v3774, %v4224
    %v4226 = vpop.f32.mrb[0].mxu0
    %4227 = vmatprep.mubr.f32.mxu0 0.0
    %v4228 = vand.u32 %v1151, 4294901760
    %4229 = vmatmul.mubr.f32.gmra.mrb[0].mxu0 %v4228
    %v4230 = vpop.f32.mrb[0].mxu0
    %v4231 = vadd.f32 %v3780, %v4230
    %v4232 = vpop.f32.mrb[0].mxu0
    %4233 = vmatprep.mubr.f32.mxu0 0.0
    %v4234 = vand.u32 %v1154, 4294901760
    %4235 = vmatmul.mubr.f32.gmra.mrb[0].mxu0 %v4234
    %v4236 = vpop.f32.mrb[0].mxu0
    %v4237 = vadd.f32 %v3786, %v4236
    %v4238 = vpop.f32.mrb[0].mxu0
    %4239 = vmatprep.mubr.f32.mxu0 0.0
    %v4240 = vand.u32 %v1157, 4294901760
    %4241 = vmatmul.mubr.f32.gmra.mrb[0].mxu0 %v4240
    %v4242 = vpop.f32.mrb[0].mxu0
    %v4243 = vadd.f32 %v3792, %v4242
    %v4244 = vpop.f32.mrb[0].mxu0
    %4245 = vmatprep.mubr.f32.mxu0 0.0
    %v4246 = vand.u32 %v1160, 4294901760
    %4247 = vmatmul.mubr.f32.gmra.mrb[0].mxu0 %v4246
    %v4248 = vpop.f32.mrb[0].mxu0
    %v4249 = vadd.f32 %v3798, %v4248
    %v4250 = vpop.f32.mrb[0].mxu0
    %4251 = vmatprep.mubr.f32.mxu0 0.0
    %v4252 = vand.u32 %v1163, 4294901760
    %4253 = vmatmul.mubr.f32.gmra.mrb[0].mxu0 %v4252
    %v4254 = vpop.f32.mrb[0].mxu0
    %v4255 = vadd.f32 %v3804, %v4254
    %v4256 = vpop.f32.mrb[0].mxu0
    %4257 = vmatprep.mubr.f32.mxu0 0.0
    %v4258 = vand.u32 %v1166, 4294901760
    %4259 = vmatmul.mubr.f32.gmra.mrb[0].mxu0 %v4258
    %v4260 = vpop.f32.mrb[0].mxu0
    %v4261 = vadd.f32 %v3810, %v4260
    %v4262 = vpop.f32.mrb[0].mxu0
    %4263 = vmatprep.mubr.f32.mxu0 0.0
    %v4264 = vand.u32 %v1169, 4294901760
    %4265 = vmatmul.mubr.f32.gmra.mrb[0].mxu0 %v4264
    %v4266 = vpop.f32.mrb[0].mxu0
    %v4267 = vadd.f32 %v3816, %v4266
    %v4268 = vpop.f32.mrb[0].mxu0
    %4269 = vmatprep.mubr.f32.mxu0 0.0
    %v4270 = vand.u32 %v1172, 4294901760
    %4271 = vmatmul.mubr.f32.gmra.mrb[0].mxu0 %v4270
    %v4272 = vpop.f32.mrb[0].mxu0
    %v4273 = vadd.f32 %v3822, %v4272
    %v4274 = vpop.f32.mrb[0].mxu0
    %4275 = vmatprep.mubr.f32.mxu0 0.0
    %v4276 = vand.u32 %v1175, 4294901760
    %4277 = vmatmul.mubr.f32.gmra.mrb[0].mxu0 %v4276
    %v4278 = vpop.f32.mrb[0].mxu0
    %v4279 = vadd.f32 %v3828, %v4278
    %v4280 = vpop.f32.mrb[0].mxu0
    %4281 = vmatprep.mubr.f32.mxu0 0.0
    %v4282 = vand.u32 %v1178, 4294901760
    %4283 = vmatmul.mubr.f32.gmra.mrb[0].mxu0 %v4282
    %v4284 = vpop.f32.mrb[0].mxu0
    %v4285 = vadd.f32 %v3834, %v4284
    %v4286 = vpop.f32.mrb[0].mxu0
    %4287 = vmatprep.mubr.f32.mxu0 0.0
    %v4288 = vand.u32 %v1181, 4294901760
    %4289 = vmatmul.mubr.f32.gmra.mrb[0].mxu0 %v4288
    %v4290 = vpop.f32.mrb[0].mxu0
    %v4291 = vadd.f32 %v3840, %v4290
    %v4292 = vpop.f32.mrb[0].mxu0
    %4293 = vmatprep.mubr.f32.mxu0 0.0
    %v4294 = vand.u32 %v1184, 4294901760
    %4295 = vmatmul.mubr.f32.gmra.mrb[0].mxu0 %v4294
    %v4296 = vpop.f32.mrb[0].mxu0
    %v4297 = vadd.f32 %v3846, %v4296
    %v4298 = vpop.f32.mrb[0].mxu0
    %4299 = vmatprep.mubr.f32.mxu0 0.0
    %v4300 = vand.u32 %v1187, 4294901760
    %4301 = vmatmul.mubr.f32.gmra.mrb[0].mxu0 %v4300
    %v4302 = vpop.f32.mrb[0].mxu0
    %v4303 = vadd.f32 %v3852, %v4302
    %v4304 = vpop.f32.mrb[0].mxu0
    %4305 = vmatprep.mubr.f32.mxu0 0.0
    %v4306 = vand.u32 %v1190, 4294901760
    %4307 = vmatmul.mubr.f32.gmra.mrb[0].mxu0 %v4306
    %v4308 = vpop.f32.mrb[0].mxu0
    %v4309 = vadd.f32 %v3858, %v4308
    %v4310 = vpop.f32.mrb[0].mxu0
    %4311 = vmatprep.mubr.f32.mxu0 0.0
    %v4312 = vand.u32 %v1193, 4294901760
    %4313 = vmatmul.mubr.f32.gmra.mrb[0].mxu0 %v4312
    %v4314 = vpop.f32.mrb[0].mxu0
    %v4315 = vadd.f32 %v3864, %v4314
    %v4316 = vpop.f32.mrb[0].mxu0
    %4317 = vmatprep.mubr.f32.mxu0 0.0
    %v4318 = vand.u32 %v1196, 4294901760
    %4319 = vmatmul.mubr.f32.gmra.mrb[0].mxu0 %v4318
    %v4320 = vpop.f32.mrb[0].mxu0
    %v4321 = vadd.f32 %v3870, %v4320
    %v4322 = vpop.f32.mrb[0].mxu0
    %4323 = vmatprep.mubr.f32.mxu0 0.0
    %v4324 = vand.u32 %v1199, 4294901760
    %4325 = vmatmul.mubr.f32.gmra.mrb[0].mxu0 %v4324
    %v4326 = vpop.f32.mrb[0].mxu0
    %v4327 = vadd.f32 %v3876, %v4326
    %v4328 = vpop.f32.mrb[0].mxu0
    %4329 = vmatprep.mubr.f32.mxu0 0.0
    %v4330 = vand.u32 %v1202, 4294901760
    %4331 = vmatmul.mubr.f32.gmra.mrb[0].mxu0 %v4330
    %v4332 = vpop.f32.mrb[0].mxu0
    %v4333 = vadd.f32 %v3882, %v4332
    %v4334 = vpop.f32.mrb[0].mxu0
    %4335 = vmatprep.mubr.f32.mxu0 0.0
    %v4336 = vand.u32 %v1205, 4294901760
    %4337 = vmatmul.mubr.f32.gmra.mrb[0].mxu0 %v4336
    %v4338 = vpop.f32.mrb[0].mxu0
    %v4339 = vadd.f32 %v3888, %v4338
    %v4340 = vpop.f32.mrb[0].mxu0
    %4341 = vmatprep.mubr.f32.mxu0 0.0
    %v4342 = vand.u32 %v1208, 4294901760
    %4343 = vmatmul.mubr.f32.gmra.mrb[0].mxu0 %v4342
    %v4344 = vpop.f32.mrb[0].mxu0
    %v4345 = vadd.f32 %v3894, %v4344
    %v4346 = vpop.f32.mrb[0].mxu0
    %4347 = vmatprep.mubr.f32.mxu0 0.0
    %v4348 = vand.u32 %v1211, 4294901760
    %4349 = vmatmul.mubr.f32.gmra.mrb[0].mxu0 %v4348
    %v4350 = vpop.f32.mrb[0].mxu0
    %v4351 = vadd.f32 %v3900, %v4350
    %v4352 = vpop.f32.mrb[0].mxu0
    %4353 = vmatprep.mubr.f32.mxu0 0.0
    %v4354 = vand.u32 %v1214, 4294901760
    %4355 = vmatmul.mubr.f32.gmra.mrb[0].mxu0 %v4354
    %v4356 = vpop.f32.mrb[0].mxu0
    %v4357 = vadd.f32 %v3906, %v4356
    %v4358 = vpop.f32.mrb[0].mxu0
    %4359 = vmatprep.mubr.f32.mxu0 0.0
    %v4360 = vand.u32 %v1217, 4294901760
    %4361 = vmatmul.mubr.f32.gmra.mrb[0].mxu0 %v4360
    %v4362 = vpop.f32.mrb[0].mxu0
    %v4363 = vadd.f32 %v3912, %v4362
    %v4364 = vpop.f32.mrb[0].mxu0
    %4365 = vmatprep.mubr.f32.mxu0 0.0
    %v4366 = vand.u32 %v1220, 4294901760
    %4367 = vmatmul.mubr.f32.gmra.mrb[0].mxu0 %v4366
    %v4368 = vpop.f32.mrb[0].mxu0
    %v4369 = vadd.f32 %v3918, %v4368
    %v4370 = vpop.f32.mrb[0].mxu0
    %4371 = vmatprep.mubr.f32.mxu0 0.0
    %v4372 = vand.u32 %v1223, 4294901760
    %4373 = vmatmul.mubr.f32.gmra.mrb[0].mxu0 %v4372
    %v4374 = vpop.f32.mrb[0].mxu0
    %v4375 = vadd.f32 %v3924, %v4374
    %v4376 = vpop.f32.mrb[0].mxu0
    %4377 = vmatprep.mubr.f32.mxu0 0.0
    %v4378 = vand.u32 %v1226, 4294901760
    %4379 = vmatmul.mubr.f32.gmra.mrb[0].mxu0 %v4378
    %v4380 = vpop.f32.mrb[0].mxu0
    %v4381 = vadd.f32 %v3930, %v4380
    %v4382 = vpop.f32.mrb[0].mxu0
    %4383 = vmatprep.mubr.f32.mxu0 0.0
    %v4384 = vand.u32 %v1229, 4294901760
    %4385 = vmatmul.mubr.f32.gmra.mrb[0].mxu0 %v4384
    %v4386 = vpop.f32.mrb[0].mxu0
    %v4387 = vadd.f32 %v3936, %v4386
    %v4388 = vpop.f32.mrb[0].mxu0
    %4389 = vmatprep.mubr.f32.mxu0 0.0
    %v4390 = vand.u32 %v1232, 4294901760
    %4391 = vmatmul.mubr.f32.gmra.mrb[0].mxu0 %v4390
    %v4392 = vpop.f32.mrb[0].mxu0
    %v4393 = vadd.f32 %v3942, %v4392
    %v4394 = vpop.f32.mrb[0].mxu0
    %4395 = vmatprep.mubr.f32.mxu0 0.0
    %v4396 = vand.u32 %v1235, 4294901760
    %4397 = vmatmul.mubr.f32.gmra.mrb[0].mxu0 %v4396
    %v4398 = vpop.f32.mrb[0].mxu0
    %v4399 = vadd.f32 %v3948, %v4398
    %v4400 = vpop.f32.mrb[0].mxu0
    %4401 = vmatprep.mubr.f32.mxu0 0.0
    %v4402 = vand.u32 %v1238, 4294901760
    %4403 = vmatmul.mubr.f32.gmra.mrb[0].mxu0 %v4402
    %v4404 = vpop.f32.mrb[0].mxu0
    %v4405 = vadd.f32 %v3954, %v4404
    %v4406 = vpop.f32.mrb[0].mxu0
    %4407 = vdwg.mxu0
    %v4408 = vadd.f32 %v981, %v4027
    %v4409 = vadd.f32 %v982, %v4033
    %v4410 = vadd.f32 %v983, %v4039
    %v4411 = vadd.f32 %v984, %v4045
    %v4412 = vadd.f32 %v985, %v4051
    %v4413 = vadd.f32 %v986, %v4057
    %v4414 = vadd.f32 %v987, %v4063
    %v4415 = vadd.f32 %v988, %v4069
    %v4416 = vadd.f32 %v989, %v4075
    %v4417 = vadd.f32 %v990, %v4081
    %v4418 = vadd.f32 %v991, %v4087
    %v4419 = vadd.f32 %v992, %v4093
    %v4420 = vadd.f32 %v993, %v4099
    %v4421 = vadd.f32 %v994, %v4105
    %v4422 = vadd.f32 %v995, %v4111
    %v4423 = vadd.f32 %v996, %v4117
    %v4424 = vadd.f32 %v997, %v4123
    %v4425 = vadd.f32 %v998, %v4129
    %v4426 = vadd.f32 %v999, %v4135
    %v4427 = vadd.f32 %v1000, %v4141
    %v4428 = vadd.f32 %v1001, %v4147
    %v4429 = vadd.f32 %v1002, %v4153
    %v4430 = vadd.f32 %v1003, %v4159
    %v4431 = vadd.f32 %v1004, %v4165
    %v4432 = vadd.f32 %v1005, %v4171
    %v4433 = vadd.f32 %v1006, %v4177
    %v4434 = vadd.f32 %v1007, %v4183
    %v4435 = vadd.f32 %v1008, %v4189
    %v4436 = vadd.f32 %v1009, %v4195
    %v4437 = vadd.f32 %v1010, %v4201
    %v4438 = vadd.f32 %v1011, %v4207
    %v4439 = vadd.f32 %v1012, %v4213
    %v4440 = vadd.f32 %v1013, %v4219
    %v4441 = vadd.f32 %v1014, %v4225
    %v4442 = vadd.f32 %v1015, %v4231
    %v4443 = vadd.f32 %v1016, %v4237
    %v4444 = vadd.f32 %v1017, %v4243
    %v4445 = vadd.f32 %v1018, %v4249
    %v4446 = vadd.f32 %v1019, %v4255
    %v4447 = vadd.f32 %v1020, %v4261
    %v4448 = vadd.f32 %v1021, %v4267
    %v4449 = vadd.f32 %v1022, %v4273
    %v4450 = vadd.f32 %v1023, %v4279
    %v4451 = vadd.f32 %v1024, %v4285
    %v4452 = vadd.f32 %v1025, %v4291
    %v4453 = vadd.f32 %v1026, %v4297
    %v4454 = vadd.f32 %v1027, %v4303
    %v4455 = vadd.f32 %v1028, %v4309
    %v4456 = vadd.f32 %v1029, %v4315
    %v4457 = vadd.f32 %v1030, %v4321
    %v4458 = vadd.f32 %v1031, %v4327
    %v4459 = vadd.f32 %v1032, %v4333
    %v4460 = vadd.f32 %v1033, %v4339
    %v4461 = vadd.f32 %v1034, %v4345
    %v4462 = vadd.f32 %v1035, %v4351
    %v4463 = vadd.f32 %v1036, %v4357
    %v4464 = vadd.f32 %v1037, %v4363
    %v4465 = vadd.f32 %v1038, %v4369
    %v4466 = vadd.f32 %v1039, %v4375
    %v4467 = vadd.f32 %v1040, %v4381
    %v4468 = vadd.f32 %v1041, %v4387
    %v4469 = vadd.f32 %v1042, %v4393
    %v4470 = vadd.f32 %v1043, %v4399
    %v4471 = vadd.f32 %v1044, %v4405
    %4472 = vst [vmem:[#allocation2] sm:$0xff] %v4408
    %4473 = vst [vmem:[#allocation2 + $0x8] sm:$0xff] %v4409
    %4474 = vst [vmem:[#allocation2 + $0x10] sm:$0xff] %v4410
    %4475 = vst [vmem:[#allocation2 + $0x18] sm:$0xff] %v4411
    %4476 = vst [vmem:[#allocation2 + $0x20] sm:$0xff] %v4412
    %4477 = vst [vmem:[#allocation2 + $0x28] sm:$0xff] %v4413
    %4478 = vst [vmem:[#allocation2 + $0x30] sm:$0xff] %v4414
    %4479 = vst [vmem:[#allocation2 + $0x38] sm:$0xff] %v4415
    %4480 = vst [vmem:[#allocation2 + $0x40] sm:$0xff] %v4416
    %4481 = vst [vmem:[#allocation2 + $0x48] sm:$0xff] %v4417
    %4482 = vst [vmem:[#allocation2 + $0x50] sm:$0xff] %v4418
    %4483 = vst [vmem:[#allocation2 + $0x58] sm:$0xff] %v4419
    %4484 = vst [vmem:[#allocation2 + $0x60] sm:$0xff] %v4420
    %4485 = vst [vmem:[#allocation2 + $0x68] sm:$0xff] %v4421
    %4486 = vst [vmem:[#allocation2 + $0x70] sm:$0xff] %v4422
    %4487 = vst [vmem:[#allocation2 + $0x78] sm:$0xff] %v4423
    %4488 = vst [vmem:[#allocation2 + $0x80] sm:$0xff] %v4424
    %4489 = vst [vmem:[#allocation2 + $0x88] sm:$0xff] %v4425
    %4490 = vst [vmem:[#allocation2 + $0x90] sm:$0xff] %v4426
    %4491 = vst [vmem:[#allocation2 + $0x98] sm:$0xff] %v4427
    %4492 = vst [vmem:[#allocation2 + $0xa0] sm:$0xff] %v4428
    %4493 = vst [vmem:[#allocation2 + $0xa8] sm:$0xff] %v4429
    %4494 = vst [vmem:[#allocation2 + $0xb0] sm:$0xff] %v4430
    %4495 = vst [vmem:[#allocation2 + $0xb8] sm:$0xff] %v4431
    %4496 = vst [vmem:[#allocation2 + $0xc0] sm:$0xff] %v4432
    %4497 = vst [vmem:[#allocation2 + $0xc8] sm:$0xff] %v4433
    %4498 = vst [vmem:[#allocation2 + $0xd0] sm:$0xff] %v4434
    %4499 = vst [vmem:[#allocation2 + $0xd8] sm:$0xff] %v4435
    %4500 = vst [vmem:[#allocation2 + $0xe0] sm:$0xff] %v4436
    %4501 = vst [vmem:[#allocation2 + $0xe8] sm:$0xff] %v4437
    %4502 = vst [vmem:[#allocation2 + $0xf0] sm:$0xff] %v4438
    %4503 = vst [vmem:[#allocation2 + $0xf8] sm:$0xff] %v4439
    %4504 = vst [vmem:[#allocation2 + $0x100] sm:$0xff] %v4440
    %4505 = vst [vmem:[#allocation2 + $0x108] sm:$0xff] %v4441
    %4506 = vst [vmem:[#allocation2 + $0x110] sm:$0xff] %v4442
    %4507 = vst [vmem:[#allocation2 + $0x118] sm:$0xff] %v4443
    %4508 = vst [vmem:[#allocation2 + $0x120] sm:$0xff] %v4444
    %4509 = vst [vmem:[#allocation2 + $0x128] sm:$0xff] %v4445
    %4510 = vst [vmem:[#allocation2 + $0x130] sm:$0xff] %v4446
    %4511 = vst [vmem:[#allocation2 + $0x138] sm:$0xff] %v4447
    %4512 = vst [vmem:[#allocation2 + $0x140] sm:$0xff] %v4448
    %4513 = vst [vmem:[#allocation2 + $0x148] sm:$0xff] %v4449
    %4514 = vst [vmem:[#allocation2 + $0x150] sm:$0xff] %v4450
    %4515 = vst [vmem:[#allocation2 + $0x158] sm:$0xff] %v4451
    %4516 = vst [vmem:[#allocation2 + $0x160] sm:$0xff] %v4452
    %4517 = vst [vmem:[#allocation2 + $0x168] sm:$0xff] %v4453
    %4518 = vst [vmem:[#allocation2 + $0x170] sm:$0xff] %v4454
    %4519 = vst [vmem:[#allocation2 + $0x178] sm:$0xff] %v4455
    %4520 = vst [vmem:[#allocation2 + $0x180] sm:$0xff] %v4456
    %4521 = vst [vmem:[#allocation2 + $0x188] sm:$0xff] %v4457
    %4522 = vst [vmem:[#allocation2 + $0x190] sm:$0xff] %v4458
    %4523 = vst [vmem:[#allocation2 + $0x198] sm:$0xff] %v4459
    %4524 = vst [vmem:[#allocation2 + $0x1a0] sm:$0xff] %v4460
    %4525 = vst [vmem:[#allocation2 + $0x1a8] sm:$0xff] %v4461
    %4526 = vst [vmem:[#allocation2 + $0x1b0] sm:$0xff] %v4462
    %4527 = vst [vmem:[#allocation2 + $0x1b8] sm:$0xff] %v4463
    %4528 = vst [vmem:[#allocation2 + $0x1c0] sm:$0xff] %v4464
    %4529 = vst [vmem:[#allocation2 + $0x1c8] sm:$0xff] %v4465
    %4530 = vst [vmem:[#allocation2 + $0x1d0] sm:$0xff] %v4466
    %4531 = vst [vmem:[#allocation2 + $0x1d8] sm:$0xff] %v4467
    %4532 = vst [vmem:[#allocation2 + $0x1e0] sm:$0xff] %v4468
    %4533 = vst [vmem:[#allocation2 + $0x1e8] sm:$0xff] %v4469
    %4534 = vst [vmem:[#allocation2 + $0x1f0] sm:$0xff] %v4470
    %4535 = vst [vmem:[#allocation2 + $0x1f8] sm:$0xff] %v4471
    // Predicated region
    $region14: #{tpu_custom_call.1} parent=1 // pred_check
      %p4536 = pneg %p12
    $region15: #{tpu_custom_call.1} parent=1 // pred_check_branch
      %4538 = sbr.rel (%p4536) target = $region17
    $region16: #{tpu_custom_call.1} parent=1 // pred_region
      %v4539 = vld [vmem:[#allocation2] sm:$0xff]
      %v4540 = vld [vmem:[#allocation2 + $0x8] sm:$0xff]
      %v4541 = vld [vmem:[#allocation2 + $0x10] sm:$0xff]
      %v4542 = vld [vmem:[#allocation2 + $0x18] sm:$0xff]
      %v4543 = vld [vmem:[#allocation2 + $0x20] sm:$0xff]
      %v4544 = vld [vmem:[#allocation2 + $0x28] sm:$0xff]
      %v4545 = vld [vmem:[#allocation2 + $0x30] sm:$0xff]
      %v4546 = vld [vmem:[#allocation2 + $0x38] sm:$0xff]
      %v4547 = vld [vmem:[#allocation2 + $0x40] sm:$0xff]
      %v4548 = vld [vmem:[#allocation2 + $0x48] sm:$0xff]
      %v4549 = vld [vmem:[#allocation2 + $0x50] sm:$0xff]
      %v4550 = vld [vmem:[#allocation2 + $0x58] sm:$0xff]
      %v4551 = vld [vmem:[#allocation2 + $0x60] sm:$0xff]
      %v4552 = vld [vmem:[#allocation2 + $0x68] sm:$0xff]
      %v4553 = vld [vmem:[#allocation2 + $0x70] sm:$0xff]
      %v4554 = vld [vmem:[#allocation2 + $0x78] sm:$0xff]
      %v4555 = vld [vmem:[#allocation2 + $0x80] sm:$0xff]
      %v4556 = vld [vmem:[#allocation2 + $0x88] sm:$0xff]
      %v4557 = vld [vmem:[#allocation2 + $0x90] sm:$0xff]
      %v4558 = vld [vmem:[#allocation2 + $0x98] sm:$0xff]
      %v4559 = vld [vmem:[#allocation2 + $0xa0] sm:$0xff]
      %v4560 = vld [vmem:[#allocation2 + $0xa8] sm:$0xff]
      %v4561 = vld [vmem:[#allocation2 + $0xb0] sm:$0xff]
      %v4562 = vld [vmem:[#allocation2 + $0xb8] sm:$0xff]
      %v4563 = vld [vmem:[#allocation2 + $0xc0] sm:$0xff]
      %v4564 = vld [vmem:[#allocation2 + $0xc8] sm:$0xff]
      %v4565 = vld [vmem:[#allocation2 + $0xd0] sm:$0xff]
      %v4566 = vld [vmem:[#allocation2 + $0xd8] sm:$0xff]
      %v4567 = vld [vmem:[#allocation2 + $0xe0] sm:$0xff]
      %v4568 = vld [vmem:[#allocation2 + $0xe8] sm:$0xff]
      %v4569 = vld [vmem:[#allocation2 + $0xf0] sm:$0xff]
      %v4570 = vld [vmem:[#allocation2 + $0xf8] sm:$0xff]
      %v4571 = vld [vmem:[#allocation2 + $0x100] sm:$0xff]
      %v4572 = vld [vmem:[#allocation2 + $0x108] sm:$0xff]
      %v4573 = vld [vmem:[#allocation2 + $0x110] sm:$0xff]
      %v4574 = vld [vmem:[#allocation2 + $0x118] sm:$0xff]
      %v4575 = vld [vmem:[#allocation2 + $0x120] sm:$0xff]
      %v4576 = vld [vmem:[#allocation2 + $0x128] sm:$0xff]
      %v4577 = vld [vmem:[#allocation2 + $0x130] sm:$0xff]
      %v4578 = vld [vmem:[#allocation2 + $0x138] sm:$0xff]
      %v4579 = vld [vmem:[#allocation2 + $0x140] sm:$0xff]
      %v4580 = vld [vmem:[#allocation2 + $0x148] sm:$0xff]
      %v4581 = vld [vmem:[#allocation2 + $0x150] sm:$0xff]
      %v4582 = vld [vmem:[#allocation2 + $0x158] sm:$0xff]
      %v4583 = vld [vmem:[#allocation2 + $0x160] sm:$0xff]
      %v4584 = vld [vmem:[#allocation2 + $0x168] sm:$0xff]
      %v4585 = vld [vmem:[#allocation2 + $0x170] sm:$0xff]
      %v4586 = vld [vmem:[#allocation2 + $0x178] sm:$0xff]
      %v4587 = vld [vmem:[#allocation2 + $0x180] sm:$0xff]
      %v4588 = vld [vmem:[#allocation2 + $0x188] sm:$0xff]
      %v4589 = vld [vmem:[#allocation2 + $0x190] sm:$0xff]
      %v4590 = vld [vmem:[#allocation2 + $0x198] sm:$0xff]
      %v4591 = vld [vmem:[#allocation2 + $0x1a0] sm:$0xff]
      %v4592 = vld [vmem:[#allocation2 + $0x1a8] sm:$0xff]
      %v4593 = vld [vmem:[#allocation2 + $0x1b0] sm:$0xff]
      %v4594 = vld [vmem:[#allocation2 + $0x1b8] sm:$0xff]
      %v4595 = vld [vmem:[#allocation2 + $0x1c0] sm:$0xff]
      %v4596 = vld [vmem:[#allocation2 + $0x1c8] sm:$0xff]
      %v4597 = vld [vmem:[#allocation2 + $0x1d0] sm:$0xff]
      %v4598 = vld [vmem:[#allocation2 + $0x1d8] sm:$0xff]
      %v4599 = vld [vmem:[#allocation2 + $0x1e0] sm:$0xff]
      %v4600 = vld [vmem:[#allocation2 + $0x1e8] sm:$0xff]
      %v4601 = vld [vmem:[#allocation2 + $0x1f0] sm:$0xff]
      %v4602 = vld [vmem:[#allocation2 + $0x1f8] sm:$0xff]
      %4603 = vst [vmem:[#allocation3] sm:$0xff] %v4539
      %4604 = vst [vmem:[#allocation3 + $0x8] sm:$0xff] %v4540
      %4605 = vst [vmem:[#allocation3 + $0x10] sm:$0xff] %v4541
      %4606 = vst [vmem:[#allocation3 + $0x18] sm:$0xff] %v4542
      %4607 = vst [vmem:[#allocation3 + $0x20] sm:$0xff] %v4543
      %4608 = vst [vmem:[#allocation3 + $0x28] sm:$0xff] %v4544
      %4609 = vst [vmem:[#allocation3 + $0x30] sm:$0xff] %v4545
      %4610 = vst [vmem:[#allocation3 + $0x38] sm:$0xff] %v4546
      %4611 = vst [vmem:[#allocation3 + $0x40] sm:$0xff] %v4547
      %4612 = vst [vmem:[#allocation3 + $0x48] sm:$0xff] %v4548
      %4613 = vst [vmem:[#allocation3 + $0x50] sm:$0xff] %v4549
      %4614 = vst [vmem:[#allocation3 + $0x58] sm:$0xff] %v4550
      %4615 = vst [vmem:[#allocation3 + $0x60] sm:$0xff] %v4551
      %4616 = vst [vmem:[#allocation3 + $0x68] sm:$0xff] %v4552
      %4617 = vst [vmem:[#allocation3 + $0x70] sm:$0xff] %v4553
      %4618 = vst [vmem:[#allocation3 + $0x78] sm:$0xff] %v4554
      %4619 = vst [vmem:[#allocation3 + $0x80] sm:$0xff] %v4555
      %4620 = vst [vmem:[#allocation3 + $0x88] sm:$0xff] %v4556
      %4621 = vst [vmem:[#allocation3 + $0x90] sm:$0xff] %v4557
      %4622 = vst [vmem:[#allocation3 + $0x98] sm:$0xff] %v4558
      %4623 = vst [vmem:[#allocation3 + $0xa0] sm:$0xff] %v4559
      %4624 = vst [vmem:[#allocation3 + $0xa8] sm:$0xff] %v4560
      %4625 = vst [vmem:[#allocation3 + $0xb0] sm:$0xff] %v4561
      %4626 = vst [vmem:[#allocation3 + $0xb8] sm:$0xff] %v4562
      %4627 = vst [vmem:[#allocation3 + $0xc0] sm:$0xff] %v4563
      %4628 = vst [vmem:[#allocation3 + $0xc8] sm:$0xff] %v4564
      %4629 = vst [vmem:[#allocation3 + $0xd0] sm:$0xff] %v4565
      %4630 = vst [vmem:[#allocation3 + $0xd8] sm:$0xff] %v4566
      %4631 = vst [vmem:[#allocation3 + $0xe0] sm:$0xff] %v4567
      %4632 = vst [vmem:[#allocation3 + $0xe8] sm:$0xff] %v4568
      %4633 = vst [vmem:[#allocation3 + $0xf0] sm:$0xff] %v4569
      %4634 = vst [vmem:[#allocation3 + $0xf8] sm:$0xff] %v4570
      %4635 = vst [vmem:[#allocation3 + $0x100] sm:$0xff] %v4571
      %4636 = vst [vmem:[#allocation3 + $0x108] sm:$0xff] %v4572
      %4637 = vst [vmem:[#allocation3 + $0x110] sm:$0xff] %v4573
      %4638 = vst [vmem:[#allocation3 + $0x118] sm:$0xff] %v4574
      %4639 = vst [vmem:[#allocation3 + $0x120] sm:$0xff] %v4575
      %4640 = vst [vmem:[#allocation3 + $0x128] sm:$0xff] %v4576
      %4641 = vst [vmem:[#allocation3 + $0x130] sm:$0xff] %v4577
      %4642 = vst [vmem:[#allocation3 + $0x138] sm:$0xff] %v4578
      %4643 = vst [vmem:[#allocation3 + $0x140] sm:$0xff] %v4579
      %4644 = vst [vmem:[#allocation3 + $0x148] sm:$0xff] %v4580
      %4645 = vst [vmem:[#allocation3 + $0x150] sm:$0xff] %v4581
      %4646 = vst [vmem:[#allocation3 + $0x158] sm:$0xff] %v4582
      %4647 = vst [vmem:[#allocation3 + $0x160] sm:$0xff] %v4583
      %4648 = vst [vmem:[#allocation3 + $0x168] sm:$0xff] %v4584
      %4649 = vst [vmem:[#allocation3 + $0x170] sm:$0xff] %v4585
      %4650 = vst [vmem:[#allocation3 + $0x178] sm:$0xff] %v4586
      %4651 = vst [vmem:[#allocation3 + $0x180] sm:$0xff] %v4587
      %4652 = vst [vmem:[#allocation3 + $0x188] sm:$0xff] %v4588
      %4653 = vst [vmem:[#allocation3 + $0x190] sm:$0xff] %v4589
      %4654 = vst [vmem:[#allocation3 + $0x198] sm:$0xff] %v4590
      %4655 = vst [vmem:[#allocation3 + $0x1a0] sm:$0xff] %v4591
      %4656 = vst [vmem:[#allocation3 + $0x1a8] sm:$0xff] %v4592
      %4657 = vst [vmem:[#allocation3 + $0x1b0] sm:$0xff] %v4593
      %4658 = vst [vmem:[#allocation3 + $0x1b8] sm:$0xff] %v4594
      %4659 = vst [vmem:[#allocation3 + $0x1c0] sm:$0xff] %v4595
      %4660 = vst [vmem:[#allocation3 + $0x1c8] sm:$0xff] %v4596
      %4661 = vst [vmem:[#allocation3 + $0x1d0] sm:$0xff] %v4597
      %4662 = vst [vmem:[#allocation3 + $0x1d8] sm:$0xff] %v4598
      %4663 = vst [vmem:[#allocation3 + $0x1e0] sm:$0xff] %v4599
      %4664 = vst [vmem:[#allocation3 + $0x1e8] sm:$0xff] %v4600
      %4665 = vst [vmem:[#allocation3 + $0x1f0] sm:$0xff] %v4601
      %4666 = vst [vmem:[#allocation3 + $0x1f8] sm:$0xff] %v4602
    $region17: #{tpu_custom_call.1} parent=1 // pred_fallthru
      _
    // Predicated region
    $region18: #{tpu_custom_call.1} parent=1 // pred_check
      _
    $region19: #{tpu_custom_call.1} parent=1 // pred_check_branch
      %4668 = sbr.rel (0) target = $region21
    $region20: #{tpu_custom_call.1} parent=1 // pred_region
      %s4670 = ssub.s32 8192, 4864
      %4671 = vsyncadd [#allocation4], %s4670
      %s4672 = sshll.u32 [#allocation3], 4
      %s4673 = int_to_ptr.vmem [resolvable:$true] %s4672
      %4678 = dma.vmem_to_hbm [thread:$0]  %s4673, 4864, %s2, [#allocation4], 128, 128, 8
    $region21: #{tpu_custom_call.1} parent=1 // pred_fallthru
      _
    // Predicated region
    $region22: #{tpu_custom_call.1} parent=1 // pred_check
      _
    $region23: #{tpu_custom_call.1} parent=1 // pred_check_branch
      %4680 = sbr.rel (0) target = $region25
    $region24: #{tpu_custom_call.1} parent=1 // pred_region
      %4681 = dma.done [#allocation4], 8192
    $region25: #{tpu_custom_call.1} parent=1 // pred_fallthru
      _
    %4682 = vsyncpa [#allocation4], 1

</llo_original>
